<compile_context>
chip_gen: v7x
topology: tpu7x:2x2x1
jax: 0.10.0
libtpu: 0.0.40
codegen_flags: <defaults>
</compile_context>

<pallas_src>
import jax
import jax.numpy as jnp
from jax.experimental import pallas as pl
from jax.experimental.pallas import tpu as pltpu

COUT_PAD = 128  # lane-dense channel padding for all conv outputs / intermediates


# ----------------------------- kernel helpers ------------------------------ #

def _bn_relu(acc, g_ref, b_ref, m_rows):
    """Training-mode BatchNorm (batch stats over all M rows) + ReLU, f32."""
    inv_m = 1.0 / m_rows
    s1 = jnp.sum(acc, axis=0, keepdims=True)
    s2 = jnp.sum(acc * acc, axis=0, keepdims=True)
    mean = s1 * inv_m
    var = jnp.maximum(s2 * inv_m - mean * mean, 0.0)   # single-pass variance
    scale = jax.lax.rsqrt(var + 1e-5) * g_ref[...]     # padded gamma lanes are 0
    return jnp.maximum((acc - mean) * scale + b_ref[...], 0.0)


def _zero_border(dst_ref, *, n_img, hp, wp, hint):
    """Zero ONLY the 1-px pad border of a flattened padded activation
    [n_img*hp*wp, 128]; the interior is fully overwritten by _scatter_interior.
    Uses the row-major adjacency of right-border(i) and left-border(i+1)."""
    zs = jnp.zeros((wp + 1, dst_ref.shape[-1]), jnp.float32)
    z2 = jnp.zeros((2, dst_ref.shape[-1]), jnp.float32)
    for n in range(n_img):
        base = n * hp * wp
        # top padded row + left border of the first interior row
        dst_ref[base:base + wp + 1, :] = zs
        # right border of interior row i + left border of interior row i+1
        for i in range(hint - 1):
            off = base + (1 + i) * wp + (wp - 1)
            dst_ref[off:off + 2, :] = z2
        # right border of the last interior row + bottom padded row
        off = base + hint * wp + (wp - 1)
        dst_ref[off:off + wp + 1, :] = zs


def _scatter_interior(y, dst_ref, *, n_img, hout, wout, hp, wp):
    """Write y [n_img*hout*wout, 128] into the interior of the flattened padded
    activation dst_ref [n_img*hp*wp, 128] -- full 128-lane, lane-offset-0 stores."""
    for n in range(n_img):
        for i in range(hout):
            src = (n * hout + i) * wout
            dst = (n * hp + 1 + i) * wp + 1
            dst_ref[dst:dst + wout, :] = y[src:src + wout, :]


def _im2col_taps(src_ref, p_ref, *, n_img, hp, wp, hout, wout):
    """3x3 / stride-2 patch extraction into a tap-major scratch.

    src_ref: [n_img*hp*wp, 128]  flattened padded activation (lane-dense).
    p_ref:   [9, n_img*hout*wout, 128]  per-tap LHS slabs.
    Every store is full 128-lane width starting at lane 0 (unmasked vst)."""
    for kh in range(3):
        for kw in range(3):
            t = kh * 3 + kw
            for n in range(n_img):
                for i in range(hout):
                    src = (n * hp + kh + 2 * i) * wp + kw
                    dst = (n * hout + i) * wout
                    p_ref[t, dst:dst + wout, :] = (
                        src_ref[pl.ds(src, wout, stride=2), :])


def _conv_taps(p_ref, w_ref):
    """Conv as 9 accumulated MXU dots: acc += p[t] @ w[t] ([M,128] @ [128,128])."""
    acc = jnp.dot(p_ref[0, :, :], w_ref[0, :, :], preferred_element_type=jnp.float32)
    for t in range(1, 9):
        acc = acc + jnp.dot(p_ref[t, :, :], w_ref[t, :, :],
                            preferred_element_type=jnp.float32)
    return acc


# ------------------------------ fused forward ------------------------------ #

def build_encoder_forward(params, *, n_img, h_in, w_in, c_in):
    """params: ((w, b, gamma, beta) for down1, down2, down3); w in PyTorch OIHW."""

    def geom(h, w):                       # k=3, stride=2, pad=1
        hp, wp = h + 2, w + 2
        return hp, wp, (hp - 3) // 2 + 1, (wp - 3) // 2 + 1

    hp1, wp1, ho1, wo1 = geom(h_in, w_in)
    hp2, wp2, ho2, wo2 = geom(ho1, wo1)
    hp3, wp3, ho3, wo3 = geom(ho2, wo2)

    c1 = params[0][0].shape[0]            # 32
    c2 = params[1][0].shape[0]            # 64
    c3 = params[2][0].shape[0]            # 64
    k1 = 9 * c_in
    m1, m2, m3 = n_img * ho1 * wo1, n_img * ho2 * wo2, n_img * ho3 * wo3
    r2, r3 = n_img * hp2 * wp2, n_img * hp3 * wp3

    def prep_flat(w_oihw):
        # OIHW -> [(kh,kw,cin), cout], zero-pad cout -> 128 (lane-dense RHS).
        cout, cin, kh, kw = w_oihw.shape
        w = jnp.transpose(w_oihw, (2, 3, 1, 0)).reshape(kh * kw * cin, cout)
        return jnp.pad(w, ((0, 0), (0, COUT_PAD - cout)))

    def prep_taps(w_oihw):
        # OIHW -> per-tap [9, cin, cout], zero-pad cin -> 128 and cout -> 128 so
        # the per-tap dot consumes the full lane-dense activation directly.
        cout, cin, kh, kw = w_oihw.shape
        w = jnp.transpose(w_oihw, (2, 3, 1, 0)).reshape(kh * kw, cin, cout)
        return jnp.pad(w, ((0, 0), (0, COUT_PAD - cin), (0, COUT_PAD - cout)))

    def prep_bn(v):
        return jnp.pad(v.reshape(1, -1), ((0, 0), (0, COUT_PAD - v.shape[0])))

    # Conv2d bias intentionally unused: it cancels exactly under the
    # training-mode BatchNorm batch-mean subtraction.
    w1 = prep_flat(params[0][0])
    w2 = prep_taps(params[1][0])
    w3 = prep_taps(params[2][0])
    g1, be1 = prep_bn(params[0][2]), prep_bn(params[0][3])
    g2, be2 = prep_bn(params[1][2]), prep_bn(params[1][3])
    g3, be3 = prep_bn(params[2][2]), prep_bn(params[2][3])

    def kernel(p1_ref, w1_ref, g1_ref, b1_ref, w2_ref, g2_ref, b2_ref,
               w3_ref, g3_ref, b3_ref, o_ref, a2_ref, a3_ref, p2_ref, p3_ref):
        # ---- down1: conv(c_in -> 32) as ONE matmul on wrapper-built patches ----
        acc1 = jnp.dot(p1_ref[...], w1_ref[...], preferred_element_type=jnp.float32)
        y1 = _bn_relu(acc1, g1_ref, b1_ref, m1)
        _zero_border(a2_ref, n_img=n_img, hp=hp2, wp=wp2, hint=ho1)
        _scatter_interior(y1, a2_ref, n_img=n_img, hout=ho1, wout=wo1, hp=hp2, wp=wp2)

        # ---- down2: conv(32 -> 64) as 9 accumulated per-tap dots ----
        _im2col_taps(a2_ref, p2_ref, n_img=n_img, hp=hp2, wp=wp2, hout=ho2, wout=wo2)
        acc2 = _conv_taps(p2_ref, w2_ref)
        y2 = _bn_relu(acc2, g2_ref, b2_ref, m2)
        _zero_border(a3_ref, n_img=n_img, hp=hp3, wp=wp3, hint=ho2)
        _scatter_interior(y2, a3_ref, n_img=n_img, hout=ho2, wout=wo2, hp=hp3, wp=wp3)

        # ---- down3: conv(64 -> 64) ----
        _im2col_taps(a3_ref, p3_ref, n_img=n_img, hp=hp3, wp=wp3, hout=ho3, wout=wo3)
        acc3 = _conv_taps(p3_ref, w3_ref)
        o_ref[...] = _bn_relu(acc3, g3_ref, b3_ref, m3)   # lane-dense [m3, 128]

    vspec = pl.BlockSpec(memory_space=pltpu.MemorySpace.VMEM)

    fused = pl.pallas_call(
        kernel,
        out_shape=jax.ShapeDtypeStruct((m3, COUT_PAD), jnp.float32),
        in_specs=[vspec] * 10,          # grid-less: whole arrays, no double-buffer
        out_specs=vspec,
        scratch_shapes=[
            pltpu.VMEM((r2, COUT_PAD), jnp.float32),      # padded layer-2 input act
            pltpu.VMEM((r3, COUT_PAD), jnp.float32),      # padded layer-3 input act
            pltpu.VMEM((9, m2, COUT_PAD), jnp.float32),   # layer-2 tap-major patches
            pltpu.VMEM((9, m3, COUT_PAD), jnp.float32),   # layer-3 tap-major patches
        ],
    )

    def forward(x_nchw):
        # Layer-1 im2col in XLA (18 KB; worst in-kernel store utilization removed).
        x = jnp.transpose(x_nchw, (0, 2, 3, 1))                    # NCHW -> NHWC
        xp = jnp.pad(x, ((0, 0), (1, 1), (1, 1), (0, 0)))
        taps = [xp[:, kh:kh + 2 * ho1:2, kw:kw + 2 * wo1:2, :]
                for kh in range(3) for kw in range(3)]             # (kh, kw, cin) order
        p1 = jnp.concatenate(taps, axis=-1).reshape(m1, k1)
        out2d = fused(p1, w1, g1, be1, w2, g2, be2, w3, g3, be3)
        out = out2d[:, :c3].reshape(n_img, ho3, wo3, c3)
        return jnp.transpose(out, (0, 3, 1, 2))                    # NHWC -> NCHW

    return jax.jit(forward)


if __name__ == "__main__":
    # Encoder(channel=4, kernal_sz=3, strd=2, pdd=1), quantizer=None
    channel, kernal_sz, strd, pdd = 4, 3, 2, 1
    n_img, h_in = 2, 16

    key = jax.random.PRNGKey(0)
    keys = jax.random.split(key, 4)
    x_nchw = jax.random.normal(keys[0], (n_img, channel, h_in, h_in), jnp.float32)

    def conv_block_params(k, cin, cout):
        ka, kb = jax.random.split(k)
        w = jax.random.normal(ka, (cout, cin, kernal_sz, kernal_sz), jnp.float32) * 0.05
        b = jax.random.normal(kb, (cout,), jnp.float32) * 0.05   # cancels under train-BN
        gamma = jnp.ones((cout,), jnp.float32)   # BatchNorm2d.weight
        beta = jnp.zeros((cout,), jnp.float32)   # BatchNorm2d.bias
        return w, b, gamma, beta

    params = (conv_block_params(keys[1], channel, 32),
              conv_block_params(keys[2], 32, 64),
              conv_block_params(keys[3], 64, 64))
    # nn.Linear(1024, 64) is declared in __init__ but never used in forward().
    # TODO(synk): quantizer branch (compress) is None in this config; not implemented.
    # TODO(synk): BatchNorm running_mean/running_var updates (training bookkeeping)
    #             are not emitted; only the forward activations are produced.

    encoder_forward = build_encoder_forward(
        params, n_img=n_img, h_in=h_in, w_in=h_in, c_in=channel)

    layer3 = encoder_forward(x_nchw)
    jax.block_until_ready(layer3)

    # Independent XLA reference (full conv path incl. bias, training-mode BN).
    def reference(x, ps):
        y = x
        for (w, b, gamma, beta) in ps:
            y = jax.lax.conv_general_dilated(
                y, w, window_strides=(2, 2), padding=((1, 1), (1, 1)),
                dimension_numbers=("NCHW", "OIHW", "NCHW"))
            y = y + b.reshape(1, -1, 1, 1)
            mean = jnp.mean(y, axis=(0, 2, 3), keepdims=True)
            var = jnp.var(y, axis=(0, 2, 3), keepdims=True)
            y = (y - mean) * jax.lax.rsqrt(var + 1e-5)
            y = y * gamma.reshape(1, -1, 1, 1) + beta.reshape(1, -1, 1, 1)
            y = jnp.maximum(y, 0.0)
        return y

    ref = reference(x_nchw, params)

    assert layer3.shape == (n_img, 64, h_in // 8, h_in // 8), layer3.shape
    assert layer3.dtype == jnp.float32
    assert bool(jnp.isfinite(layer3).all()) and bool(jnp.all(layer3 >= 0))  # ReLU output
    err = float(jnp.max(jnp.abs(layer3 - ref)))
    assert err < 5e-2, f"max abs error vs XLA reference: {err}"
    print("KERNEL_OK")
</pallas_src>

<mosaic_0001>
module attributes {stable_mosaic.version = 11 : i64} {
  func.func @kernel(%arg0: memref<128x36xf32, #tpu.memory_space<vmem>>, %arg1: memref<36x128xf32, #tpu.memory_space<vmem>>, %arg2: memref<1x128xf32, #tpu.memory_space<vmem>>, %arg3: memref<1x128xf32, #tpu.memory_space<vmem>>, %arg4: memref<9x128x128xf32, #tpu.memory_space<vmem>>, %arg5: memref<1x128xf32, #tpu.memory_space<vmem>>, %arg6: memref<1x128xf32, #tpu.memory_space<vmem>>, %arg7: memref<9x128x128xf32, #tpu.memory_space<vmem>>, %arg8: memref<1x128xf32, #tpu.memory_space<vmem>>, %arg9: memref<1x128xf32, #tpu.memory_space<vmem>>, %arg10: memref<8x128xf32, #tpu.memory_space<vmem>>, %arg11: memref<200x128xf32, #tpu.memory_space<vmem>>, %arg12: memref<72x128xf32, #tpu.memory_space<vmem>>, %arg13: memref<9x32x128xf32, #tpu.memory_space<vmem>>, %arg14: memref<9x8x128xf32, #tpu.memory_space<vmem>>) attributes {dimension_semantics = [], scalar_prefetch = 0 : i64, scratch_operands = 4 : i64, tpu.core_type = #tpu.core_type<tc>} {
    %c0 = arith.constant 0 : index
    %c0_0 = arith.constant 0 : index
    %0 = vector.load %arg0[%c0, %c0_0] : memref<128x36xf32, #tpu.memory_space<vmem>>, vector<128x36xf32>
    %c0_1 = arith.constant 0 : index
    %c0_2 = arith.constant 0 : index
    %1 = vector.load %arg1[%c0_1, %c0_2] : memref<36x128xf32, #tpu.memory_space<vmem>>, vector<36x128xf32>
    %cst = arith.constant dense<0.000000e+00> : vector<128x128xf32>
    %2 = tpu.matmul %0, %1, %cst {dimension_numbers = #tpu.dot_dimension_numbers<[1], [0], [0], [1], [0, 0, 1, 1], [], []>} : vector<128x36xf32>, vector<36x128xf32>, vector<128x128xf32> -> vector<128x128xf32>
    %cst_3 = arith.constant dense<0.000000e+00> : vector<128xf32>
    %3 = vector.multi_reduction <add>, %2, %cst_3 [0] : vector<128x128xf32> to vector<128xf32>
    %4 = vector.shape_cast %3 : vector<128xf32> to vector<1x128xf32>
    %5 = arith.mulf %2, %2 : vector<128x128xf32>
    %cst_4 = arith.constant dense<0.000000e+00> : vector<128xf32>
    %6 = vector.multi_reduction <add>, %5, %cst_4 [0] : vector<128x128xf32> to vector<128xf32>
    %7 = vector.shape_cast %6 : vector<128xf32> to vector<1x128xf32>
    %cst_5 = arith.constant 7.812500e-03 : f32
    %8 = vector.broadcast %cst_5 : f32 to vector<1x128xf32>
    %9 = arith.mulf %4, %8 : vector<1x128xf32>
    %cst_6 = arith.constant 7.812500e-03 : f32
    %10 = vector.broadcast %cst_6 : f32 to vector<1x128xf32>
    %11 = arith.mulf %7, %10 : vector<1x128xf32>
    %12 = arith.mulf %9, %9 : vector<1x128xf32>
    %13 = arith.subf %11, %12 : vector<1x128xf32>
    %cst_7 = arith.constant 0.000000e+00 : f32
    %14 = vector.broadcast %cst_7 : f32 to vector<1x128xf32>
    %15 = arith.maximumf %13, %14 : vector<1x128xf32>
    %cst_8 = arith.constant 9.99999974E-6 : f32
    %16 = vector.broadcast %cst_8 : f32 to vector<1x128xf32>
    %17 = arith.addf %15, %16 : vector<1x128xf32>
    %18 = math.rsqrt %17 : vector<1x128xf32>
    %c0_9 = arith.constant 0 : index
    %c0_10 = arith.constant 0 : index
    %19 = vector.load %arg2[%c0_9, %c0_10] : memref<1x128xf32, #tpu.memory_space<vmem>>, vector<1x128xf32>
    %20 = arith.mulf %18, %19 : vector<1x128xf32>
    %21 = vector.broadcast %9 : vector<1x128xf32> to vector<128x128xf32>
    %22 = arith.subf %2, %21 : vector<128x128xf32>
    %23 = vector.broadcast %20 : vector<1x128xf32> to vector<128x128xf32>
    %24 = arith.mulf %22, %23 : vector<128x128xf32>
    %c0_11 = arith.constant 0 : index
    %c0_12 = arith.constant 0 : index
    %25 = vector.load %arg3[%c0_11, %c0_12] : memref<1x128xf32, #tpu.memory_space<vmem>>, vector<1x128xf32>
    %26 = vector.broadcast %25 : vector<1x128xf32> to vector<128x128xf32>
    %27 = arith.addf %24, %26 : vector<128x128xf32>
    %cst_13 = arith.constant 0.000000e+00 : f32
    %28 = vector.broadcast %cst_13 : f32 to vector<128x128xf32>
    %29 = arith.maximumf %27, %28 : vector<128x128xf32>
    %cst_14 = arith.constant 0.000000e+00 : f32
    %30 = vector.broadcast %cst_14 : f32 to vector<11x128xf32>
    %cst_15 = arith.constant 0.000000e+00 : f32
    %31 = vector.broadcast %cst_15 : f32 to vector<2x128xf32>
    %c0_16 = arith.constant 0 : index
    %c0_17 = arith.constant 0 : index
    %32 = vector.load %arg11[%c0_16, %c0_17] : memref<200x128xf32, #tpu.memory_space<vmem>>, vector<11x128xf32>
    tpu.vector_store %arg11[%c0_16, %c0_17], %30 {strides = array<i32>} : memref<200x128xf32, #tpu.memory_space<vmem>>, vector<11x128xf32>,
    %c19 = arith.constant 19 : index
    %c0_18 = arith.constant 0 : index
    %33 = vector.load %arg11[%c19, %c0_18] : memref<200x128xf32, #tpu.memory_space<vmem>>, vector<2x128xf32>
    tpu.vector_store %arg11[%c19, %c0_18], %31 {strides = array<i32>} : memref<200x128xf32, #tpu.memory_space<vmem>>, vector<2x128xf32>,
    %c29 = arith.constant 29 : index
    %c0_19 = arith.constant 0 : index
    %34 = vector.load %arg11[%c29, %c0_19] : memref<200x128xf32, #tpu.memory_space<vmem>>, vector<2x128xf32>
    tpu.vector_store %arg11[%c29, %c0_19], %31 {strides = array<i32>} : memref<200x128xf32, #tpu.memory_space<vmem>>, vector<2x128xf32>,
    %c39 = arith.constant 39 : index
    %c0_20 = arith.constant 0 : index
    %35 = vector.load %arg11[%c39, %c0_20] : memref<200x128xf32, #tpu.memory_space<vmem>>, vector<2x128xf32>
    tpu.vector_store %arg11[%c39, %c0_20], %31 {strides = array<i32>} : memref<200x128xf32, #tpu.memory_space<vmem>>, vector<2x128xf32>,
    %c49 = arith.constant 49 : index
    %c0_21 = arith.constant 0 : index
    %36 = vector.load %arg11[%c49, %c0_21] : memref<200x128xf32, #tpu.memory_space<vmem>>, vector<2x128xf32>
    tpu.vector_store %arg11[%c49, %c0_21], %31 {strides = array<i32>} : memref<200x128xf32, #tpu.memory_space<vmem>>, vector<2x128xf32>,
    %c59 = arith.constant 59 : index
    %c0_22 = arith.constant 0 : index
    %37 = vector.load %arg11[%c59, %c0_22] : memref<200x128xf32, #tpu.memory_space<vmem>>, vector<2x128xf32>
    tpu.vector_store %arg11[%c59, %c0_22], %31 {strides = array<i32>} : memref<200x128xf32, #tpu.memory_space<vmem>>, vector<2x128xf32>,
    %c69 = arith.constant 69 : index
    %c0_23 = arith.constant 0 : index
    %38 = vector.load %arg11[%c69, %c0_23] : memref<200x128xf32, #tpu.memory_space<vmem>>, vector<2x128xf32>
    tpu.vector_store %arg11[%c69, %c0_23], %31 {strides = array<i32>} : memref<200x128xf32, #tpu.memory_space<vmem>>, vector<2x128xf32>,
    %c79 = arith.constant 79 : index
    %c0_24 = arith.constant 0 : index
    %39 = vector.load %arg11[%c79, %c0_24] : memref<200x128xf32, #tpu.memory_space<vmem>>, vector<2x128xf32>
    tpu.vector_store %arg11[%c79, %c0_24], %31 {strides = array<i32>} : memref<200x128xf32, #tpu.memory_space<vmem>>, vector<2x128xf32>,
    %c89 = arith.constant 89 : index
    %c0_25 = arith.constant 0 : index
    %40 = vector.load %arg11[%c89, %c0_25] : memref<200x128xf32, #tpu.memory_space<vmem>>, vector<11x128xf32>
    tpu.vector_store %arg11[%c89, %c0_25], %30 {strides = array<i32>} : memref<200x128xf32, #tpu.memory_space<vmem>>, vector<11x128xf32>,
    %c100 = arith.constant 100 : index
    %c0_26 = arith.constant 0 : index
    %41 = vector.load %arg11[%c100, %c0_26] : memref<200x128xf32, #tpu.memory_space<vmem>>, vector<11x128xf32>
    tpu.vector_store %arg11[%c100, %c0_26], %30 {strides = array<i32>} : memref<200x128xf32, #tpu.memory_space<vmem>>, vector<11x128xf32>,
    %c119 = arith.constant 119 : index
    %c0_27 = arith.constant 0 : index
    %42 = vector.load %arg11[%c119, %c0_27] : memref<200x128xf32, #tpu.memory_space<vmem>>, vector<2x128xf32>
    tpu.vector_store %arg11[%c119, %c0_27], %31 {strides = array<i32>} : memref<200x128xf32, #tpu.memory_space<vmem>>, vector<2x128xf32>,
    %c129 = arith.constant 129 : index
    %c0_28 = arith.constant 0 : index
    %43 = vector.load %arg11[%c129, %c0_28] : memref<200x128xf32, #tpu.memory_space<vmem>>, vector<2x128xf32>
    tpu.vector_store %arg11[%c129, %c0_28], %31 {strides = array<i32>} : memref<200x128xf32, #tpu.memory_space<vmem>>, vector<2x128xf32>,
    %c139 = arith.constant 139 : index
    %c0_29 = arith.constant 0 : index
    %44 = vector.load %arg11[%c139, %c0_29] : memref<200x128xf32, #tpu.memory_space<vmem>>, vector<2x128xf32>
    tpu.vector_store %arg11[%c139, %c0_29], %31 {strides = array<i32>} : memref<200x128xf32, #tpu.memory_space<vmem>>, vector<2x128xf32>,
    %c149 = arith.constant 149 : index
    %c0_30 = arith.constant 0 : index
    %45 = vector.load %arg11[%c149, %c0_30] : memref<200x128xf32, #tpu.memory_space<vmem>>, vector<2x128xf32>
    tpu.vector_store %arg11[%c149, %c0_30], %31 {strides = array<i32>} : memref<200x128xf32, #tpu.memory_space<vmem>>, vector<2x128xf32>,
    %c159 = arith.constant 159 : index
    %c0_31 = arith.constant 0 : index
    %46 = vector.load %arg11[%c159, %c0_31] : memref<200x128xf32, #tpu.memory_space<vmem>>, vector<2x128xf32>
    tpu.vector_store %arg11[%c159, %c0_31], %31 {strides = array<i32>} : memref<200x128xf32, #tpu.memory_space<vmem>>, vector<2x128xf32>,
    %c169 = arith.constant 169 : index
    %c0_32 = arith.constant 0 : index
    %47 = vector.load %arg11[%c169, %c0_32] : memref<200x128xf32, #tpu.memory_space<vmem>>, vector<2x128xf32>
    tpu.vector_store %arg11[%c169, %c0_32], %31 {strides = array<i32>} : memref<200x128xf32, #tpu.memory_space<vmem>>, vector<2x128xf32>,
    %c179 = arith.constant 179 : index
    %c0_33 = arith.constant 0 : index
    %48 = vector.load %arg11[%c179, %c0_33] : memref<200x128xf32, #tpu.memory_space<vmem>>, vector<2x128xf32>
    tpu.vector_store %arg11[%c179, %c0_33], %31 {strides = array<i32>} : memref<200x128xf32, #tpu.memory_space<vmem>>, vector<2x128xf32>,
    %c189 = arith.constant 189 : index
    %c0_34 = arith.constant 0 : index
    %49 = vector.load %arg11[%c189, %c0_34] : memref<200x128xf32, #tpu.memory_space<vmem>>, vector<11x128xf32>
    tpu.vector_store %arg11[%c189, %c0_34], %30 {strides = array<i32>} : memref<200x128xf32, #tpu.memory_space<vmem>>, vector<11x128xf32>,
    %50 = vector.extract_strided_slice %29 {offsets = [0, 0], sizes = [8, 128], strides = [1, 1]} : vector<128x128xf32> to vector<8x128xf32>
    %c11 = arith.constant 11 : index
    %c0_35 = arith.constant 0 : index
    %51 = vector.load %arg11[%c11, %c0_35] : memref<200x128xf32, #tpu.memory_space<vmem>>, vector<8x128xf32>
    tpu.vector_store %arg11[%c11, %c0_35], %50 {strides = array<i32>} : memref<200x128xf32, #tpu.memory_space<vmem>>, vector<8x128xf32>,
    %52 = vector.extract_strided_slice %29 {offsets = [8, 0], sizes = [8, 128], strides = [1, 1]} : vector<128x128xf32> to vector<8x128xf32>
    %c21 = arith.constant 21 : index
    %c0_36 = arith.constant 0 : index
    %53 = vector.load %arg11[%c21, %c0_36] : memref<200x128xf32, #tpu.memory_space<vmem>>, vector<8x128xf32>
    tpu.vector_store %arg11[%c21, %c0_36], %52 {strides = array<i32>} : memref<200x128xf32, #tpu.memory_space<vmem>>, vector<8x128xf32>,
    %54 = vector.extract_strided_slice %29 {offsets = [16, 0], sizes = [8, 128], strides = [1, 1]} : vector<128x128xf32> to vector<8x128xf32>
    %c31 = arith.constant 31 : index
    %c0_37 = arith.constant 0 : index
    %55 = vector.load %arg11[%c31, %c0_37] : memref<200x128xf32, #tpu.memory_space<vmem>>, vector<8x128xf32>
    tpu.vector_store %arg11[%c31, %c0_37], %54 {strides = array<i32>} : memref<200x128xf32, #tpu.memory_space<vmem>>, vector<8x128xf32>,
    %56 = vector.extract_strided_slice %29 {offsets = [24, 0], sizes = [8, 128], strides = [1, 1]} : vector<128x128xf32> to vector<8x128xf32>
    %c41 = arith.constant 41 : index
    %c0_38 = arith.constant 0 : index
    %57 = vector.load %arg11[%c41, %c0_38] : memref<200x128xf32, #tpu.memory_space<vmem>>, vector<8x128xf32>
    tpu.vector_store %arg11[%c41, %c0_38], %56 {strides = array<i32>} : memref<200x128xf32, #tpu.memory_space<vmem>>, vector<8x128xf32>,
    %58 = vector.extract_strided_slice %29 {offsets = [32, 0], sizes = [8, 128], strides = [1, 1]} : vector<128x128xf32> to vector<8x128xf32>
    %c51 = arith.constant 51 : index
    %c0_39 = arith.constant 0 : index
    %59 = vector.load %arg11[%c51, %c0_39] : memref<200x128xf32, #tpu.memory_space<vmem>>, vector<8x128xf32>
    tpu.vector_store %arg11[%c51, %c0_39], %58 {strides = array<i32>} : memref<200x128xf32, #tpu.memory_space<vmem>>, vector<8x128xf32>,
    %60 = vector.extract_strided_slice %29 {offsets = [40, 0], sizes = [8, 128], strides = [1, 1]} : vector<128x128xf32> to vector<8x128xf32>
    %c61 = arith.constant 61 : index
    %c0_40 = arith.constant 0 : index
    %61 = vector.load %arg11[%c61, %c0_40] : memref<200x128xf32, #tpu.memory_space<vmem>>, vector<8x128xf32>
    tpu.vector_store %arg11[%c61, %c0_40], %60 {strides = array<i32>} : memref<200x128xf32, #tpu.memory_space<vmem>>, vector<8x128xf32>,
    %62 = vector.extract_strided_slice %29 {offsets = [48, 0], sizes = [8, 128], strides = [1, 1]} : vector<128x128xf32> to vector<8x128xf32>
    %c71 = arith.constant 71 : index
    %c0_41 = arith.constant 0 : index
    %63 = vector.load %arg11[%c71, %c0_41] : memref<200x128xf32, #tpu.memory_space<vmem>>, vector<8x128xf32>
    tpu.vector_store %arg11[%c71, %c0_41], %62 {strides = array<i32>} : memref<200x128xf32, #tpu.memory_space<vmem>>, vector<8x128xf32>,
    %64 = vector.extract_strided_slice %29 {offsets = [56, 0], sizes = [8, 128], strides = [1, 1]} : vector<128x128xf32> to vector<8x128xf32>
    %c81 = arith.constant 81 : index
    %c0_42 = arith.constant 0 : index
    %65 = vector.load %arg11[%c81, %c0_42] : memref<200x128xf32, #tpu.memory_space<vmem>>, vector<8x128xf32>
    tpu.vector_store %arg11[%c81, %c0_42], %64 {strides = array<i32>} : memref<200x128xf32, #tpu.memory_space<vmem>>, vector<8x128xf32>,
    %66 = vector.extract_strided_slice %29 {offsets = [64, 0], sizes = [8, 128], strides = [1, 1]} : vector<128x128xf32> to vector<8x128xf32>
    %c111 = arith.constant 111 : index
    %c0_43 = arith.constant 0 : index
    %67 = vector.load %arg11[%c111, %c0_43] : memref<200x128xf32, #tpu.memory_space<vmem>>, vector<8x128xf32>
    tpu.vector_store %arg11[%c111, %c0_43], %66 {strides = array<i32>} : memref<200x128xf32, #tpu.memory_space<vmem>>, vector<8x128xf32>,
    %68 = vector.extract_strided_slice %29 {offsets = [72, 0], sizes = [8, 128], strides = [1, 1]} : vector<128x128xf32> to vector<8x128xf32>
    %c121 = arith.constant 121 : index
    %c0_44 = arith.constant 0 : index
    %69 = vector.load %arg11[%c121, %c0_44] : memref<200x128xf32, #tpu.memory_space<vmem>>, vector<8x128xf32>
    tpu.vector_store %arg11[%c121, %c0_44], %68 {strides = array<i32>} : memref<200x128xf32, #tpu.memory_space<vmem>>, vector<8x128xf32>,
    %70 = vector.extract_strided_slice %29 {offsets = [80, 0], sizes = [8, 128], strides = [1, 1]} : vector<128x128xf32> to vector<8x128xf32>
    %c131 = arith.constant 131 : index
    %c0_45 = arith.constant 0 : index
    %71 = vector.load %arg11[%c131, %c0_45] : memref<200x128xf32, #tpu.memory_space<vmem>>, vector<8x128xf32>
    tpu.vector_store %arg11[%c131, %c0_45], %70 {strides = array<i32>} : memref<200x128xf32, #tpu.memory_space<vmem>>, vector<8x128xf32>,
    %72 = vector.extract_strided_slice %29 {offsets = [88, 0], sizes = [8, 128], strides = [1, 1]} : vector<128x128xf32> to vector<8x128xf32>
    %c141 = arith.constant 141 : index
    %c0_46 = arith.constant 0 : index
    %73 = vector.load %arg11[%c141, %c0_46] : memref<200x128xf32, #tpu.memory_space<vmem>>, vector<8x128xf32>
    tpu.vector_store %arg11[%c141, %c0_46], %72 {strides = array<i32>} : memref<200x128xf32, #tpu.memory_space<vmem>>, vector<8x128xf32>,
    %74 = vector.extract_strided_slice %29 {offsets = [96, 0], sizes = [8, 128], strides = [1, 1]} : vector<128x128xf32> to vector<8x128xf32>
    %c151 = arith.constant 151 : index
    %c0_47 = arith.constant 0 : index
    %75 = vector.load %arg11[%c151, %c0_47] : memref<200x128xf32, #tpu.memory_space<vmem>>, vector<8x128xf32>
    tpu.vector_store %arg11[%c151, %c0_47], %74 {strides = array<i32>} : memref<200x128xf32, #tpu.memory_space<vmem>>, vector<8x128xf32>,
    %76 = vector.extract_strided_slice %29 {offsets = [104, 0], sizes = [8, 128], strides = [1, 1]} : vector<128x128xf32> to vector<8x128xf32>
    %c161 = arith.constant 161 : index
    %c0_48 = arith.constant 0 : index
    %77 = vector.load %arg11[%c161, %c0_48] : memref<200x128xf32, #tpu.memory_space<vmem>>, vector<8x128xf32>
    tpu.vector_store %arg11[%c161, %c0_48], %76 {strides = array<i32>} : memref<200x128xf32, #tpu.memory_space<vmem>>, vector<8x128xf32>,
    %78 = vector.extract_strided_slice %29 {offsets = [112, 0], sizes = [8, 128], strides = [1, 1]} : vector<128x128xf32> to vector<8x128xf32>
    %c171 = arith.constant 171 : index
    %c0_49 = arith.constant 0 : index
    %79 = vector.load %arg11[%c171, %c0_49] : memref<200x128xf32, #tpu.memory_space<vmem>>, vector<8x128xf32>
    tpu.vector_store %arg11[%c171, %c0_49], %78 {strides = array<i32>} : memref<200x128xf32, #tpu.memory_space<vmem>>, vector<8x128xf32>,
    %80 = vector.extract_strided_slice %29 {offsets = [120, 0], sizes = [8, 128], strides = [1, 1]} : vector<128x128xf32> to vector<8x128xf32>
    %c181 = arith.constant 181 : index
    %c0_50 = arith.constant 0 : index
    %81 = vector.load %arg11[%c181, %c0_50] : memref<200x128xf32, #tpu.memory_space<vmem>>, vector<8x128xf32>
    tpu.vector_store %arg11[%c181, %c0_50], %80 {strides = array<i32>} : memref<200x128xf32, #tpu.memory_space<vmem>>, vector<8x128xf32>,
    %c0_51 = arith.constant 0 : index
    %c0_52 = arith.constant 0 : index
    %82 = tpu.strided_load %arg11[%c0_51, %c0_52] {strides = array<i32: 2, 1>} : memref<200x128xf32, #tpu.memory_space<vmem>>, vector<4x128xf32>
    %c0_53 = arith.constant 0 : index
    %c0_54 = arith.constant 0 : index
    %c0_55 = arith.constant 0 : index
    %83 = vector.load %arg13[%c0_53, %c0_54, %c0_55] : memref<9x32x128xf32, #tpu.memory_space<vmem>>, vector<1x4x128xf32>
    %84 = vector.shape_cast %83 : vector<1x4x128xf32> to vector<4x128xf32>
    %85 = vector.shape_cast %82 : vector<4x128xf32> to vector<1x4x128xf32>
    tpu.vector_store %arg13[%c0_53, %c0_54, %c0_55], %85 {strides = array<i32>} : memref<9x32x128xf32, #tpu.memory_space<vmem>>, vector<1x4x128xf32>,
    %c20 = arith.constant 20 : index
    %c0_56 = arith.constant 0 : index
    %86 = tpu.strided_load %arg11[%c20, %c0_56] {strides = array<i32: 2, 1>} : memref<200x128xf32, #tpu.memory_space<vmem>>, vector<4x128xf32>
    %c0_57 = arith.constant 0 : index
    %c4 = arith.constant 4 : index
    %c0_58 = arith.constant 0 : index
    %87 = vector.load %arg13[%c0_57, %c4, %c0_58] : memref<9x32x128xf32, #tpu.memory_space<vmem>>, vector<1x4x128xf32>
    %88 = vector.shape_cast %87 : vector<1x4x128xf32> to vector<4x128xf32>
    %89 = vector.shape_cast %86 : vector<4x128xf32> to vector<1x4x128xf32>
    tpu.vector_store %arg13[%c0_57, %c4, %c0_58], %89 {strides = array<i32>} : memref<9x32x128xf32, #tpu.memory_space<vmem>>, vector<1x4x128xf32>,
    %c40 = arith.constant 40 : index
    %c0_59 = arith.constant 0 : index
    %90 = tpu.strided_load %arg11[%c40, %c0_59] {strides = array<i32: 2, 1>} : memref<200x128xf32, #tpu.memory_space<vmem>>, vector<4x128xf32>
    %c0_60 = arith.constant 0 : index
    %c8 = arith.constant 8 : index
    %c0_61 = arith.constant 0 : index
    %91 = vector.load %arg13[%c0_60, %c8, %c0_61] : memref<9x32x128xf32, #tpu.memory_space<vmem>>, vector<1x4x128xf32>
    %92 = vector.shape_cast %91 : vector<1x4x128xf32> to vector<4x128xf32>
    %93 = vector.shape_cast %90 : vector<4x128xf32> to vector<1x4x128xf32>
    tpu.vector_store %arg13[%c0_60, %c8, %c0_61], %93 {strides = array<i32>} : memref<9x32x128xf32, #tpu.memory_space<vmem>>, vector<1x4x128xf32>,
    %c60 = arith.constant 60 : index
    %c0_62 = arith.constant 0 : index
    %94 = tpu.strided_load %arg11[%c60, %c0_62] {strides = array<i32: 2, 1>} : memref<200x128xf32, #tpu.memory_space<vmem>>, vector<4x128xf32>
    %c0_63 = arith.constant 0 : index
    %c12 = arith.constant 12 : index
    %c0_64 = arith.constant 0 : index
    %95 = vector.load %arg13[%c0_63, %c12, %c0_64] : memref<9x32x128xf32, #tpu.memory_space<vmem>>, vector<1x4x128xf32>
    %96 = vector.shape_cast %95 : vector<1x4x128xf32> to vector<4x128xf32>
    %97 = vector.shape_cast %94 : vector<4x128xf32> to vector<1x4x128xf32>
    tpu.vector_store %arg13[%c0_63, %c12, %c0_64], %97 {strides = array<i32>} : memref<9x32x128xf32, #tpu.memory_space<vmem>>, vector<1x4x128xf32>,
    %c100_65 = arith.constant 100 : index
    %c0_66 = arith.constant 0 : index
    %98 = tpu.strided_load %arg11[%c100_65, %c0_66] {strides = array<i32: 2, 1>} : memref<200x128xf32, #tpu.memory_space<vmem>>, vector<4x128xf32>
    %c0_67 = arith.constant 0 : index
    %c16 = arith.constant 16 : index
    %c0_68 = arith.constant 0 : index
    %99 = vector.load %arg13[%c0_67, %c16, %c0_68] : memref<9x32x128xf32, #tpu.memory_space<vmem>>, vector<1x4x128xf32>
    %100 = vector.shape_cast %99 : vector<1x4x128xf32> to vector<4x128xf32>
    %101 = vector.shape_cast %98 : vector<4x128xf32> to vector<1x4x128xf32>
    tpu.vector_store %arg13[%c0_67, %c16, %c0_68], %101 {strides = array<i32>} : memref<9x32x128xf32, #tpu.memory_space<vmem>>, vector<1x4x128xf32>,
    %c120 = arith.constant 120 : index
    %c0_69 = arith.constant 0 : index
    %102 = tpu.strided_load %arg11[%c120, %c0_69] {strides = array<i32: 2, 1>} : memref<200x128xf32, #tpu.memory_space<vmem>>, vector<4x128xf32>
    %c0_70 = arith.constant 0 : index
    %c20_71 = arith.constant 20 : index
    %c0_72 = arith.constant 0 : index
    %103 = vector.load %arg13[%c0_70, %c20_71, %c0_72] : memref<9x32x128xf32, #tpu.memory_space<vmem>>, vector<1x4x128xf32>
    %104 = vector.shape_cast %103 : vector<1x4x128xf32> to vector<4x128xf32>
    %105 = vector.shape_cast %102 : vector<4x128xf32> to vector<1x4x128xf32>
    tpu.vector_store %arg13[%c0_70, %c20_71, %c0_72], %105 {strides = array<i32>} : memref<9x32x128xf32, #tpu.memory_space<vmem>>, vector<1x4x128xf32>,
    %c140 = arith.constant 140 : index
    %c0_73 = arith.constant 0 : index
    %106 = tpu.strided_load %arg11[%c140, %c0_73] {strides = array<i32: 2, 1>} : memref<200x128xf32, #tpu.memory_space<vmem>>, vector<4x128xf32>
    %c0_74 = arith.constant 0 : index
    %c24 = arith.constant 24 : index
    %c0_75 = arith.constant 0 : index
    %107 = vector.load %arg13[%c0_74, %c24, %c0_75] : memref<9x32x128xf32, #tpu.memory_space<vmem>>, vector<1x4x128xf32>
    %108 = vector.shape_cast %107 : vector<1x4x128xf32> to vector<4x128xf32>
    %109 = vector.shape_cast %106 : vector<4x128xf32> to vector<1x4x128xf32>
    tpu.vector_store %arg13[%c0_74, %c24, %c0_75], %109 {strides = array<i32>} : memref<9x32x128xf32, #tpu.memory_space<vmem>>, vector<1x4x128xf32>,
    %c160 = arith.constant 160 : index
    %c0_76 = arith.constant 0 : index
    %110 = tpu.strided_load %arg11[%c160, %c0_76] {strides = array<i32: 2, 1>} : memref<200x128xf32, #tpu.memory_space<vmem>>, vector<4x128xf32>
    %c0_77 = arith.constant 0 : index
    %c28 = arith.constant 28 : index
    %c0_78 = arith.constant 0 : index
    %111 = vector.load %arg13[%c0_77, %c28, %c0_78] : memref<9x32x128xf32, #tpu.memory_space<vmem>>, vector<1x4x128xf32>
    %112 = vector.shape_cast %111 : vector<1x4x128xf32> to vector<4x128xf32>
    %113 = vector.shape_cast %110 : vector<4x128xf32> to vector<1x4x128xf32>
    tpu.vector_store %arg13[%c0_77, %c28, %c0_78], %113 {strides = array<i32>} : memref<9x32x128xf32, #tpu.memory_space<vmem>>, vector<1x4x128xf32>,
    %c1 = arith.constant 1 : index
    %c0_79 = arith.constant 0 : index
    %114 = tpu.strided_load %arg11[%c1, %c0_79] {strides = array<i32: 2, 1>} : memref<200x128xf32, #tpu.memory_space<vmem>>, vector<4x128xf32>
    %c1_80 = arith.constant 1 : index
    %c0_81 = arith.constant 0 : index
    %c0_82 = arith.constant 0 : index
    %115 = vector.load %arg13[%c1_80, %c0_81, %c0_82] : memref<9x32x128xf32, #tpu.memory_space<vmem>>, vector<1x4x128xf32>
    %116 = vector.shape_cast %115 : vector<1x4x128xf32> to vector<4x128xf32>
    %117 = vector.shape_cast %114 : vector<4x128xf32> to vector<1x4x128xf32>
    tpu.vector_store %arg13[%c1_80, %c0_81, %c0_82], %117 {strides = array<i32>} : memref<9x32x128xf32, #tpu.memory_space<vmem>>, vector<1x4x128xf32>,
    %c21_83 = arith.constant 21 : index
    %c0_84 = arith.constant 0 : index
    %118 = tpu.strided_load %arg11[%c21_83, %c0_84] {strides = array<i32: 2, 1>} : memref<200x128xf32, #tpu.memory_space<vmem>>, vector<4x128xf32>
    %c1_85 = arith.constant 1 : index
    %c4_86 = arith.constant 4 : index
    %c0_87 = arith.constant 0 : index
    %119 = vector.load %arg13[%c1_85, %c4_86, %c0_87] : memref<9x32x128xf32, #tpu.memory_space<vmem>>, vector<1x4x128xf32>
    %120 = vector.shape_cast %119 : vector<1x4x128xf32> to vector<4x128xf32>
    %121 = vector.shape_cast %118 : vector<4x128xf32> to vector<1x4x128xf32>
    tpu.vector_store %arg13[%c1_85, %c4_86, %c0_87], %121 {strides = array<i32>} : memref<9x32x128xf32, #tpu.memory_space<vmem>>, vector<1x4x128xf32>,
    %c41_88 = arith.constant 41 : index
    %c0_89 = arith.constant 0 : index
    %122 = tpu.strided_load %arg11[%c41_88, %c0_89] {strides = array<i32: 2, 1>} : memref<200x128xf32, #tpu.memory_space<vmem>>, vector<4x128xf32>
    %c1_90 = arith.constant 1 : index
    %c8_91 = arith.constant 8 : index
    %c0_92 = arith.constant 0 : index
    %123 = vector.load %arg13[%c1_90, %c8_91, %c0_92] : memref<9x32x128xf32, #tpu.memory_space<vmem>>, vector<1x4x128xf32>
    %124 = vector.shape_cast %123 : vector<1x4x128xf32> to vector<4x128xf32>
    %125 = vector.shape_cast %122 : vector<4x128xf32> to vector<1x4x128xf32>
    tpu.vector_store %arg13[%c1_90, %c8_91, %c0_92], %125 {strides = array<i32>} : memref<9x32x128xf32, #tpu.memory_space<vmem>>, vector<1x4x128xf32>,
    %c61_93 = arith.constant 61 : index
    %c0_94 = arith.constant 0 : index
    %126 = tpu.strided_load %arg11[%c61_93, %c0_94] {strides = array<i32: 2, 1>} : memref<200x128xf32, #tpu.memory_space<vmem>>, vector<4x128xf32>
    %c1_95 = arith.constant 1 : index
    %c12_96 = arith.constant 12 : index
    %c0_97 = arith.constant 0 : index
    %127 = vector.load %arg13[%c1_95, %c12_96, %c0_97] : memref<9x32x128xf32, #tpu.memory_space<vmem>>, vector<1x4x128xf32>
    %128 = vector.shape_cast %127 : vector<1x4x128xf32> to vector<4x128xf32>
    %129 = vector.shape_cast %126 : vector<4x128xf32> to vector<1x4x128xf32>
    tpu.vector_store %arg13[%c1_95, %c12_96, %c0_97], %129 {strides = array<i32>} : memref<9x32x128xf32, #tpu.memory_space<vmem>>, vector<1x4x128xf32>,
    %c101 = arith.constant 101 : index
    %c0_98 = arith.constant 0 : index
    %130 = tpu.strided_load %arg11[%c101, %c0_98] {strides = array<i32: 2, 1>} : memref<200x128xf32, #tpu.memory_space<vmem>>, vector<4x128xf32>
    %c1_99 = arith.constant 1 : index
    %c16_100 = arith.constant 16 : index
    %c0_101 = arith.constant 0 : index
    %131 = vector.load %arg13[%c1_99, %c16_100, %c0_101] : memref<9x32x128xf32, #tpu.memory_space<vmem>>, vector<1x4x128xf32>
    %132 = vector.shape_cast %131 : vector<1x4x128xf32> to vector<4x128xf32>
    %133 = vector.shape_cast %130 : vector<4x128xf32> to vector<1x4x128xf32>
    tpu.vector_store %arg13[%c1_99, %c16_100, %c0_101], %133 {strides = array<i32>} : memref<9x32x128xf32, #tpu.memory_space<vmem>>, vector<1x4x128xf32>,
    %c121_102 = arith.constant 121 : index
    %c0_103 = arith.constant 0 : index
    %134 = tpu.strided_load %arg11[%c121_102, %c0_103] {strides = array<i32: 2, 1>} : memref<200x128xf32, #tpu.memory_space<vmem>>, vector<4x128xf32>
    %c1_104 = arith.constant 1 : index
    %c20_105 = arith.constant 20 : index
    %c0_106 = arith.constant 0 : index
    %135 = vector.load %arg13[%c1_104, %c20_105, %c0_106] : memref<9x32x128xf32, #tpu.memory_space<vmem>>, vector<1x4x128xf32>
    %136 = vector.shape_cast %135 : vector<1x4x128xf32> to vector<4x128xf32>
    %137 = vector.shape_cast %134 : vector<4x128xf32> to vector<1x4x128xf32>
    tpu.vector_store %arg13[%c1_104, %c20_105, %c0_106], %137 {strides = array<i32>} : memref<9x32x128xf32, #tpu.memory_space<vmem>>, vector<1x4x128xf32>,
    %c141_107 = arith.constant 141 : index
    %c0_108 = arith.constant 0 : index
    %138 = tpu.strided_load %arg11[%c141_107, %c0_108] {strides = array<i32: 2, 1>} : memref<200x128xf32, #tpu.memory_space<vmem>>, vector<4x128xf32>
    %c1_109 = arith.constant 1 : index
    %c24_110 = arith.constant 24 : index
    %c0_111 = arith.constant 0 : index
    %139 = vector.load %arg13[%c1_109, %c24_110, %c0_111] : memref<9x32x128xf32, #tpu.memory_space<vmem>>, vector<1x4x128xf32>
    %140 = vector.shape_cast %139 : vector<1x4x128xf32> to vector<4x128xf32>
    %141 = vector.shape_cast %138 : vector<4x128xf32> to vector<1x4x128xf32>
    tpu.vector_store %arg13[%c1_109, %c24_110, %c0_111], %141 {strides = array<i32>} : memref<9x32x128xf32, #tpu.memory_space<vmem>>, vector<1x4x128xf32>,
    %c161_112 = arith.constant 161 : index
    %c0_113 = arith.constant 0 : index
    %142 = tpu.strided_load %arg11[%c161_112, %c0_113] {strides = array<i32: 2, 1>} : memref<200x128xf32, #tpu.memory_space<vmem>>, vector<4x128xf32>
    %c1_114 = arith.constant 1 : index
    %c28_115 = arith.constant 28 : index
    %c0_116 = arith.constant 0 : index
    %143 = vector.load %arg13[%c1_114, %c28_115, %c0_116] : memref<9x32x128xf32, #tpu.memory_space<vmem>>, vector<1x4x128xf32>
    %144 = vector.shape_cast %143 : vector<1x4x128xf32> to vector<4x128xf32>
    %145 = vector.shape_cast %142 : vector<4x128xf32> to vector<1x4x128xf32>
    tpu.vector_store %arg13[%c1_114, %c28_115, %c0_116], %145 {strides = array<i32>} : memref<9x32x128xf32, #tpu.memory_space<vmem>>, vector<1x4x128xf32>,
    %c2 = arith.constant 2 : index
    %c0_117 = arith.constant 0 : index
    %146 = tpu.strided_load %arg11[%c2, %c0_117] {strides = array<i32: 2, 1>} : memref<200x128xf32, #tpu.memory_space<vmem>>, vector<4x128xf32>
    %c2_118 = arith.constant 2 : index
    %c0_119 = arith.constant 0 : index
    %c0_120 = arith.constant 0 : index
    %147 = vector.load %arg13[%c2_118, %c0_119, %c0_120] : memref<9x32x128xf32, #tpu.memory_space<vmem>>, vector<1x4x128xf32>
    %148 = vector.shape_cast %147 : vector<1x4x128xf32> to vector<4x128xf32>
    %149 = vector.shape_cast %146 : vector<4x128xf32> to vector<1x4x128xf32>
    tpu.vector_store %arg13[%c2_118, %c0_119, %c0_120], %149 {strides = array<i32>} : memref<9x32x128xf32, #tpu.memory_space<vmem>>, vector<1x4x128xf32>,
    %c22 = arith.constant 22 : index
    %c0_121 = arith.constant 0 : index
    %150 = tpu.strided_load %arg11[%c22, %c0_121] {strides = array<i32: 2, 1>} : memref<200x128xf32, #tpu.memory_space<vmem>>, vector<4x128xf32>
    %c2_122 = arith.constant 2 : index
    %c4_123 = arith.constant 4 : index
    %c0_124 = arith.constant 0 : index
    %151 = vector.load %arg13[%c2_122, %c4_123, %c0_124] : memref<9x32x128xf32, #tpu.memory_space<vmem>>, vector<1x4x128xf32>
    %152 = vector.shape_cast %151 : vector<1x4x128xf32> to vector<4x128xf32>
    %153 = vector.shape_cast %150 : vector<4x128xf32> to vector<1x4x128xf32>
    tpu.vector_store %arg13[%c2_122, %c4_123, %c0_124], %153 {strides = array<i32>} : memref<9x32x128xf32, #tpu.memory_space<vmem>>, vector<1x4x128xf32>,
    %c42 = arith.constant 42 : index
    %c0_125 = arith.constant 0 : index
    %154 = tpu.strided_load %arg11[%c42, %c0_125] {strides = array<i32: 2, 1>} : memref<200x128xf32, #tpu.memory_space<vmem>>, vector<4x128xf32>
    %c2_126 = arith.constant 2 : index
    %c8_127 = arith.constant 8 : index
    %c0_128 = arith.constant 0 : index
    %155 = vector.load %arg13[%c2_126, %c8_127, %c0_128] : memref<9x32x128xf32, #tpu.memory_space<vmem>>, vector<1x4x128xf32>
    %156 = vector.shape_cast %155 : vector<1x4x128xf32> to vector<4x128xf32>
    %157 = vector.shape_cast %154 : vector<4x128xf32> to vector<1x4x128xf32>
    tpu.vector_store %arg13[%c2_126, %c8_127, %c0_128], %157 {strides = array<i32>} : memref<9x32x128xf32, #tpu.memory_space<vmem>>, vector<1x4x128xf32>,
    %c62 = arith.constant 62 : index
    %c0_129 = arith.constant 0 : index
    %158 = tpu.strided_load %arg11[%c62, %c0_129] {strides = array<i32: 2, 1>} : memref<200x128xf32, #tpu.memory_space<vmem>>, vector<4x128xf32>
    %c2_130 = arith.constant 2 : index
    %c12_131 = arith.constant 12 : index
    %c0_132 = arith.constant 0 : index
    %159 = vector.load %arg13[%c2_130, %c12_131, %c0_132] : memref<9x32x128xf32, #tpu.memory_space<vmem>>, vector<1x4x128xf32>
    %160 = vector.shape_cast %159 : vector<1x4x128xf32> to vector<4x128xf32>
    %161 = vector.shape_cast %158 : vector<4x128xf32> to vector<1x4x128xf32>
    tpu.vector_store %arg13[%c2_130, %c12_131, %c0_132], %161 {strides = array<i32>} : memref<9x32x128xf32, #tpu.memory_space<vmem>>, vector<1x4x128xf32>,
    %c102 = arith.constant 102 : index
    %c0_133 = arith.constant 0 : index
    %162 = tpu.strided_load %arg11[%c102, %c0_133] {strides = array<i32: 2, 1>} : memref<200x128xf32, #tpu.memory_space<vmem>>, vector<4x128xf32>
    %c2_134 = arith.constant 2 : index
    %c16_135 = arith.constant 16 : index
    %c0_136 = arith.constant 0 : index
    %163 = vector.load %arg13[%c2_134, %c16_135, %c0_136] : memref<9x32x128xf32, #tpu.memory_space<vmem>>, vector<1x4x128xf32>
    %164 = vector.shape_cast %163 : vector<1x4x128xf32> to vector<4x128xf32>
    %165 = vector.shape_cast %162 : vector<4x128xf32> to vector<1x4x128xf32>
    tpu.vector_store %arg13[%c2_134, %c16_135, %c0_136], %165 {strides = array<i32>} : memref<9x32x128xf32, #tpu.memory_space<vmem>>, vector<1x4x128xf32>,
    %c122 = arith.constant 122 : index
    %c0_137 = arith.constant 0 : index
    %166 = tpu.strided_load %arg11[%c122, %c0_137] {strides = array<i32: 2, 1>} : memref<200x128xf32, #tpu.memory_space<vmem>>, vector<4x128xf32>
    %c2_138 = arith.constant 2 : index
    %c20_139 = arith.constant 20 : index
    %c0_140 = arith.constant 0 : index
    %167 = vector.load %arg13[%c2_138, %c20_139, %c0_140] : memref<9x32x128xf32, #tpu.memory_space<vmem>>, vector<1x4x128xf32>
    %168 = vector.shape_cast %167 : vector<1x4x128xf32> to vector<4x128xf32>
    %169 = vector.shape_cast %166 : vector<4x128xf32> to vector<1x4x128xf32>
    tpu.vector_store %arg13[%c2_138, %c20_139, %c0_140], %169 {strides = array<i32>} : memref<9x32x128xf32, #tpu.memory_space<vmem>>, vector<1x4x128xf32>,
    %c142 = arith.constant 142 : index
    %c0_141 = arith.constant 0 : index
    %170 = tpu.strided_load %arg11[%c142, %c0_141] {strides = array<i32: 2, 1>} : memref<200x128xf32, #tpu.memory_space<vmem>>, vector<4x128xf32>
    %c2_142 = arith.constant 2 : index
    %c24_143 = arith.constant 24 : index
    %c0_144 = arith.constant 0 : index
    %171 = vector.load %arg13[%c2_142, %c24_143, %c0_144] : memref<9x32x128xf32, #tpu.memory_space<vmem>>, vector<1x4x128xf32>
    %172 = vector.shape_cast %171 : vector<1x4x128xf32> to vector<4x128xf32>
    %173 = vector.shape_cast %170 : vector<4x128xf32> to vector<1x4x128xf32>
    tpu.vector_store %arg13[%c2_142, %c24_143, %c0_144], %173 {strides = array<i32>} : memref<9x32x128xf32, #tpu.memory_space<vmem>>, vector<1x4x128xf32>,
    %c162 = arith.constant 162 : index
    %c0_145 = arith.constant 0 : index
    %174 = tpu.strided_load %arg11[%c162, %c0_145] {strides = array<i32: 2, 1>} : memref<200x128xf32, #tpu.memory_space<vmem>>, vector<4x128xf32>
    %c2_146 = arith.constant 2 : index
    %c28_147 = arith.constant 28 : index
    %c0_148 = arith.constant 0 : index
    %175 = vector.load %arg13[%c2_146, %c28_147, %c0_148] : memref<9x32x128xf32, #tpu.memory_space<vmem>>, vector<1x4x128xf32>
    %176 = vector.shape_cast %175 : vector<1x4x128xf32> to vector<4x128xf32>
    %177 = vector.shape_cast %174 : vector<4x128xf32> to vector<1x4x128xf32>
    tpu.vector_store %arg13[%c2_146, %c28_147, %c0_148], %177 {strides = array<i32>} : memref<9x32x128xf32, #tpu.memory_space<vmem>>, vector<1x4x128xf32>,
    %c10 = arith.constant 10 : index
    %c0_149 = arith.constant 0 : index
    %178 = tpu.strided_load %arg11[%c10, %c0_149] {strides = array<i32: 2, 1>} : memref<200x128xf32, #tpu.memory_space<vmem>>, vector<4x128xf32>
    %c3 = arith.constant 3 : index
    %c0_150 = arith.constant 0 : index
    %c0_151 = arith.constant 0 : index
    %179 = vector.load %arg13[%c3, %c0_150, %c0_151] : memref<9x32x128xf32, #tpu.memory_space<vmem>>, vector<1x4x128xf32>
    %180 = vector.shape_cast %179 : vector<1x4x128xf32> to vector<4x128xf32>
    %181 = vector.shape_cast %178 : vector<4x128xf32> to vector<1x4x128xf32>
    tpu.vector_store %arg13[%c3, %c0_150, %c0_151], %181 {strides = array<i32>} : memref<9x32x128xf32, #tpu.memory_space<vmem>>, vector<1x4x128xf32>,
    %c30 = arith.constant 30 : index
    %c0_152 = arith.constant 0 : index
    %182 = tpu.strided_load %arg11[%c30, %c0_152] {strides = array<i32: 2, 1>} : memref<200x128xf32, #tpu.memory_space<vmem>>, vector<4x128xf32>
    %c3_153 = arith.constant 3 : index
    %c4_154 = arith.constant 4 : index
    %c0_155 = arith.constant 0 : index
    %183 = vector.load %arg13[%c3_153, %c4_154, %c0_155] : memref<9x32x128xf32, #tpu.memory_space<vmem>>, vector<1x4x128xf32>
    %184 = vector.shape_cast %183 : vector<1x4x128xf32> to vector<4x128xf32>
    %185 = vector.shape_cast %182 : vector<4x128xf32> to vector<1x4x128xf32>
    tpu.vector_store %arg13[%c3_153, %c4_154, %c0_155], %185 {strides = array<i32>} : memref<9x32x128xf32, #tpu.memory_space<vmem>>, vector<1x4x128xf32>,
    %c50 = arith.constant 50 : index
    %c0_156 = arith.constant 0 : index
    %186 = tpu.strided_load %arg11[%c50, %c0_156] {strides = array<i32: 2, 1>} : memref<200x128xf32, #tpu.memory_space<vmem>>, vector<4x128xf32>
    %c3_157 = arith.constant 3 : index
    %c8_158 = arith.constant 8 : index
    %c0_159 = arith.constant 0 : index
    %187 = vector.load %arg13[%c3_157, %c8_158, %c0_159] : memref<9x32x128xf32, #tpu.memory_space<vmem>>, vector<1x4x128xf32>
    %188 = vector.shape_cast %187 : vector<1x4x128xf32> to vector<4x128xf32>
    %189 = vector.shape_cast %186 : vector<4x128xf32> to vector<1x4x128xf32>
    tpu.vector_store %arg13[%c3_157, %c8_158, %c0_159], %189 {strides = array<i32>} : memref<9x32x128xf32, #tpu.memory_space<vmem>>, vector<1x4x128xf32>,
    %c70 = arith.constant 70 : index
    %c0_160 = arith.constant 0 : index
    %190 = tpu.strided_load %arg11[%c70, %c0_160] {strides = array<i32: 2, 1>} : memref<200x128xf32, #tpu.memory_space<vmem>>, vector<4x128xf32>
    %c3_161 = arith.constant 3 : index
    %c12_162 = arith.constant 12 : index
    %c0_163 = arith.constant 0 : index
    %191 = vector.load %arg13[%c3_161, %c12_162, %c0_163] : memref<9x32x128xf32, #tpu.memory_space<vmem>>, vector<1x4x128xf32>
    %192 = vector.shape_cast %191 : vector<1x4x128xf32> to vector<4x128xf32>
    %193 = vector.shape_cast %190 : vector<4x128xf32> to vector<1x4x128xf32>
    tpu.vector_store %arg13[%c3_161, %c12_162, %c0_163], %193 {strides = array<i32>} : memref<9x32x128xf32, #tpu.memory_space<vmem>>, vector<1x4x128xf32>,
    %c110 = arith.constant 110 : index
    %c0_164 = arith.constant 0 : index
    %194 = tpu.strided_load %arg11[%c110, %c0_164] {strides = array<i32: 2, 1>} : memref<200x128xf32, #tpu.memory_space<vmem>>, vector<4x128xf32>
    %c3_165 = arith.constant 3 : index
    %c16_166 = arith.constant 16 : index
    %c0_167 = arith.constant 0 : index
    %195 = vector.load %arg13[%c3_165, %c16_166, %c0_167] : memref<9x32x128xf32, #tpu.memory_space<vmem>>, vector<1x4x128xf32>
    %196 = vector.shape_cast %195 : vector<1x4x128xf32> to vector<4x128xf32>
    %197 = vector.shape_cast %194 : vector<4x128xf32> to vector<1x4x128xf32>
    tpu.vector_store %arg13[%c3_165, %c16_166, %c0_167], %197 {strides = array<i32>} : memref<9x32x128xf32, #tpu.memory_space<vmem>>, vector<1x4x128xf32>,
    %c130 = arith.constant 130 : index
    %c0_168 = arith.constant 0 : index
    %198 = tpu.strided_load %arg11[%c130, %c0_168] {strides = array<i32: 2, 1>} : memref<200x128xf32, #tpu.memory_space<vmem>>, vector<4x128xf32>
    %c3_169 = arith.constant 3 : index
    %c20_170 = arith.constant 20 : index
    %c0_171 = arith.constant 0 : index
    %199 = vector.load %arg13[%c3_169, %c20_170, %c0_171] : memref<9x32x128xf32, #tpu.memory_space<vmem>>, vector<1x4x128xf32>
    %200 = vector.shape_cast %199 : vector<1x4x128xf32> to vector<4x128xf32>
    %201 = vector.shape_cast %198 : vector<4x128xf32> to vector<1x4x128xf32>
    tpu.vector_store %arg13[%c3_169, %c20_170, %c0_171], %201 {strides = array<i32>} : memref<9x32x128xf32, #tpu.memory_space<vmem>>, vector<1x4x128xf32>,
    %c150 = arith.constant 150 : index
    %c0_172 = arith.constant 0 : index
    %202 = tpu.strided_load %arg11[%c150, %c0_172] {strides = array<i32: 2, 1>} : memref<200x128xf32, #tpu.memory_space<vmem>>, vector<4x128xf32>
    %c3_173 = arith.constant 3 : index
    %c24_174 = arith.constant 24 : index
    %c0_175 = arith.constant 0 : index
    %203 = vector.load %arg13[%c3_173, %c24_174, %c0_175] : memref<9x32x128xf32, #tpu.memory_space<vmem>>, vector<1x4x128xf32>
    %204 = vector.shape_cast %203 : vector<1x4x128xf32> to vector<4x128xf32>
    %205 = vector.shape_cast %202 : vector<4x128xf32> to vector<1x4x128xf32>
    tpu.vector_store %arg13[%c3_173, %c24_174, %c0_175], %205 {strides = array<i32>} : memref<9x32x128xf32, #tpu.memory_space<vmem>>, vector<1x4x128xf32>,
    %c170 = arith.constant 170 : index
    %c0_176 = arith.constant 0 : index
    %206 = tpu.strided_load %arg11[%c170, %c0_176] {strides = array<i32: 2, 1>} : memref<200x128xf32, #tpu.memory_space<vmem>>, vector<4x128xf32>
    %c3_177 = arith.constant 3 : index
    %c28_178 = arith.constant 28 : index
    %c0_179 = arith.constant 0 : index
    %207 = vector.load %arg13[%c3_177, %c28_178, %c0_179] : memref<9x32x128xf32, #tpu.memory_space<vmem>>, vector<1x4x128xf32>
    %208 = vector.shape_cast %207 : vector<1x4x128xf32> to vector<4x128xf32>
    %209 = vector.shape_cast %206 : vector<4x128xf32> to vector<1x4x128xf32>
    tpu.vector_store %arg13[%c3_177, %c28_178, %c0_179], %209 {strides = array<i32>} : memref<9x32x128xf32, #tpu.memory_space<vmem>>, vector<1x4x128xf32>,
    %c11_180 = arith.constant 11 : index
    %c0_181 = arith.constant 0 : index
    %210 = tpu.strided_load %arg11[%c11_180, %c0_181] {strides = array<i32: 2, 1>} : memref<200x128xf32, #tpu.memory_space<vmem>>, vector<4x128xf32>
    %c4_182 = arith.constant 4 : index
    %c0_183 = arith.constant 0 : index
    %c0_184 = arith.constant 0 : index
    %211 = vector.load %arg13[%c4_182, %c0_183, %c0_184] : memref<9x32x128xf32, #tpu.memory_space<vmem>>, vector<1x4x128xf32>
    %212 = vector.shape_cast %211 : vector<1x4x128xf32> to vector<4x128xf32>
    %213 = vector.shape_cast %210 : vector<4x128xf32> to vector<1x4x128xf32>
    tpu.vector_store %arg13[%c4_182, %c0_183, %c0_184], %213 {strides = array<i32>} : memref<9x32x128xf32, #tpu.memory_space<vmem>>, vector<1x4x128xf32>,
    %c31_185 = arith.constant 31 : index
    %c0_186 = arith.constant 0 : index
    %214 = tpu.strided_load %arg11[%c31_185, %c0_186] {strides = array<i32: 2, 1>} : memref<200x128xf32, #tpu.memory_space<vmem>>, vector<4x128xf32>
    %c4_187 = arith.constant 4 : index
    %c4_188 = arith.constant 4 : index
    %c0_189 = arith.constant 0 : index
    %215 = vector.load %arg13[%c4_187, %c4_188, %c0_189] : memref<9x32x128xf32, #tpu.memory_space<vmem>>, vector<1x4x128xf32>
    %216 = vector.shape_cast %215 : vector<1x4x128xf32> to vector<4x128xf32>
    %217 = vector.shape_cast %214 : vector<4x128xf32> to vector<1x4x128xf32>
    tpu.vector_store %arg13[%c4_187, %c4_188, %c0_189], %217 {strides = array<i32>} : memref<9x32x128xf32, #tpu.memory_space<vmem>>, vector<1x4x128xf32>,
    %c51_190 = arith.constant 51 : index
    %c0_191 = arith.constant 0 : index
    %218 = tpu.strided_load %arg11[%c51_190, %c0_191] {strides = array<i32: 2, 1>} : memref<200x128xf32, #tpu.memory_space<vmem>>, vector<4x128xf32>
    %c4_192 = arith.constant 4 : index
    %c8_193 = arith.constant 8 : index
    %c0_194 = arith.constant 0 : index
    %219 = vector.load %arg13[%c4_192, %c8_193, %c0_194] : memref<9x32x128xf32, #tpu.memory_space<vmem>>, vector<1x4x128xf32>
    %220 = vector.shape_cast %219 : vector<1x4x128xf32> to vector<4x128xf32>
    %221 = vector.shape_cast %218 : vector<4x128xf32> to vector<1x4x128xf32>
    tpu.vector_store %arg13[%c4_192, %c8_193, %c0_194], %221 {strides = array<i32>} : memref<9x32x128xf32, #tpu.memory_space<vmem>>, vector<1x4x128xf32>,
    %c71_195 = arith.constant 71 : index
    %c0_196 = arith.constant 0 : index
    %222 = tpu.strided_load %arg11[%c71_195, %c0_196] {strides = array<i32: 2, 1>} : memref<200x128xf32, #tpu.memory_space<vmem>>, vector<4x128xf32>
    %c4_197 = arith.constant 4 : index
    %c12_198 = arith.constant 12 : index
    %c0_199 = arith.constant 0 : index
    %223 = vector.load %arg13[%c4_197, %c12_198, %c0_199] : memref<9x32x128xf32, #tpu.memory_space<vmem>>, vector<1x4x128xf32>
    %224 = vector.shape_cast %223 : vector<1x4x128xf32> to vector<4x128xf32>
    %225 = vector.shape_cast %222 : vector<4x128xf32> to vector<1x4x128xf32>
    tpu.vector_store %arg13[%c4_197, %c12_198, %c0_199], %225 {strides = array<i32>} : memref<9x32x128xf32, #tpu.memory_space<vmem>>, vector<1x4x128xf32>,
    %c111_200 = arith.constant 111 : index
    %c0_201 = arith.constant 0 : index
    %226 = tpu.strided_load %arg11[%c111_200, %c0_201] {strides = array<i32: 2, 1>} : memref<200x128xf32, #tpu.memory_space<vmem>>, vector<4x128xf32>
    %c4_202 = arith.constant 4 : index
    %c16_203 = arith.constant 16 : index
    %c0_204 = arith.constant 0 : index
    %227 = vector.load %arg13[%c4_202, %c16_203, %c0_204] : memref<9x32x128xf32, #tpu.memory_space<vmem>>, vector<1x4x128xf32>
    %228 = vector.shape_cast %227 : vector<1x4x128xf32> to vector<4x128xf32>
    %229 = vector.shape_cast %226 : vector<4x128xf32> to vector<1x4x128xf32>
    tpu.vector_store %arg13[%c4_202, %c16_203, %c0_204], %229 {strides = array<i32>} : memref<9x32x128xf32, #tpu.memory_space<vmem>>, vector<1x4x128xf32>,
    %c131_205 = arith.constant 131 : index
    %c0_206 = arith.constant 0 : index
    %230 = tpu.strided_load %arg11[%c131_205, %c0_206] {strides = array<i32: 2, 1>} : memref<200x128xf32, #tpu.memory_space<vmem>>, vector<4x128xf32>
    %c4_207 = arith.constant 4 : index
    %c20_208 = arith.constant 20 : index
    %c0_209 = arith.constant 0 : index
    %231 = vector.load %arg13[%c4_207, %c20_208, %c0_209] : memref<9x32x128xf32, #tpu.memory_space<vmem>>, vector<1x4x128xf32>
    %232 = vector.shape_cast %231 : vector<1x4x128xf32> to vector<4x128xf32>
    %233 = vector.shape_cast %230 : vector<4x128xf32> to vector<1x4x128xf32>
    tpu.vector_store %arg13[%c4_207, %c20_208, %c0_209], %233 {strides = array<i32>} : memref<9x32x128xf32, #tpu.memory_space<vmem>>, vector<1x4x128xf32>,
    %c151_210 = arith.constant 151 : index
    %c0_211 = arith.constant 0 : index
    %234 = tpu.strided_load %arg11[%c151_210, %c0_211] {strides = array<i32: 2, 1>} : memref<200x128xf32, #tpu.memory_space<vmem>>, vector<4x128xf32>
    %c4_212 = arith.constant 4 : index
    %c24_213 = arith.constant 24 : index
    %c0_214 = arith.constant 0 : index
    %235 = vector.load %arg13[%c4_212, %c24_213, %c0_214] : memref<9x32x128xf32, #tpu.memory_space<vmem>>, vector<1x4x128xf32>
    %236 = vector.shape_cast %235 : vector<1x4x128xf32> to vector<4x128xf32>
    %237 = vector.shape_cast %234 : vector<4x128xf32> to vector<1x4x128xf32>
    tpu.vector_store %arg13[%c4_212, %c24_213, %c0_214], %237 {strides = array<i32>} : memref<9x32x128xf32, #tpu.memory_space<vmem>>, vector<1x4x128xf32>,
    %c171_215 = arith.constant 171 : index
    %c0_216 = arith.constant 0 : index
    %238 = tpu.strided_load %arg11[%c171_215, %c0_216] {strides = array<i32: 2, 1>} : memref<200x128xf32, #tpu.memory_space<vmem>>, vector<4x128xf32>
    %c4_217 = arith.constant 4 : index
    %c28_218 = arith.constant 28 : index
    %c0_219 = arith.constant 0 : index
    %239 = vector.load %arg13[%c4_217, %c28_218, %c0_219] : memref<9x32x128xf32, #tpu.memory_space<vmem>>, vector<1x4x128xf32>
    %240 = vector.shape_cast %239 : vector<1x4x128xf32> to vector<4x128xf32>
    %241 = vector.shape_cast %238 : vector<4x128xf32> to vector<1x4x128xf32>
    tpu.vector_store %arg13[%c4_217, %c28_218, %c0_219], %241 {strides = array<i32>} : memref<9x32x128xf32, #tpu.memory_space<vmem>>, vector<1x4x128xf32>,
    %c12_220 = arith.constant 12 : index
    %c0_221 = arith.constant 0 : index
    %242 = tpu.strided_load %arg11[%c12_220, %c0_221] {strides = array<i32: 2, 1>} : memref<200x128xf32, #tpu.memory_space<vmem>>, vector<4x128xf32>
    %c5 = arith.constant 5 : index
    %c0_222 = arith.constant 0 : index
    %c0_223 = arith.constant 0 : index
    %243 = vector.load %arg13[%c5, %c0_222, %c0_223] : memref<9x32x128xf32, #tpu.memory_space<vmem>>, vector<1x4x128xf32>
    %244 = vector.shape_cast %243 : vector<1x4x128xf32> to vector<4x128xf32>
    %245 = vector.shape_cast %242 : vector<4x128xf32> to vector<1x4x128xf32>
    tpu.vector_store %arg13[%c5, %c0_222, %c0_223], %245 {strides = array<i32>} : memref<9x32x128xf32, #tpu.memory_space<vmem>>, vector<1x4x128xf32>,
    %c32 = arith.constant 32 : index
    %c0_224 = arith.constant 0 : index
    %246 = tpu.strided_load %arg11[%c32, %c0_224] {strides = array<i32: 2, 1>} : memref<200x128xf32, #tpu.memory_space<vmem>>, vector<4x128xf32>
    %c5_225 = arith.constant 5 : index
    %c4_226 = arith.constant 4 : index
    %c0_227 = arith.constant 0 : index
    %247 = vector.load %arg13[%c5_225, %c4_226, %c0_227] : memref<9x32x128xf32, #tpu.memory_space<vmem>>, vector<1x4x128xf32>
    %248 = vector.shape_cast %247 : vector<1x4x128xf32> to vector<4x128xf32>
    %249 = vector.shape_cast %246 : vector<4x128xf32> to vector<1x4x128xf32>
    tpu.vector_store %arg13[%c5_225, %c4_226, %c0_227], %249 {strides = array<i32>} : memref<9x32x128xf32, #tpu.memory_space<vmem>>, vector<1x4x128xf32>,
    %c52 = arith.constant 52 : index
    %c0_228 = arith.constant 0 : index
    %250 = tpu.strided_load %arg11[%c52, %c0_228] {strides = array<i32: 2, 1>} : memref<200x128xf32, #tpu.memory_space<vmem>>, vector<4x128xf32>
    %c5_229 = arith.constant 5 : index
    %c8_230 = arith.constant 8 : index
    %c0_231 = arith.constant 0 : index
    %251 = vector.load %arg13[%c5_229, %c8_230, %c0_231] : memref<9x32x128xf32, #tpu.memory_space<vmem>>, vector<1x4x128xf32>
    %252 = vector.shape_cast %251 : vector<1x4x128xf32> to vector<4x128xf32>
    %253 = vector.shape_cast %250 : vector<4x128xf32> to vector<1x4x128xf32>
    tpu.vector_store %arg13[%c5_229, %c8_230, %c0_231], %253 {strides = array<i32>} : memref<9x32x128xf32, #tpu.memory_space<vmem>>, vector<1x4x128xf32>,
    %c72 = arith.constant 72 : index
    %c0_232 = arith.constant 0 : index
    %254 = tpu.strided_load %arg11[%c72, %c0_232] {strides = array<i32: 2, 1>} : memref<200x128xf32, #tpu.memory_space<vmem>>, vector<4x128xf32>
    %c5_233 = arith.constant 5 : index
    %c12_234 = arith.constant 12 : index
    %c0_235 = arith.constant 0 : index
    %255 = vector.load %arg13[%c5_233, %c12_234, %c0_235] : memref<9x32x128xf32, #tpu.memory_space<vmem>>, vector<1x4x128xf32>
    %256 = vector.shape_cast %255 : vector<1x4x128xf32> to vector<4x128xf32>
    %257 = vector.shape_cast %254 : vector<4x128xf32> to vector<1x4x128xf32>
    tpu.vector_store %arg13[%c5_233, %c12_234, %c0_235], %257 {strides = array<i32>} : memref<9x32x128xf32, #tpu.memory_space<vmem>>, vector<1x4x128xf32>,
    %c112 = arith.constant 112 : index
    %c0_236 = arith.constant 0 : index
    %258 = tpu.strided_load %arg11[%c112, %c0_236] {strides = array<i32: 2, 1>} : memref<200x128xf32, #tpu.memory_space<vmem>>, vector<4x128xf32>
    %c5_237 = arith.constant 5 : index
    %c16_238 = arith.constant 16 : index
    %c0_239 = arith.constant 0 : index
    %259 = vector.load %arg13[%c5_237, %c16_238, %c0_239] : memref<9x32x128xf32, #tpu.memory_space<vmem>>, vector<1x4x128xf32>
    %260 = vector.shape_cast %259 : vector<1x4x128xf32> to vector<4x128xf32>
    %261 = vector.shape_cast %258 : vector<4x128xf32> to vector<1x4x128xf32>
    tpu.vector_store %arg13[%c5_237, %c16_238, %c0_239], %261 {strides = array<i32>} : memref<9x32x128xf32, #tpu.memory_space<vmem>>, vector<1x4x128xf32>,
    %c132 = arith.constant 132 : index
    %c0_240 = arith.constant 0 : index
    %262 = tpu.strided_load %arg11[%c132, %c0_240] {strides = array<i32: 2, 1>} : memref<200x128xf32, #tpu.memory_space<vmem>>, vector<4x128xf32>
    %c5_241 = arith.constant 5 : index
    %c20_242 = arith.constant 20 : index
    %c0_243 = arith.constant 0 : index
    %263 = vector.load %arg13[%c5_241, %c20_242, %c0_243] : memref<9x32x128xf32, #tpu.memory_space<vmem>>, vector<1x4x128xf32>
    %264 = vector.shape_cast %263 : vector<1x4x128xf32> to vector<4x128xf32>
    %265 = vector.shape_cast %262 : vector<4x128xf32> to vector<1x4x128xf32>
    tpu.vector_store %arg13[%c5_241, %c20_242, %c0_243], %265 {strides = array<i32>} : memref<9x32x128xf32, #tpu.memory_space<vmem>>, vector<1x4x128xf32>,
    %c152 = arith.constant 152 : index
    %c0_244 = arith.constant 0 : index
    %266 = tpu.strided_load %arg11[%c152, %c0_244] {strides = array<i32: 2, 1>} : memref<200x128xf32, #tpu.memory_space<vmem>>, vector<4x128xf32>
    %c5_245 = arith.constant 5 : index
    %c24_246 = arith.constant 24 : index
    %c0_247 = arith.constant 0 : index
    %267 = vector.load %arg13[%c5_245, %c24_246, %c0_247] : memref<9x32x128xf32, #tpu.memory_space<vmem>>, vector<1x4x128xf32>
    %268 = vector.shape_cast %267 : vector<1x4x128xf32> to vector<4x128xf32>
    %269 = vector.shape_cast %266 : vector<4x128xf32> to vector<1x4x128xf32>
    tpu.vector_store %arg13[%c5_245, %c24_246, %c0_247], %269 {strides = array<i32>} : memref<9x32x128xf32, #tpu.memory_space<vmem>>, vector<1x4x128xf32>,
    %c172 = arith.constant 172 : index
    %c0_248 = arith.constant 0 : index
    %270 = tpu.strided_load %arg11[%c172, %c0_248] {strides = array<i32: 2, 1>} : memref<200x128xf32, #tpu.memory_space<vmem>>, vector<4x128xf32>
    %c5_249 = arith.constant 5 : index
    %c28_250 = arith.constant 28 : index
    %c0_251 = arith.constant 0 : index
    %271 = vector.load %arg13[%c5_249, %c28_250, %c0_251] : memref<9x32x128xf32, #tpu.memory_space<vmem>>, vector<1x4x128xf32>
    %272 = vector.shape_cast %271 : vector<1x4x128xf32> to vector<4x128xf32>
    %273 = vector.shape_cast %270 : vector<4x128xf32> to vector<1x4x128xf32>
    tpu.vector_store %arg13[%c5_249, %c28_250, %c0_251], %273 {strides = array<i32>} : memref<9x32x128xf32, #tpu.memory_space<vmem>>, vector<1x4x128xf32>,
    %c20_252 = arith.constant 20 : index
    %c0_253 = arith.constant 0 : index
    %274 = tpu.strided_load %arg11[%c20_252, %c0_253] {strides = array<i32: 2, 1>} : memref<200x128xf32, #tpu.memory_space<vmem>>, vector<4x128xf32>
    %c6 = arith.constant 6 : index
    %c0_254 = arith.constant 0 : index
    %c0_255 = arith.constant 0 : index
    %275 = vector.load %arg13[%c6, %c0_254, %c0_255] : memref<9x32x128xf32, #tpu.memory_space<vmem>>, vector<1x4x128xf32>
    %276 = vector.shape_cast %275 : vector<1x4x128xf32> to vector<4x128xf32>
    %277 = vector.shape_cast %274 : vector<4x128xf32> to vector<1x4x128xf32>
    tpu.vector_store %arg13[%c6, %c0_254, %c0_255], %277 {strides = array<i32>} : memref<9x32x128xf32, #tpu.memory_space<vmem>>, vector<1x4x128xf32>,
    %c40_256 = arith.constant 40 : index
    %c0_257 = arith.constant 0 : index
    %278 = tpu.strided_load %arg11[%c40_256, %c0_257] {strides = array<i32: 2, 1>} : memref<200x128xf32, #tpu.memory_space<vmem>>, vector<4x128xf32>
    %c6_258 = arith.constant 6 : index
    %c4_259 = arith.constant 4 : index
    %c0_260 = arith.constant 0 : index
    %279 = vector.load %arg13[%c6_258, %c4_259, %c0_260] : memref<9x32x128xf32, #tpu.memory_space<vmem>>, vector<1x4x128xf32>
    %280 = vector.shape_cast %279 : vector<1x4x128xf32> to vector<4x128xf32>
    %281 = vector.shape_cast %278 : vector<4x128xf32> to vector<1x4x128xf32>
    tpu.vector_store %arg13[%c6_258, %c4_259, %c0_260], %281 {strides = array<i32>} : memref<9x32x128xf32, #tpu.memory_space<vmem>>, vector<1x4x128xf32>,
    %c60_261 = arith.constant 60 : index
    %c0_262 = arith.constant 0 : index
    %282 = tpu.strided_load %arg11[%c60_261, %c0_262] {strides = array<i32: 2, 1>} : memref<200x128xf32, #tpu.memory_space<vmem>>, vector<4x128xf32>
    %c6_263 = arith.constant 6 : index
    %c8_264 = arith.constant 8 : index
    %c0_265 = arith.constant 0 : index
    %283 = vector.load %arg13[%c6_263, %c8_264, %c0_265] : memref<9x32x128xf32, #tpu.memory_space<vmem>>, vector<1x4x128xf32>
    %284 = vector.shape_cast %283 : vector<1x4x128xf32> to vector<4x128xf32>
    %285 = vector.shape_cast %282 : vector<4x128xf32> to vector<1x4x128xf32>
    tpu.vector_store %arg13[%c6_263, %c8_264, %c0_265], %285 {strides = array<i32>} : memref<9x32x128xf32, #tpu.memory_space<vmem>>, vector<1x4x128xf32>,
    %c80 = arith.constant 80 : index
    %c0_266 = arith.constant 0 : index
    %286 = tpu.strided_load %arg11[%c80, %c0_266] {strides = array<i32: 2, 1>} : memref<200x128xf32, #tpu.memory_space<vmem>>, vector<4x128xf32>
    %c6_267 = arith.constant 6 : index
    %c12_268 = arith.constant 12 : index
    %c0_269 = arith.constant 0 : index
    %287 = vector.load %arg13[%c6_267, %c12_268, %c0_269] : memref<9x32x128xf32, #tpu.memory_space<vmem>>, vector<1x4x128xf32>
    %288 = vector.shape_cast %287 : vector<1x4x128xf32> to vector<4x128xf32>
    %289 = vector.shape_cast %286 : vector<4x128xf32> to vector<1x4x128xf32>
    tpu.vector_store %arg13[%c6_267, %c12_268, %c0_269], %289 {strides = array<i32>} : memref<9x32x128xf32, #tpu.memory_space<vmem>>, vector<1x4x128xf32>,
    %c120_270 = arith.constant 120 : index
    %c0_271 = arith.constant 0 : index
    %290 = tpu.strided_load %arg11[%c120_270, %c0_271] {strides = array<i32: 2, 1>} : memref<200x128xf32, #tpu.memory_space<vmem>>, vector<4x128xf32>
    %c6_272 = arith.constant 6 : index
    %c16_273 = arith.constant 16 : index
    %c0_274 = arith.constant 0 : index
    %291 = vector.load %arg13[%c6_272, %c16_273, %c0_274] : memref<9x32x128xf32, #tpu.memory_space<vmem>>, vector<1x4x128xf32>
    %292 = vector.shape_cast %291 : vector<1x4x128xf32> to vector<4x128xf32>
    %293 = vector.shape_cast %290 : vector<4x128xf32> to vector<1x4x128xf32>
    tpu.vector_store %arg13[%c6_272, %c16_273, %c0_274], %293 {strides = array<i32>} : memref<9x32x128xf32, #tpu.memory_space<vmem>>, vector<1x4x128xf32>,
    %c140_275 = arith.constant 140 : index
    %c0_276 = arith.constant 0 : index
    %294 = tpu.strided_load %arg11[%c140_275, %c0_276] {strides = array<i32: 2, 1>} : memref<200x128xf32, #tpu.memory_space<vmem>>, vector<4x128xf32>
    %c6_277 = arith.constant 6 : index
    %c20_278 = arith.constant 20 : index
    %c0_279 = arith.constant 0 : index
    %295 = vector.load %arg13[%c6_277, %c20_278, %c0_279] : memref<9x32x128xf32, #tpu.memory_space<vmem>>, vector<1x4x128xf32>
    %296 = vector.shape_cast %295 : vector<1x4x128xf32> to vector<4x128xf32>
    %297 = vector.shape_cast %294 : vector<4x128xf32> to vector<1x4x128xf32>
    tpu.vector_store %arg13[%c6_277, %c20_278, %c0_279], %297 {strides = array<i32>} : memref<9x32x128xf32, #tpu.memory_space<vmem>>, vector<1x4x128xf32>,
    %c160_280 = arith.constant 160 : index
    %c0_281 = arith.constant 0 : index
    %298 = tpu.strided_load %arg11[%c160_280, %c0_281] {strides = array<i32: 2, 1>} : memref<200x128xf32, #tpu.memory_space<vmem>>, vector<4x128xf32>
    %c6_282 = arith.constant 6 : index
    %c24_283 = arith.constant 24 : index
    %c0_284 = arith.constant 0 : index
    %299 = vector.load %arg13[%c6_282, %c24_283, %c0_284] : memref<9x32x128xf32, #tpu.memory_space<vmem>>, vector<1x4x128xf32>
    %300 = vector.shape_cast %299 : vector<1x4x128xf32> to vector<4x128xf32>
    %301 = vector.shape_cast %298 : vector<4x128xf32> to vector<1x4x128xf32>
    tpu.vector_store %arg13[%c6_282, %c24_283, %c0_284], %301 {strides = array<i32>} : memref<9x32x128xf32, #tpu.memory_space<vmem>>, vector<1x4x128xf32>,
    %c180 = arith.constant 180 : index
    %c0_285 = arith.constant 0 : index
    %302 = tpu.strided_load %arg11[%c180, %c0_285] {strides = array<i32: 2, 1>} : memref<200x128xf32, #tpu.memory_space<vmem>>, vector<4x128xf32>
    %c6_286 = arith.constant 6 : index
    %c28_287 = arith.constant 28 : index
    %c0_288 = arith.constant 0 : index
    %303 = vector.load %arg13[%c6_286, %c28_287, %c0_288] : memref<9x32x128xf32, #tpu.memory_space<vmem>>, vector<1x4x128xf32>
    %304 = vector.shape_cast %303 : vector<1x4x128xf32> to vector<4x128xf32>
    %305 = vector.shape_cast %302 : vector<4x128xf32> to vector<1x4x128xf32>
    tpu.vector_store %arg13[%c6_286, %c28_287, %c0_288], %305 {strides = array<i32>} : memref<9x32x128xf32, #tpu.memory_space<vmem>>, vector<1x4x128xf32>,
    %c21_289 = arith.constant 21 : index
    %c0_290 = arith.constant 0 : index
    %306 = tpu.strided_load %arg11[%c21_289, %c0_290] {strides = array<i32: 2, 1>} : memref<200x128xf32, #tpu.memory_space<vmem>>, vector<4x128xf32>
    %c7 = arith.constant 7 : index
    %c0_291 = arith.constant 0 : index
    %c0_292 = arith.constant 0 : index
    %307 = vector.load %arg13[%c7, %c0_291, %c0_292] : memref<9x32x128xf32, #tpu.memory_space<vmem>>, vector<1x4x128xf32>
    %308 = vector.shape_cast %307 : vector<1x4x128xf32> to vector<4x128xf32>
    %309 = vector.shape_cast %306 : vector<4x128xf32> to vector<1x4x128xf32>
    tpu.vector_store %arg13[%c7, %c0_291, %c0_292], %309 {strides = array<i32>} : memref<9x32x128xf32, #tpu.memory_space<vmem>>, vector<1x4x128xf32>,
    %c41_293 = arith.constant 41 : index
    %c0_294 = arith.constant 0 : index
    %310 = tpu.strided_load %arg11[%c41_293, %c0_294] {strides = array<i32: 2, 1>} : memref<200x128xf32, #tpu.memory_space<vmem>>, vector<4x128xf32>
    %c7_295 = arith.constant 7 : index
    %c4_296 = arith.constant 4 : index
    %c0_297 = arith.constant 0 : index
    %311 = vector.load %arg13[%c7_295, %c4_296, %c0_297] : memref<9x32x128xf32, #tpu.memory_space<vmem>>, vector<1x4x128xf32>
    %312 = vector.shape_cast %311 : vector<1x4x128xf32> to vector<4x128xf32>
    %313 = vector.shape_cast %310 : vector<4x128xf32> to vector<1x4x128xf32>
    tpu.vector_store %arg13[%c7_295, %c4_296, %c0_297], %313 {strides = array<i32>} : memref<9x32x128xf32, #tpu.memory_space<vmem>>, vector<1x4x128xf32>,
    %c61_298 = arith.constant 61 : index
    %c0_299 = arith.constant 0 : index
    %314 = tpu.strided_load %arg11[%c61_298, %c0_299] {strides = array<i32: 2, 1>} : memref<200x128xf32, #tpu.memory_space<vmem>>, vector<4x128xf32>
    %c7_300 = arith.constant 7 : index
    %c8_301 = arith.constant 8 : index
    %c0_302 = arith.constant 0 : index
    %315 = vector.load %arg13[%c7_300, %c8_301, %c0_302] : memref<9x32x128xf32, #tpu.memory_space<vmem>>, vector<1x4x128xf32>
    %316 = vector.shape_cast %315 : vector<1x4x128xf32> to vector<4x128xf32>
    %317 = vector.shape_cast %314 : vector<4x128xf32> to vector<1x4x128xf32>
    tpu.vector_store %arg13[%c7_300, %c8_301, %c0_302], %317 {strides = array<i32>} : memref<9x32x128xf32, #tpu.memory_space<vmem>>, vector<1x4x128xf32>,
    %c81_303 = arith.constant 81 : index
    %c0_304 = arith.constant 0 : index
    %318 = tpu.strided_load %arg11[%c81_303, %c0_304] {strides = array<i32: 2, 1>} : memref<200x128xf32, #tpu.memory_space<vmem>>, vector<4x128xf32>
    %c7_305 = arith.constant 7 : index
    %c12_306 = arith.constant 12 : index
    %c0_307 = arith.constant 0 : index
    %319 = vector.load %arg13[%c7_305, %c12_306, %c0_307] : memref<9x32x128xf32, #tpu.memory_space<vmem>>, vector<1x4x128xf32>
    %320 = vector.shape_cast %319 : vector<1x4x128xf32> to vector<4x128xf32>
    %321 = vector.shape_cast %318 : vector<4x128xf32> to vector<1x4x128xf32>
    tpu.vector_store %arg13[%c7_305, %c12_306, %c0_307], %321 {strides = array<i32>} : memref<9x32x128xf32, #tpu.memory_space<vmem>>, vector<1x4x128xf32>,
    %c121_308 = arith.constant 121 : index
    %c0_309 = arith.constant 0 : index
    %322 = tpu.strided_load %arg11[%c121_308, %c0_309] {strides = array<i32: 2, 1>} : memref<200x128xf32, #tpu.memory_space<vmem>>, vector<4x128xf32>
    %c7_310 = arith.constant 7 : index
    %c16_311 = arith.constant 16 : index
    %c0_312 = arith.constant 0 : index
    %323 = vector.load %arg13[%c7_310, %c16_311, %c0_312] : memref<9x32x128xf32, #tpu.memory_space<vmem>>, vector<1x4x128xf32>
    %324 = vector.shape_cast %323 : vector<1x4x128xf32> to vector<4x128xf32>
    %325 = vector.shape_cast %322 : vector<4x128xf32> to vector<1x4x128xf32>
    tpu.vector_store %arg13[%c7_310, %c16_311, %c0_312], %325 {strides = array<i32>} : memref<9x32x128xf32, #tpu.memory_space<vmem>>, vector<1x4x128xf32>,
    %c141_313 = arith.constant 141 : index
    %c0_314 = arith.constant 0 : index
    %326 = tpu.strided_load %arg11[%c141_313, %c0_314] {strides = array<i32: 2, 1>} : memref<200x128xf32, #tpu.memory_space<vmem>>, vector<4x128xf32>
    %c7_315 = arith.constant 7 : index
    %c20_316 = arith.constant 20 : index
    %c0_317 = arith.constant 0 : index
    %327 = vector.load %arg13[%c7_315, %c20_316, %c0_317] : memref<9x32x128xf32, #tpu.memory_space<vmem>>, vector<1x4x128xf32>
    %328 = vector.shape_cast %327 : vector<1x4x128xf32> to vector<4x128xf32>
    %329 = vector.shape_cast %326 : vector<4x128xf32> to vector<1x4x128xf32>
    tpu.vector_store %arg13[%c7_315, %c20_316, %c0_317], %329 {strides = array<i32>} : memref<9x32x128xf32, #tpu.memory_space<vmem>>, vector<1x4x128xf32>,
    %c161_318 = arith.constant 161 : index
    %c0_319 = arith.constant 0 : index
    %330 = tpu.strided_load %arg11[%c161_318, %c0_319] {strides = array<i32: 2, 1>} : memref<200x128xf32, #tpu.memory_space<vmem>>, vector<4x128xf32>
    %c7_320 = arith.constant 7 : index
    %c24_321 = arith.constant 24 : index
    %c0_322 = arith.constant 0 : index
    %331 = vector.load %arg13[%c7_320, %c24_321, %c0_322] : memref<9x32x128xf32, #tpu.memory_space<vmem>>, vector<1x4x128xf32>
    %332 = vector.shape_cast %331 : vector<1x4x128xf32> to vector<4x128xf32>
    %333 = vector.shape_cast %330 : vector<4x128xf32> to vector<1x4x128xf32>
    tpu.vector_store %arg13[%c7_320, %c24_321, %c0_322], %333 {strides = array<i32>} : memref<9x32x128xf32, #tpu.memory_space<vmem>>, vector<1x4x128xf32>,
    %c181_323 = arith.constant 181 : index
    %c0_324 = arith.constant 0 : index
    %334 = tpu.strided_load %arg11[%c181_323, %c0_324] {strides = array<i32: 2, 1>} : memref<200x128xf32, #tpu.memory_space<vmem>>, vector<4x128xf32>
    %c7_325 = arith.constant 7 : index
    %c28_326 = arith.constant 28 : index
    %c0_327 = arith.constant 0 : index
    %335 = vector.load %arg13[%c7_325, %c28_326, %c0_327] : memref<9x32x128xf32, #tpu.memory_space<vmem>>, vector<1x4x128xf32>
    %336 = vector.shape_cast %335 : vector<1x4x128xf32> to vector<4x128xf32>
    %337 = vector.shape_cast %334 : vector<4x128xf32> to vector<1x4x128xf32>
    tpu.vector_store %arg13[%c7_325, %c28_326, %c0_327], %337 {strides = array<i32>} : memref<9x32x128xf32, #tpu.memory_space<vmem>>, vector<1x4x128xf32>,
    %c22_328 = arith.constant 22 : index
    %c0_329 = arith.constant 0 : index
    %338 = tpu.strided_load %arg11[%c22_328, %c0_329] {strides = array<i32: 2, 1>} : memref<200x128xf32, #tpu.memory_space<vmem>>, vector<4x128xf32>
    %c8_330 = arith.constant 8 : index
    %c0_331 = arith.constant 0 : index
    %c0_332 = arith.constant 0 : index
    %339 = vector.load %arg13[%c8_330, %c0_331, %c0_332] : memref<9x32x128xf32, #tpu.memory_space<vmem>>, vector<1x4x128xf32>
    %340 = vector.shape_cast %339 : vector<1x4x128xf32> to vector<4x128xf32>
    %341 = vector.shape_cast %338 : vector<4x128xf32> to vector<1x4x128xf32>
    tpu.vector_store %arg13[%c8_330, %c0_331, %c0_332], %341 {strides = array<i32>} : memref<9x32x128xf32, #tpu.memory_space<vmem>>, vector<1x4x128xf32>,
    %c42_333 = arith.constant 42 : index
    %c0_334 = arith.constant 0 : index
    %342 = tpu.strided_load %arg11[%c42_333, %c0_334] {strides = array<i32: 2, 1>} : memref<200x128xf32, #tpu.memory_space<vmem>>, vector<4x128xf32>
    %c8_335 = arith.constant 8 : index
    %c4_336 = arith.constant 4 : index
    %c0_337 = arith.constant 0 : index
    %343 = vector.load %arg13[%c8_335, %c4_336, %c0_337] : memref<9x32x128xf32, #tpu.memory_space<vmem>>, vector<1x4x128xf32>
    %344 = vector.shape_cast %343 : vector<1x4x128xf32> to vector<4x128xf32>
    %345 = vector.shape_cast %342 : vector<4x128xf32> to vector<1x4x128xf32>
    tpu.vector_store %arg13[%c8_335, %c4_336, %c0_337], %345 {strides = array<i32>} : memref<9x32x128xf32, #tpu.memory_space<vmem>>, vector<1x4x128xf32>,
    %c62_338 = arith.constant 62 : index
    %c0_339 = arith.constant 0 : index
    %346 = tpu.strided_load %arg11[%c62_338, %c0_339] {strides = array<i32: 2, 1>} : memref<200x128xf32, #tpu.memory_space<vmem>>, vector<4x128xf32>
    %c8_340 = arith.constant 8 : index
    %c8_341 = arith.constant 8 : index
    %c0_342 = arith.constant 0 : index
    %347 = vector.load %arg13[%c8_340, %c8_341, %c0_342] : memref<9x32x128xf32, #tpu.memory_space<vmem>>, vector<1x4x128xf32>
    %348 = vector.shape_cast %347 : vector<1x4x128xf32> to vector<4x128xf32>
    %349 = vector.shape_cast %346 : vector<4x128xf32> to vector<1x4x128xf32>
    tpu.vector_store %arg13[%c8_340, %c8_341, %c0_342], %349 {strides = array<i32>} : memref<9x32x128xf32, #tpu.memory_space<vmem>>, vector<1x4x128xf32>,
    %c82 = arith.constant 82 : index
    %c0_343 = arith.constant 0 : index
    %350 = tpu.strided_load %arg11[%c82, %c0_343] {strides = array<i32: 2, 1>} : memref<200x128xf32, #tpu.memory_space<vmem>>, vector<4x128xf32>
    %c8_344 = arith.constant 8 : index
    %c12_345 = arith.constant 12 : index
    %c0_346 = arith.constant 0 : index
    %351 = vector.load %arg13[%c8_344, %c12_345, %c0_346] : memref<9x32x128xf32, #tpu.memory_space<vmem>>, vector<1x4x128xf32>
    %352 = vector.shape_cast %351 : vector<1x4x128xf32> to vector<4x128xf32>
    %353 = vector.shape_cast %350 : vector<4x128xf32> to vector<1x4x128xf32>
    tpu.vector_store %arg13[%c8_344, %c12_345, %c0_346], %353 {strides = array<i32>} : memref<9x32x128xf32, #tpu.memory_space<vmem>>, vector<1x4x128xf32>,
    %c122_347 = arith.constant 122 : index
    %c0_348 = arith.constant 0 : index
    %354 = tpu.strided_load %arg11[%c122_347, %c0_348] {strides = array<i32: 2, 1>} : memref<200x128xf32, #tpu.memory_space<vmem>>, vector<4x128xf32>
    %c8_349 = arith.constant 8 : index
    %c16_350 = arith.constant 16 : index
    %c0_351 = arith.constant 0 : index
    %355 = vector.load %arg13[%c8_349, %c16_350, %c0_351] : memref<9x32x128xf32, #tpu.memory_space<vmem>>, vector<1x4x128xf32>
    %356 = vector.shape_cast %355 : vector<1x4x128xf32> to vector<4x128xf32>
    %357 = vector.shape_cast %354 : vector<4x128xf32> to vector<1x4x128xf32>
    tpu.vector_store %arg13[%c8_349, %c16_350, %c0_351], %357 {strides = array<i32>} : memref<9x32x128xf32, #tpu.memory_space<vmem>>, vector<1x4x128xf32>,
    %c142_352 = arith.constant 142 : index
    %c0_353 = arith.constant 0 : index
    %358 = tpu.strided_load %arg11[%c142_352, %c0_353] {strides = array<i32: 2, 1>} : memref<200x128xf32, #tpu.memory_space<vmem>>, vector<4x128xf32>
    %c8_354 = arith.constant 8 : index
    %c20_355 = arith.constant 20 : index
    %c0_356 = arith.constant 0 : index
    %359 = vector.load %arg13[%c8_354, %c20_355, %c0_356] : memref<9x32x128xf32, #tpu.memory_space<vmem>>, vector<1x4x128xf32>
    %360 = vector.shape_cast %359 : vector<1x4x128xf32> to vector<4x128xf32>
    %361 = vector.shape_cast %358 : vector<4x128xf32> to vector<1x4x128xf32>
    tpu.vector_store %arg13[%c8_354, %c20_355, %c0_356], %361 {strides = array<i32>} : memref<9x32x128xf32, #tpu.memory_space<vmem>>, vector<1x4x128xf32>,
    %c162_357 = arith.constant 162 : index
    %c0_358 = arith.constant 0 : index
    %362 = tpu.strided_load %arg11[%c162_357, %c0_358] {strides = array<i32: 2, 1>} : memref<200x128xf32, #tpu.memory_space<vmem>>, vector<4x128xf32>
    %c8_359 = arith.constant 8 : index
    %c24_360 = arith.constant 24 : index
    %c0_361 = arith.constant 0 : index
    %363 = vector.load %arg13[%c8_359, %c24_360, %c0_361] : memref<9x32x128xf32, #tpu.memory_space<vmem>>, vector<1x4x128xf32>
    %364 = vector.shape_cast %363 : vector<1x4x128xf32> to vector<4x128xf32>
    %365 = vector.shape_cast %362 : vector<4x128xf32> to vector<1x4x128xf32>
    tpu.vector_store %arg13[%c8_359, %c24_360, %c0_361], %365 {strides = array<i32>} : memref<9x32x128xf32, #tpu.memory_space<vmem>>, vector<1x4x128xf32>,
    %c182 = arith.constant 182 : index
    %c0_362 = arith.constant 0 : index
    %366 = tpu.strided_load %arg11[%c182, %c0_362] {strides = array<i32: 2, 1>} : memref<200x128xf32, #tpu.memory_space<vmem>>, vector<4x128xf32>
    %c8_363 = arith.constant 8 : index
    %c28_364 = arith.constant 28 : index
    %c0_365 = arith.constant 0 : index
    %367 = vector.load %arg13[%c8_363, %c28_364, %c0_365] : memref<9x32x128xf32, #tpu.memory_space<vmem>>, vector<1x4x128xf32>
    %368 = vector.shape_cast %367 : vector<1x4x128xf32> to vector<4x128xf32>
    %369 = vector.shape_cast %366 : vector<4x128xf32> to vector<1x4x128xf32>
    tpu.vector_store %arg13[%c8_363, %c28_364, %c0_365], %369 {strides = array<i32>} : memref<9x32x128xf32, #tpu.memory_space<vmem>>, vector<1x4x128xf32>,
    %c0_366 = arith.constant 0 : index
    %c0_367 = arith.constant 0 : index
    %c0_368 = arith.constant 0 : index
    %370 = vector.load %arg13[%c0_366, %c0_367, %c0_368] : memref<9x32x128xf32, #tpu.memory_space<vmem>>, vector<1x32x128xf32>
    %371 = vector.shape_cast %370 : vector<1x32x128xf32> to vector<32x128xf32>
    %c0_369 = arith.constant 0 : index
    %c0_370 = arith.constant 0 : index
    %c0_371 = arith.constant 0 : index
    %372 = vector.load %arg4[%c0_369, %c0_370, %c0_371] : memref<9x128x128xf32, #tpu.memory_space<vmem>>, vector<1x128x128xf32>
    %373 = vector.shape_cast %372 : vector<1x128x128xf32> to vector<128x128xf32>
    %cst_372 = arith.constant dense<0.000000e+00> : vector<32x128xf32>
    %374 = tpu.matmul %371, %373, %cst_372 {dimension_numbers = #tpu.dot_dimension_numbers<[1], [0], [0], [1], [0, 0, 1, 1], [], []>} : vector<32x128xf32>, vector<128x128xf32>, vector<32x128xf32> -> vector<32x128xf32>
    %c1_373 = arith.constant 1 : index
    %c0_374 = arith.constant 0 : index
    %c0_375 = arith.constant 0 : index
    %375 = vector.load %arg13[%c1_373, %c0_374, %c0_375] : memref<9x32x128xf32, #tpu.memory_space<vmem>>, vector<1x32x128xf32>
    %376 = vector.shape_cast %375 : vector<1x32x128xf32> to vector<32x128xf32>
    %c1_376 = arith.constant 1 : index
    %c0_377 = arith.constant 0 : index
    %c0_378 = arith.constant 0 : index
    %377 = vector.load %arg4[%c1_376, %c0_377, %c0_378] : memref<9x128x128xf32, #tpu.memory_space<vmem>>, vector<1x128x128xf32>
    %378 = vector.shape_cast %377 : vector<1x128x128xf32> to vector<128x128xf32>
    %cst_379 = arith.constant dense<0.000000e+00> : vector<32x128xf32>
    %379 = tpu.matmul %376, %378, %cst_379 {dimension_numbers = #tpu.dot_dimension_numbers<[1], [0], [0], [1], [0, 0, 1, 1], [], []>} : vector<32x128xf32>, vector<128x128xf32>, vector<32x128xf32> -> vector<32x128xf32>
    %380 = arith.addf %374, %379 : vector<32x128xf32>
    %c2_380 = arith.constant 2 : index
    %c0_381 = arith.constant 0 : index
    %c0_382 = arith.constant 0 : index
    %381 = vector.load %arg13[%c2_380, %c0_381, %c0_382] : memref<9x32x128xf32, #tpu.memory_space<vmem>>, vector<1x32x128xf32>
    %382 = vector.shape_cast %381 : vector<1x32x128xf32> to vector<32x128xf32>
    %c2_383 = arith.constant 2 : index
    %c0_384 = arith.constant 0 : index
    %c0_385 = arith.constant 0 : index
    %383 = vector.load %arg4[%c2_383, %c0_384, %c0_385] : memref<9x128x128xf32, #tpu.memory_space<vmem>>, vector<1x128x128xf32>
    %384 = vector.shape_cast %383 : vector<1x128x128xf32> to vector<128x128xf32>
    %cst_386 = arith.constant dense<0.000000e+00> : vector<32x128xf32>
    %385 = tpu.matmul %382, %384, %cst_386 {dimension_numbers = #tpu.dot_dimension_numbers<[1], [0], [0], [1], [0, 0, 1, 1], [], []>} : vector<32x128xf32>, vector<128x128xf32>, vector<32x128xf32> -> vector<32x128xf32>
    %386 = arith.addf %380, %385 : vector<32x128xf32>
    %c3_387 = arith.constant 3 : index
    %c0_388 = arith.constant 0 : index
    %c0_389 = arith.constant 0 : index
    %387 = vector.load %arg13[%c3_387, %c0_388, %c0_389] : memref<9x32x128xf32, #tpu.memory_space<vmem>>, vector<1x32x128xf32>
    %388 = vector.shape_cast %387 : vector<1x32x128xf32> to vector<32x128xf32>
    %c3_390 = arith.constant 3 : index
    %c0_391 = arith.constant 0 : index
    %c0_392 = arith.constant 0 : index
    %389 = vector.load %arg4[%c3_390, %c0_391, %c0_392] : memref<9x128x128xf32, #tpu.memory_space<vmem>>, vector<1x128x128xf32>
    %390 = vector.shape_cast %389 : vector<1x128x128xf32> to vector<128x128xf32>
    %cst_393 = arith.constant dense<0.000000e+00> : vector<32x128xf32>
    %391 = tpu.matmul %388, %390, %cst_393 {dimension_numbers = #tpu.dot_dimension_numbers<[1], [0], [0], [1], [0, 0, 1, 1], [], []>} : vector<32x128xf32>, vector<128x128xf32>, vector<32x128xf32> -> vector<32x128xf32>
    %392 = arith.addf %386, %391 : vector<32x128xf32>
    %c4_394 = arith.constant 4 : index
    %c0_395 = arith.constant 0 : index
    %c0_396 = arith.constant 0 : index
    %393 = vector.load %arg13[%c4_394, %c0_395, %c0_396] : memref<9x32x128xf32, #tpu.memory_space<vmem>>, vector<1x32x128xf32>
    %394 = vector.shape_cast %393 : vector<1x32x128xf32> to vector<32x128xf32>
    %c4_397 = arith.constant 4 : index
    %c0_398 = arith.constant 0 : index
    %c0_399 = arith.constant 0 : index
    %395 = vector.load %arg4[%c4_397, %c0_398, %c0_399] : memref<9x128x128xf32, #tpu.memory_space<vmem>>, vector<1x128x128xf32>
    %396 = vector.shape_cast %395 : vector<1x128x128xf32> to vector<128x128xf32>
    %cst_400 = arith.constant dense<0.000000e+00> : vector<32x128xf32>
    %397 = tpu.matmul %394, %396, %cst_400 {dimension_numbers = #tpu.dot_dimension_numbers<[1], [0], [0], [1], [0, 0, 1, 1], [], []>} : vector<32x128xf32>, vector<128x128xf32>, vector<32x128xf32> -> vector<32x128xf32>
    %398 = arith.addf %392, %397 : vector<32x128xf32>
    %c5_401 = arith.constant 5 : index
    %c0_402 = arith.constant 0 : index
    %c0_403 = arith.constant 0 : index
    %399 = vector.load %arg13[%c5_401, %c0_402, %c0_403] : memref<9x32x128xf32, #tpu.memory_space<vmem>>, vector<1x32x128xf32>
    %400 = vector.shape_cast %399 : vector<1x32x128xf32> to vector<32x128xf32>
    %c5_404 = arith.constant 5 : index
    %c0_405 = arith.constant 0 : index
    %c0_406 = arith.constant 0 : index
    %401 = vector.load %arg4[%c5_404, %c0_405, %c0_406] : memref<9x128x128xf32, #tpu.memory_space<vmem>>, vector<1x128x128xf32>
    %402 = vector.shape_cast %401 : vector<1x128x128xf32> to vector<128x128xf32>
    %cst_407 = arith.constant dense<0.000000e+00> : vector<32x128xf32>
    %403 = tpu.matmul %400, %402, %cst_407 {dimension_numbers = #tpu.dot_dimension_numbers<[1], [0], [0], [1], [0, 0, 1, 1], [], []>} : vector<32x128xf32>, vector<128x128xf32>, vector<32x128xf32> -> vector<32x128xf32>
    %404 = arith.addf %398, %403 : vector<32x128xf32>
    %c6_408 = arith.constant 6 : index
    %c0_409 = arith.constant 0 : index
    %c0_410 = arith.constant 0 : index
    %405 = vector.load %arg13[%c6_408, %c0_409, %c0_410] : memref<9x32x128xf32, #tpu.memory_space<vmem>>, vector<1x32x128xf32>
    %406 = vector.shape_cast %405 : vector<1x32x128xf32> to vector<32x128xf32>
    %c6_411 = arith.constant 6 : index
    %c0_412 = arith.constant 0 : index
    %c0_413 = arith.constant 0 : index
    %407 = vector.load %arg4[%c6_411, %c0_412, %c0_413] : memref<9x128x128xf32, #tpu.memory_space<vmem>>, vector<1x128x128xf32>
    %408 = vector.shape_cast %407 : vector<1x128x128xf32> to vector<128x128xf32>
    %cst_414 = arith.constant dense<0.000000e+00> : vector<32x128xf32>
    %409 = tpu.matmul %406, %408, %cst_414 {dimension_numbers = #tpu.dot_dimension_numbers<[1], [0], [0], [1], [0, 0, 1, 1], [], []>} : vector<32x128xf32>, vector<128x128xf32>, vector<32x128xf32> -> vector<32x128xf32>
    %410 = arith.addf %404, %409 : vector<32x128xf32>
    %c7_415 = arith.constant 7 : index
    %c0_416 = arith.constant 0 : index
    %c0_417 = arith.constant 0 : index
    %411 = vector.load %arg13[%c7_415, %c0_416, %c0_417] : memref<9x32x128xf32, #tpu.memory_space<vmem>>, vector<1x32x128xf32>
    %412 = vector.shape_cast %411 : vector<1x32x128xf32> to vector<32x128xf32>
    %c7_418 = arith.constant 7 : index
    %c0_419 = arith.constant 0 : index
    %c0_420 = arith.constant 0 : index
    %413 = vector.load %arg4[%c7_418, %c0_419, %c0_420] : memref<9x128x128xf32, #tpu.memory_space<vmem>>, vector<1x128x128xf32>
    %414 = vector.shape_cast %413 : vector<1x128x128xf32> to vector<128x128xf32>
    %cst_421 = arith.constant dense<0.000000e+00> : vector<32x128xf32>
    %415 = tpu.matmul %412, %414, %cst_421 {dimension_numbers = #tpu.dot_dimension_numbers<[1], [0], [0], [1], [0, 0, 1, 1], [], []>} : vector<32x128xf32>, vector<128x128xf32>, vector<32x128xf32> -> vector<32x128xf32>
    %416 = arith.addf %410, %415 : vector<32x128xf32>
    %c8_422 = arith.constant 8 : index
    %c0_423 = arith.constant 0 : index
    %c0_424 = arith.constant 0 : index
    %417 = vector.load %arg13[%c8_422, %c0_423, %c0_424] : memref<9x32x128xf32, #tpu.memory_space<vmem>>, vector<1x32x128xf32>
    %418 = vector.shape_cast %417 : vector<1x32x128xf32> to vector<32x128xf32>
    %c8_425 = arith.constant 8 : index
    %c0_426 = arith.constant 0 : index
    %c0_427 = arith.constant 0 : index
    %419 = vector.load %arg4[%c8_425, %c0_426, %c0_427] : memref<9x128x128xf32, #tpu.memory_space<vmem>>, vector<1x128x128xf32>
    %420 = vector.shape_cast %419 : vector<1x128x128xf32> to vector<128x128xf32>
    %cst_428 = arith.constant dense<0.000000e+00> : vector<32x128xf32>
    %421 = tpu.matmul %418, %420, %cst_428 {dimension_numbers = #tpu.dot_dimension_numbers<[1], [0], [0], [1], [0, 0, 1, 1], [], []>} : vector<32x128xf32>, vector<128x128xf32>, vector<32x128xf32> -> vector<32x128xf32>
    %422 = arith.addf %416, %421 : vector<32x128xf32>
    %cst_429 = arith.constant dense<0.000000e+00> : vector<128xf32>
    %423 = vector.multi_reduction <add>, %422, %cst_429 [0] : vector<32x128xf32> to vector<128xf32>
    %424 = vector.shape_cast %423 : vector<128xf32> to vector<1x128xf32>
    %425 = arith.mulf %422, %422 : vector<32x128xf32>
    %cst_430 = arith.constant dense<0.000000e+00> : vector<128xf32>
    %426 = vector.multi_reduction <add>, %425, %cst_430 [0] : vector<32x128xf32> to vector<128xf32>
    %427 = vector.shape_cast %426 : vector<128xf32> to vector<1x128xf32>
    %cst_431 = arith.constant 3.125000e-02 : f32
    %428 = vector.broadcast %cst_431 : f32 to vector<1x128xf32>
    %429 = arith.mulf %424, %428 : vector<1x128xf32>
    %cst_432 = arith.constant 3.125000e-02 : f32
    %430 = vector.broadcast %cst_432 : f32 to vector<1x128xf32>
    %431 = arith.mulf %427, %430 : vector<1x128xf32>
    %432 = arith.mulf %429, %429 : vector<1x128xf32>
    %433 = arith.subf %431, %432 : vector<1x128xf32>
    %cst_433 = arith.constant 0.000000e+00 : f32
    %434 = vector.broadcast %cst_433 : f32 to vector<1x128xf32>
    %435 = arith.maximumf %433, %434 : vector<1x128xf32>
    %cst_434 = arith.constant 9.99999974E-6 : f32
    %436 = vector.broadcast %cst_434 : f32 to vector<1x128xf32>
    %437 = arith.addf %435, %436 : vector<1x128xf32>
    %438 = math.rsqrt %437 : vector<1x128xf32>
    %c0_435 = arith.constant 0 : index
    %c0_436 = arith.constant 0 : index
    %439 = vector.load %arg5[%c0_435, %c0_436] : memref<1x128xf32, #tpu.memory_space<vmem>>, vector<1x128xf32>
    %440 = arith.mulf %438, %439 : vector<1x128xf32>
    %441 = vector.broadcast %429 : vector<1x128xf32> to vector<32x128xf32>
    %442 = arith.subf %422, %441 : vector<32x128xf32>
    %443 = vector.broadcast %440 : vector<1x128xf32> to vector<32x128xf32>
    %444 = arith.mulf %442, %443 : vector<32x128xf32>
    %c0_437 = arith.constant 0 : index
    %c0_438 = arith.constant 0 : index
    %445 = vector.load %arg6[%c0_437, %c0_438] : memref<1x128xf32, #tpu.memory_space<vmem>>, vector<1x128xf32>
    %446 = vector.broadcast %445 : vector<1x128xf32> to vector<32x128xf32>
    %447 = arith.addf %444, %446 : vector<32x128xf32>
    %cst_439 = arith.constant 0.000000e+00 : f32
    %448 = vector.broadcast %cst_439 : f32 to vector<32x128xf32>
    %449 = arith.maximumf %447, %448 : vector<32x128xf32>
    %cst_440 = arith.constant 0.000000e+00 : f32
    %450 = vector.broadcast %cst_440 : f32 to vector<7x128xf32>
    %cst_441 = arith.constant 0.000000e+00 : f32
    %451 = vector.broadcast %cst_441 : f32 to vector<2x128xf32>
    %c0_442 = arith.constant 0 : index
    %c0_443 = arith.constant 0 : index
    %452 = vector.load %arg12[%c0_442, %c0_443] : memref<72x128xf32, #tpu.memory_space<vmem>>, vector<7x128xf32>
    tpu.vector_store %arg12[%c0_442, %c0_443], %450 {strides = array<i32>} : memref<72x128xf32, #tpu.memory_space<vmem>>, vector<7x128xf32>,
    %c11_444 = arith.constant 11 : index
    %c0_445 = arith.constant 0 : index
    %453 = vector.load %arg12[%c11_444, %c0_445] : memref<72x128xf32, #tpu.memory_space<vmem>>, vector<2x128xf32>
    tpu.vector_store %arg12[%c11_444, %c0_445], %451 {strides = array<i32>} : memref<72x128xf32, #tpu.memory_space<vmem>>, vector<2x128xf32>,
    %c17 = arith.constant 17 : index
    %c0_446 = arith.constant 0 : index
    %454 = vector.load %arg12[%c17, %c0_446] : memref<72x128xf32, #tpu.memory_space<vmem>>, vector<2x128xf32>
    tpu.vector_store %arg12[%c17, %c0_446], %451 {strides = array<i32>} : memref<72x128xf32, #tpu.memory_space<vmem>>, vector<2x128xf32>,
    %c23 = arith.constant 23 : index
    %c0_447 = arith.constant 0 : index
    %455 = vector.load %arg12[%c23, %c0_447] : memref<72x128xf32, #tpu.memory_space<vmem>>, vector<2x128xf32>
    tpu.vector_store %arg12[%c23, %c0_447], %451 {strides = array<i32>} : memref<72x128xf32, #tpu.memory_space<vmem>>, vector<2x128xf32>,
    %c29_448 = arith.constant 29 : index
    %c0_449 = arith.constant 0 : index
    %456 = vector.load %arg12[%c29_448, %c0_449] : memref<72x128xf32, #tpu.memory_space<vmem>>, vector<7x128xf32>
    tpu.vector_store %arg12[%c29_448, %c0_449], %450 {strides = array<i32>} : memref<72x128xf32, #tpu.memory_space<vmem>>, vector<7x128xf32>,
    %c36 = arith.constant 36 : index
    %c0_450 = arith.constant 0 : index
    %457 = vector.load %arg12[%c36, %c0_450] : memref<72x128xf32, #tpu.memory_space<vmem>>, vector<7x128xf32>
    tpu.vector_store %arg12[%c36, %c0_450], %450 {strides = array<i32>} : memref<72x128xf32, #tpu.memory_space<vmem>>, vector<7x128xf32>,
    %c47 = arith.constant 47 : index
    %c0_451 = arith.constant 0 : index
    %458 = vector.load %arg12[%c47, %c0_451] : memref<72x128xf32, #tpu.memory_space<vmem>>, vector<2x128xf32>
    tpu.vector_store %arg12[%c47, %c0_451], %451 {strides = array<i32>} : memref<72x128xf32, #tpu.memory_space<vmem>>, vector<2x128xf32>,
    %c53 = arith.constant 53 : index
    %c0_452 = arith.constant 0 : index
    %459 = vector.load %arg12[%c53, %c0_452] : memref<72x128xf32, #tpu.memory_space<vmem>>, vector<2x128xf32>
    tpu.vector_store %arg12[%c53, %c0_452], %451 {strides = array<i32>} : memref<72x128xf32, #tpu.memory_space<vmem>>, vector<2x128xf32>,
    %c59_453 = arith.constant 59 : index
    %c0_454 = arith.constant 0 : index
    %460 = vector.load %arg12[%c59_453, %c0_454] : memref<72x128xf32, #tpu.memory_space<vmem>>, vector<2x128xf32>
    tpu.vector_store %arg12[%c59_453, %c0_454], %451 {strides = array<i32>} : memref<72x128xf32, #tpu.memory_space<vmem>>, vector<2x128xf32>,
    %c65 = arith.constant 65 : index
    %c0_455 = arith.constant 0 : index
    %461 = vector.load %arg12[%c65, %c0_455] : memref<72x128xf32, #tpu.memory_space<vmem>>, vector<7x128xf32>
    tpu.vector_store %arg12[%c65, %c0_455], %450 {strides = array<i32>} : memref<72x128xf32, #tpu.memory_space<vmem>>, vector<7x128xf32>,
    %462 = vector.extract_strided_slice %449 {offsets = [0, 0], sizes = [4, 128], strides = [1, 1]} : vector<32x128xf32> to vector<4x128xf32>
    %c7_456 = arith.constant 7 : index
    %c0_457 = arith.constant 0 : index
    %463 = vector.load %arg12[%c7_456, %c0_457] : memref<72x128xf32, #tpu.memory_space<vmem>>, vector<4x128xf32>
    tpu.vector_store %arg12[%c7_456, %c0_457], %462 {strides = array<i32>} : memref<72x128xf32, #tpu.memory_space<vmem>>, vector<4x128xf32>,
    %464 = vector.extract_strided_slice %449 {offsets = [4, 0], sizes = [4, 128], strides = [1, 1]} : vector<32x128xf32> to vector<4x128xf32>
    %c13 = arith.constant 13 : index
    %c0_458 = arith.constant 0 : index
    %465 = vector.load %arg12[%c13, %c0_458] : memref<72x128xf32, #tpu.memory_space<vmem>>, vector<4x128xf32>
    tpu.vector_store %arg12[%c13, %c0_458], %464 {strides = array<i32>} : memref<72x128xf32, #tpu.memory_space<vmem>>, vector<4x128xf32>,
    %466 = vector.extract_strided_slice %449 {offsets = [8, 0], sizes = [4, 128], strides = [1, 1]} : vector<32x128xf32> to vector<4x128xf32>
    %c19_459 = arith.constant 19 : index
    %c0_460 = arith.constant 0 : index
    %467 = vector.load %arg12[%c19_459, %c0_460] : memref<72x128xf32, #tpu.memory_space<vmem>>, vector<4x128xf32>
    tpu.vector_store %arg12[%c19_459, %c0_460], %466 {strides = array<i32>} : memref<72x128xf32, #tpu.memory_space<vmem>>, vector<4x128xf32>,
    %468 = vector.extract_strided_slice %449 {offsets = [12, 0], sizes = [4, 128], strides = [1, 1]} : vector<32x128xf32> to vector<4x128xf32>
    %c25 = arith.constant 25 : index
    %c0_461 = arith.constant 0 : index
    %469 = vector.load %arg12[%c25, %c0_461] : memref<72x128xf32, #tpu.memory_space<vmem>>, vector<4x128xf32>
    tpu.vector_store %arg12[%c25, %c0_461], %468 {strides = array<i32>} : memref<72x128xf32, #tpu.memory_space<vmem>>, vector<4x128xf32>,
    %470 = vector.extract_strided_slice %449 {offsets = [16, 0], sizes = [4, 128], strides = [1, 1]} : vector<32x128xf32> to vector<4x128xf32>
    %c43 = arith.constant 43 : index
    %c0_462 = arith.constant 0 : index
    %471 = vector.load %arg12[%c43, %c0_462] : memref<72x128xf32, #tpu.memory_space<vmem>>, vector<4x128xf32>
    tpu.vector_store %arg12[%c43, %c0_462], %470 {strides = array<i32>} : memref<72x128xf32, #tpu.memory_space<vmem>>, vector<4x128xf32>,
    %472 = vector.extract_strided_slice %449 {offsets = [20, 0], sizes = [4, 128], strides = [1, 1]} : vector<32x128xf32> to vector<4x128xf32>
    %c49_463 = arith.constant 49 : index
    %c0_464 = arith.constant 0 : index
    %473 = vector.load %arg12[%c49_463, %c0_464] : memref<72x128xf32, #tpu.memory_space<vmem>>, vector<4x128xf32>
    tpu.vector_store %arg12[%c49_463, %c0_464], %472 {strides = array<i32>} : memref<72x128xf32, #tpu.memory_space<vmem>>, vector<4x128xf32>,
    %474 = vector.extract_strided_slice %449 {offsets = [24, 0], sizes = [4, 128], strides = [1, 1]} : vector<32x128xf32> to vector<4x128xf32>
    %c55 = arith.constant 55 : index
    %c0_465 = arith.constant 0 : index
    %475 = vector.load %arg12[%c55, %c0_465] : memref<72x128xf32, #tpu.memory_space<vmem>>, vector<4x128xf32>
    tpu.vector_store %arg12[%c55, %c0_465], %474 {strides = array<i32>} : memref<72x128xf32, #tpu.memory_space<vmem>>, vector<4x128xf32>,
    %476 = vector.extract_strided_slice %449 {offsets = [28, 0], sizes = [4, 128], strides = [1, 1]} : vector<32x128xf32> to vector<4x128xf32>
    %c61_466 = arith.constant 61 : index
    %c0_467 = arith.constant 0 : index
    %477 = vector.load %arg12[%c61_466, %c0_467] : memref<72x128xf32, #tpu.memory_space<vmem>>, vector<4x128xf32>
    tpu.vector_store %arg12[%c61_466, %c0_467], %476 {strides = array<i32>} : memref<72x128xf32, #tpu.memory_space<vmem>>, vector<4x128xf32>,
    %c0_468 = arith.constant 0 : index
    %c0_469 = arith.constant 0 : index
    %478 = tpu.strided_load %arg12[%c0_468, %c0_469] {strides = array<i32: 2, 1>} : memref<72x128xf32, #tpu.memory_space<vmem>>, vector<2x128xf32>
    %c0_470 = arith.constant 0 : index
    %c0_471 = arith.constant 0 : index
    %c0_472 = arith.constant 0 : index
    %479 = vector.load %arg14[%c0_470, %c0_471, %c0_472] : memref<9x8x128xf32, #tpu.memory_space<vmem>>, vector<1x2x128xf32>
    %480 = vector.shape_cast %479 : vector<1x2x128xf32> to vector<2x128xf32>
    %481 = vector.shape_cast %478 : vector<2x128xf32> to vector<1x2x128xf32>
    tpu.vector_store %arg14[%c0_470, %c0_471, %c0_472], %481 {strides = array<i32>} : memref<9x8x128xf32, #tpu.memory_space<vmem>>, vector<1x2x128xf32>,
    %c12_473 = arith.constant 12 : index
    %c0_474 = arith.constant 0 : index
    %482 = tpu.strided_load %arg12[%c12_473, %c0_474] {strides = array<i32: 2, 1>} : memref<72x128xf32, #tpu.memory_space<vmem>>, vector<2x128xf32>
    %c0_475 = arith.constant 0 : index
    %c2_476 = arith.constant 2 : index
    %c0_477 = arith.constant 0 : index
    %483 = vector.load %arg14[%c0_475, %c2_476, %c0_477] : memref<9x8x128xf32, #tpu.memory_space<vmem>>, vector<1x2x128xf32>
    %484 = vector.shape_cast %483 : vector<1x2x128xf32> to vector<2x128xf32>
    %485 = vector.shape_cast %482 : vector<2x128xf32> to vector<1x2x128xf32>
    tpu.vector_store %arg14[%c0_475, %c2_476, %c0_477], %485 {strides = array<i32>} : memref<9x8x128xf32, #tpu.memory_space<vmem>>, vector<1x2x128xf32>,
    %c36_478 = arith.constant 36 : index
    %c0_479 = arith.constant 0 : index
    %486 = tpu.strided_load %arg12[%c36_478, %c0_479] {strides = array<i32: 2, 1>} : memref<72x128xf32, #tpu.memory_space<vmem>>, vector<2x128xf32>
    %c0_480 = arith.constant 0 : index
    %c4_481 = arith.constant 4 : index
    %c0_482 = arith.constant 0 : index
    %487 = vector.load %arg14[%c0_480, %c4_481, %c0_482] : memref<9x8x128xf32, #tpu.memory_space<vmem>>, vector<1x2x128xf32>
    %488 = vector.shape_cast %487 : vector<1x2x128xf32> to vector<2x128xf32>
    %489 = vector.shape_cast %486 : vector<2x128xf32> to vector<1x2x128xf32>
    tpu.vector_store %arg14[%c0_480, %c4_481, %c0_482], %489 {strides = array<i32>} : memref<9x8x128xf32, #tpu.memory_space<vmem>>, vector<1x2x128xf32>,
    %c48 = arith.constant 48 : index
    %c0_483 = arith.constant 0 : index
    %490 = tpu.strided_load %arg12[%c48, %c0_483] {strides = array<i32: 2, 1>} : memref<72x128xf32, #tpu.memory_space<vmem>>, vector<2x128xf32>
    %c0_484 = arith.constant 0 : index
    %c6_485 = arith.constant 6 : index
    %c0_486 = arith.constant 0 : index
    %491 = vector.load %arg14[%c0_484, %c6_485, %c0_486] : memref<9x8x128xf32, #tpu.memory_space<vmem>>, vector<1x2x128xf32>
    %492 = vector.shape_cast %491 : vector<1x2x128xf32> to vector<2x128xf32>
    %493 = vector.shape_cast %490 : vector<2x128xf32> to vector<1x2x128xf32>
    tpu.vector_store %arg14[%c0_484, %c6_485, %c0_486], %493 {strides = array<i32>} : memref<9x8x128xf32, #tpu.memory_space<vmem>>, vector<1x2x128xf32>,
    %c1_487 = arith.constant 1 : index
    %c0_488 = arith.constant 0 : index
    %494 = tpu.strided_load %arg12[%c1_487, %c0_488] {strides = array<i32: 2, 1>} : memref<72x128xf32, #tpu.memory_space<vmem>>, vector<2x128xf32>
    %c1_489 = arith.constant 1 : index
    %c0_490 = arith.constant 0 : index
    %c0_491 = arith.constant 0 : index
    %495 = vector.load %arg14[%c1_489, %c0_490, %c0_491] : memref<9x8x128xf32, #tpu.memory_space<vmem>>, vector<1x2x128xf32>
    %496 = vector.shape_cast %495 : vector<1x2x128xf32> to vector<2x128xf32>
    %497 = vector.shape_cast %494 : vector<2x128xf32> to vector<1x2x128xf32>
    tpu.vector_store %arg14[%c1_489, %c0_490, %c0_491], %497 {strides = array<i32>} : memref<9x8x128xf32, #tpu.memory_space<vmem>>, vector<1x2x128xf32>,
    %c13_492 = arith.constant 13 : index
    %c0_493 = arith.constant 0 : index
    %498 = tpu.strided_load %arg12[%c13_492, %c0_493] {strides = array<i32: 2, 1>} : memref<72x128xf32, #tpu.memory_space<vmem>>, vector<2x128xf32>
    %c1_494 = arith.constant 1 : index
    %c2_495 = arith.constant 2 : index
    %c0_496 = arith.constant 0 : index
    %499 = vector.load %arg14[%c1_494, %c2_495, %c0_496] : memref<9x8x128xf32, #tpu.memory_space<vmem>>, vector<1x2x128xf32>
    %500 = vector.shape_cast %499 : vector<1x2x128xf32> to vector<2x128xf32>
    %501 = vector.shape_cast %498 : vector<2x128xf32> to vector<1x2x128xf32>
    tpu.vector_store %arg14[%c1_494, %c2_495, %c0_496], %501 {strides = array<i32>} : memref<9x8x128xf32, #tpu.memory_space<vmem>>, vector<1x2x128xf32>,
    %c37 = arith.constant 37 : index
    %c0_497 = arith.constant 0 : index
    %502 = tpu.strided_load %arg12[%c37, %c0_497] {strides = array<i32: 2, 1>} : memref<72x128xf32, #tpu.memory_space<vmem>>, vector<2x128xf32>
    %c1_498 = arith.constant 1 : index
    %c4_499 = arith.constant 4 : index
    %c0_500 = arith.constant 0 : index
    %503 = vector.load %arg14[%c1_498, %c4_499, %c0_500] : memref<9x8x128xf32, #tpu.memory_space<vmem>>, vector<1x2x128xf32>
    %504 = vector.shape_cast %503 : vector<1x2x128xf32> to vector<2x128xf32>
    %505 = vector.shape_cast %502 : vector<2x128xf32> to vector<1x2x128xf32>
    tpu.vector_store %arg14[%c1_498, %c4_499, %c0_500], %505 {strides = array<i32>} : memref<9x8x128xf32, #tpu.memory_space<vmem>>, vector<1x2x128xf32>,
    %c49_501 = arith.constant 49 : index
    %c0_502 = arith.constant 0 : index
    %506 = tpu.strided_load %arg12[%c49_501, %c0_502] {strides = array<i32: 2, 1>} : memref<72x128xf32, #tpu.memory_space<vmem>>, vector<2x128xf32>
    %c1_503 = arith.constant 1 : index
    %c6_504 = arith.constant 6 : index
    %c0_505 = arith.constant 0 : index
    %507 = vector.load %arg14[%c1_503, %c6_504, %c0_505] : memref<9x8x128xf32, #tpu.memory_space<vmem>>, vector<1x2x128xf32>
    %508 = vector.shape_cast %507 : vector<1x2x128xf32> to vector<2x128xf32>
    %509 = vector.shape_cast %506 : vector<2x128xf32> to vector<1x2x128xf32>
    tpu.vector_store %arg14[%c1_503, %c6_504, %c0_505], %509 {strides = array<i32>} : memref<9x8x128xf32, #tpu.memory_space<vmem>>, vector<1x2x128xf32>,
    %c2_506 = arith.constant 2 : index
    %c0_507 = arith.constant 0 : index
    %510 = tpu.strided_load %arg12[%c2_506, %c0_507] {strides = array<i32: 2, 1>} : memref<72x128xf32, #tpu.memory_space<vmem>>, vector<2x128xf32>
    %c2_508 = arith.constant 2 : index
    %c0_509 = arith.constant 0 : index
    %c0_510 = arith.constant 0 : index
    %511 = vector.load %arg14[%c2_508, %c0_509, %c0_510] : memref<9x8x128xf32, #tpu.memory_space<vmem>>, vector<1x2x128xf32>
    %512 = vector.shape_cast %511 : vector<1x2x128xf32> to vector<2x128xf32>
    %513 = vector.shape_cast %510 : vector<2x128xf32> to vector<1x2x128xf32>
    tpu.vector_store %arg14[%c2_508, %c0_509, %c0_510], %513 {strides = array<i32>} : memref<9x8x128xf32, #tpu.memory_space<vmem>>, vector<1x2x128xf32>,
    %c14 = arith.constant 14 : index
    %c0_511 = arith.constant 0 : index
    %514 = tpu.strided_load %arg12[%c14, %c0_511] {strides = array<i32: 2, 1>} : memref<72x128xf32, #tpu.memory_space<vmem>>, vector<2x128xf32>
    %c2_512 = arith.constant 2 : index
    %c2_513 = arith.constant 2 : index
    %c0_514 = arith.constant 0 : index
    %515 = vector.load %arg14[%c2_512, %c2_513, %c0_514] : memref<9x8x128xf32, #tpu.memory_space<vmem>>, vector<1x2x128xf32>
    %516 = vector.shape_cast %515 : vector<1x2x128xf32> to vector<2x128xf32>
    %517 = vector.shape_cast %514 : vector<2x128xf32> to vector<1x2x128xf32>
    tpu.vector_store %arg14[%c2_512, %c2_513, %c0_514], %517 {strides = array<i32>} : memref<9x8x128xf32, #tpu.memory_space<vmem>>, vector<1x2x128xf32>,
    %c38 = arith.constant 38 : index
    %c0_515 = arith.constant 0 : index
    %518 = tpu.strided_load %arg12[%c38, %c0_515] {strides = array<i32: 2, 1>} : memref<72x128xf32, #tpu.memory_space<vmem>>, vector<2x128xf32>
    %c2_516 = arith.constant 2 : index
    %c4_517 = arith.constant 4 : index
    %c0_518 = arith.constant 0 : index
    %519 = vector.load %arg14[%c2_516, %c4_517, %c0_518] : memref<9x8x128xf32, #tpu.memory_space<vmem>>, vector<1x2x128xf32>
    %520 = vector.shape_cast %519 : vector<1x2x128xf32> to vector<2x128xf32>
    %521 = vector.shape_cast %518 : vector<2x128xf32> to vector<1x2x128xf32>
    tpu.vector_store %arg14[%c2_516, %c4_517, %c0_518], %521 {strides = array<i32>} : memref<9x8x128xf32, #tpu.memory_space<vmem>>, vector<1x2x128xf32>,
    %c50_519 = arith.constant 50 : index
    %c0_520 = arith.constant 0 : index
    %522 = tpu.strided_load %arg12[%c50_519, %c0_520] {strides = array<i32: 2, 1>} : memref<72x128xf32, #tpu.memory_space<vmem>>, vector<2x128xf32>
    %c2_521 = arith.constant 2 : index
    %c6_522 = arith.constant 6 : index
    %c0_523 = arith.constant 0 : index
    %523 = vector.load %arg14[%c2_521, %c6_522, %c0_523] : memref<9x8x128xf32, #tpu.memory_space<vmem>>, vector<1x2x128xf32>
    %524 = vector.shape_cast %523 : vector<1x2x128xf32> to vector<2x128xf32>
    %525 = vector.shape_cast %522 : vector<2x128xf32> to vector<1x2x128xf32>
    tpu.vector_store %arg14[%c2_521, %c6_522, %c0_523], %525 {strides = array<i32>} : memref<9x8x128xf32, #tpu.memory_space<vmem>>, vector<1x2x128xf32>,
    %c6_524 = arith.constant 6 : index
    %c0_525 = arith.constant 0 : index
    %526 = tpu.strided_load %arg12[%c6_524, %c0_525] {strides = array<i32: 2, 1>} : memref<72x128xf32, #tpu.memory_space<vmem>>, vector<2x128xf32>
    %c3_526 = arith.constant 3 : index
    %c0_527 = arith.constant 0 : index
    %c0_528 = arith.constant 0 : index
    %527 = vector.load %arg14[%c3_526, %c0_527, %c0_528] : memref<9x8x128xf32, #tpu.memory_space<vmem>>, vector<1x2x128xf32>
    %528 = vector.shape_cast %527 : vector<1x2x128xf32> to vector<2x128xf32>
    %529 = vector.shape_cast %526 : vector<2x128xf32> to vector<1x2x128xf32>
    tpu.vector_store %arg14[%c3_526, %c0_527, %c0_528], %529 {strides = array<i32>} : memref<9x8x128xf32, #tpu.memory_space<vmem>>, vector<1x2x128xf32>,
    %c18 = arith.constant 18 : index
    %c0_529 = arith.constant 0 : index
    %530 = tpu.strided_load %arg12[%c18, %c0_529] {strides = array<i32: 2, 1>} : memref<72x128xf32, #tpu.memory_space<vmem>>, vector<2x128xf32>
    %c3_530 = arith.constant 3 : index
    %c2_531 = arith.constant 2 : index
    %c0_532 = arith.constant 0 : index
    %531 = vector.load %arg14[%c3_530, %c2_531, %c0_532] : memref<9x8x128xf32, #tpu.memory_space<vmem>>, vector<1x2x128xf32>
    %532 = vector.shape_cast %531 : vector<1x2x128xf32> to vector<2x128xf32>
    %533 = vector.shape_cast %530 : vector<2x128xf32> to vector<1x2x128xf32>
    tpu.vector_store %arg14[%c3_530, %c2_531, %c0_532], %533 {strides = array<i32>} : memref<9x8x128xf32, #tpu.memory_space<vmem>>, vector<1x2x128xf32>,
    %c42_533 = arith.constant 42 : index
    %c0_534 = arith.constant 0 : index
    %534 = tpu.strided_load %arg12[%c42_533, %c0_534] {strides = array<i32: 2, 1>} : memref<72x128xf32, #tpu.memory_space<vmem>>, vector<2x128xf32>
    %c3_535 = arith.constant 3 : index
    %c4_536 = arith.constant 4 : index
    %c0_537 = arith.constant 0 : index
    %535 = vector.load %arg14[%c3_535, %c4_536, %c0_537] : memref<9x8x128xf32, #tpu.memory_space<vmem>>, vector<1x2x128xf32>
    %536 = vector.shape_cast %535 : vector<1x2x128xf32> to vector<2x128xf32>
    %537 = vector.shape_cast %534 : vector<2x128xf32> to vector<1x2x128xf32>
    tpu.vector_store %arg14[%c3_535, %c4_536, %c0_537], %537 {strides = array<i32>} : memref<9x8x128xf32, #tpu.memory_space<vmem>>, vector<1x2x128xf32>,
    %c54 = arith.constant 54 : index
    %c0_538 = arith.constant 0 : index
    %538 = tpu.strided_load %arg12[%c54, %c0_538] {strides = array<i32: 2, 1>} : memref<72x128xf32, #tpu.memory_space<vmem>>, vector<2x128xf32>
    %c3_539 = arith.constant 3 : index
    %c6_540 = arith.constant 6 : index
    %c0_541 = arith.constant 0 : index
    %539 = vector.load %arg14[%c3_539, %c6_540, %c0_541] : memref<9x8x128xf32, #tpu.memory_space<vmem>>, vector<1x2x128xf32>
    %540 = vector.shape_cast %539 : vector<1x2x128xf32> to vector<2x128xf32>
    %541 = vector.shape_cast %538 : vector<2x128xf32> to vector<1x2x128xf32>
    tpu.vector_store %arg14[%c3_539, %c6_540, %c0_541], %541 {strides = array<i32>} : memref<9x8x128xf32, #tpu.memory_space<vmem>>, vector<1x2x128xf32>,
    %c7_542 = arith.constant 7 : index
    %c0_543 = arith.constant 0 : index
    %542 = tpu.strided_load %arg12[%c7_542, %c0_543] {strides = array<i32: 2, 1>} : memref<72x128xf32, #tpu.memory_space<vmem>>, vector<2x128xf32>
    %c4_544 = arith.constant 4 : index
    %c0_545 = arith.constant 0 : index
    %c0_546 = arith.constant 0 : index
    %543 = vector.load %arg14[%c4_544, %c0_545, %c0_546] : memref<9x8x128xf32, #tpu.memory_space<vmem>>, vector<1x2x128xf32>
    %544 = vector.shape_cast %543 : vector<1x2x128xf32> to vector<2x128xf32>
    %545 = vector.shape_cast %542 : vector<2x128xf32> to vector<1x2x128xf32>
    tpu.vector_store %arg14[%c4_544, %c0_545, %c0_546], %545 {strides = array<i32>} : memref<9x8x128xf32, #tpu.memory_space<vmem>>, vector<1x2x128xf32>,
    %c19_547 = arith.constant 19 : index
    %c0_548 = arith.constant 0 : index
    %546 = tpu.strided_load %arg12[%c19_547, %c0_548] {strides = array<i32: 2, 1>} : memref<72x128xf32, #tpu.memory_space<vmem>>, vector<2x128xf32>
    %c4_549 = arith.constant 4 : index
    %c2_550 = arith.constant 2 : index
    %c0_551 = arith.constant 0 : index
    %547 = vector.load %arg14[%c4_549, %c2_550, %c0_551] : memref<9x8x128xf32, #tpu.memory_space<vmem>>, vector<1x2x128xf32>
    %548 = vector.shape_cast %547 : vector<1x2x128xf32> to vector<2x128xf32>
    %549 = vector.shape_cast %546 : vector<2x128xf32> to vector<1x2x128xf32>
    tpu.vector_store %arg14[%c4_549, %c2_550, %c0_551], %549 {strides = array<i32>} : memref<9x8x128xf32, #tpu.memory_space<vmem>>, vector<1x2x128xf32>,
    %c43_552 = arith.constant 43 : index
    %c0_553 = arith.constant 0 : index
    %550 = tpu.strided_load %arg12[%c43_552, %c0_553] {strides = array<i32: 2, 1>} : memref<72x128xf32, #tpu.memory_space<vmem>>, vector<2x128xf32>
    %c4_554 = arith.constant 4 : index
    %c4_555 = arith.constant 4 : index
    %c0_556 = arith.constant 0 : index
    %551 = vector.load %arg14[%c4_554, %c4_555, %c0_556] : memref<9x8x128xf32, #tpu.memory_space<vmem>>, vector<1x2x128xf32>
    %552 = vector.shape_cast %551 : vector<1x2x128xf32> to vector<2x128xf32>
    %553 = vector.shape_cast %550 : vector<2x128xf32> to vector<1x2x128xf32>
    tpu.vector_store %arg14[%c4_554, %c4_555, %c0_556], %553 {strides = array<i32>} : memref<9x8x128xf32, #tpu.memory_space<vmem>>, vector<1x2x128xf32>,
    %c55_557 = arith.constant 55 : index
    %c0_558 = arith.constant 0 : index
    %554 = tpu.strided_load %arg12[%c55_557, %c0_558] {strides = array<i32: 2, 1>} : memref<72x128xf32, #tpu.memory_space<vmem>>, vector<2x128xf32>
    %c4_559 = arith.constant 4 : index
    %c6_560 = arith.constant 6 : index
    %c0_561 = arith.constant 0 : index
    %555 = vector.load %arg14[%c4_559, %c6_560, %c0_561] : memref<9x8x128xf32, #tpu.memory_space<vmem>>, vector<1x2x128xf32>
    %556 = vector.shape_cast %555 : vector<1x2x128xf32> to vector<2x128xf32>
    %557 = vector.shape_cast %554 : vector<2x128xf32> to vector<1x2x128xf32>
    tpu.vector_store %arg14[%c4_559, %c6_560, %c0_561], %557 {strides = array<i32>} : memref<9x8x128xf32, #tpu.memory_space<vmem>>, vector<1x2x128xf32>,
    %c8_562 = arith.constant 8 : index
    %c0_563 = arith.constant 0 : index
    %558 = tpu.strided_load %arg12[%c8_562, %c0_563] {strides = array<i32: 2, 1>} : memref<72x128xf32, #tpu.memory_space<vmem>>, vector<2x128xf32>
    %c5_564 = arith.constant 5 : index
    %c0_565 = arith.constant 0 : index
    %c0_566 = arith.constant 0 : index
    %559 = vector.load %arg14[%c5_564, %c0_565, %c0_566] : memref<9x8x128xf32, #tpu.memory_space<vmem>>, vector<1x2x128xf32>
    %560 = vector.shape_cast %559 : vector<1x2x128xf32> to vector<2x128xf32>
    %561 = vector.shape_cast %558 : vector<2x128xf32> to vector<1x2x128xf32>
    tpu.vector_store %arg14[%c5_564, %c0_565, %c0_566], %561 {strides = array<i32>} : memref<9x8x128xf32, #tpu.memory_space<vmem>>, vector<1x2x128xf32>,
    %c20_567 = arith.constant 20 : index
    %c0_568 = arith.constant 0 : index
    %562 = tpu.strided_load %arg12[%c20_567, %c0_568] {strides = array<i32: 2, 1>} : memref<72x128xf32, #tpu.memory_space<vmem>>, vector<2x128xf32>
    %c5_569 = arith.constant 5 : index
    %c2_570 = arith.constant 2 : index
    %c0_571 = arith.constant 0 : index
    %563 = vector.load %arg14[%c5_569, %c2_570, %c0_571] : memref<9x8x128xf32, #tpu.memory_space<vmem>>, vector<1x2x128xf32>
    %564 = vector.shape_cast %563 : vector<1x2x128xf32> to vector<2x128xf32>
    %565 = vector.shape_cast %562 : vector<2x128xf32> to vector<1x2x128xf32>
    tpu.vector_store %arg14[%c5_569, %c2_570, %c0_571], %565 {strides = array<i32>} : memref<9x8x128xf32, #tpu.memory_space<vmem>>, vector<1x2x128xf32>,
    %c44 = arith.constant 44 : index
    %c0_572 = arith.constant 0 : index
    %566 = tpu.strided_load %arg12[%c44, %c0_572] {strides = array<i32: 2, 1>} : memref<72x128xf32, #tpu.memory_space<vmem>>, vector<2x128xf32>
    %c5_573 = arith.constant 5 : index
    %c4_574 = arith.constant 4 : index
    %c0_575 = arith.constant 0 : index
    %567 = vector.load %arg14[%c5_573, %c4_574, %c0_575] : memref<9x8x128xf32, #tpu.memory_space<vmem>>, vector<1x2x128xf32>
    %568 = vector.shape_cast %567 : vector<1x2x128xf32> to vector<2x128xf32>
    %569 = vector.shape_cast %566 : vector<2x128xf32> to vector<1x2x128xf32>
    tpu.vector_store %arg14[%c5_573, %c4_574, %c0_575], %569 {strides = array<i32>} : memref<9x8x128xf32, #tpu.memory_space<vmem>>, vector<1x2x128xf32>,
    %c56 = arith.constant 56 : index
    %c0_576 = arith.constant 0 : index
    %570 = tpu.strided_load %arg12[%c56, %c0_576] {strides = array<i32: 2, 1>} : memref<72x128xf32, #tpu.memory_space<vmem>>, vector<2x128xf32>
    %c5_577 = arith.constant 5 : index
    %c6_578 = arith.constant 6 : index
    %c0_579 = arith.constant 0 : index
    %571 = vector.load %arg14[%c5_577, %c6_578, %c0_579] : memref<9x8x128xf32, #tpu.memory_space<vmem>>, vector<1x2x128xf32>
    %572 = vector.shape_cast %571 : vector<1x2x128xf32> to vector<2x128xf32>
    %573 = vector.shape_cast %570 : vector<2x128xf32> to vector<1x2x128xf32>
    tpu.vector_store %arg14[%c5_577, %c6_578, %c0_579], %573 {strides = array<i32>} : memref<9x8x128xf32, #tpu.memory_space<vmem>>, vector<1x2x128xf32>,
    %c12_580 = arith.constant 12 : index
    %c0_581 = arith.constant 0 : index
    %574 = tpu.strided_load %arg12[%c12_580, %c0_581] {strides = array<i32: 2, 1>} : memref<72x128xf32, #tpu.memory_space<vmem>>, vector<2x128xf32>
    %c6_582 = arith.constant 6 : index
    %c0_583 = arith.constant 0 : index
    %c0_584 = arith.constant 0 : index
    %575 = vector.load %arg14[%c6_582, %c0_583, %c0_584] : memref<9x8x128xf32, #tpu.memory_space<vmem>>, vector<1x2x128xf32>
    %576 = vector.shape_cast %575 : vector<1x2x128xf32> to vector<2x128xf32>
    %577 = vector.shape_cast %574 : vector<2x128xf32> to vector<1x2x128xf32>
    tpu.vector_store %arg14[%c6_582, %c0_583, %c0_584], %577 {strides = array<i32>} : memref<9x8x128xf32, #tpu.memory_space<vmem>>, vector<1x2x128xf32>,
    %c24_585 = arith.constant 24 : index
    %c0_586 = arith.constant 0 : index
    %578 = tpu.strided_load %arg12[%c24_585, %c0_586] {strides = array<i32: 2, 1>} : memref<72x128xf32, #tpu.memory_space<vmem>>, vector<2x128xf32>
    %c6_587 = arith.constant 6 : index
    %c2_588 = arith.constant 2 : index
    %c0_589 = arith.constant 0 : index
    %579 = vector.load %arg14[%c6_587, %c2_588, %c0_589] : memref<9x8x128xf32, #tpu.memory_space<vmem>>, vector<1x2x128xf32>
    %580 = vector.shape_cast %579 : vector<1x2x128xf32> to vector<2x128xf32>
    %581 = vector.shape_cast %578 : vector<2x128xf32> to vector<1x2x128xf32>
    tpu.vector_store %arg14[%c6_587, %c2_588, %c0_589], %581 {strides = array<i32>} : memref<9x8x128xf32, #tpu.memory_space<vmem>>, vector<1x2x128xf32>,
    %c48_590 = arith.constant 48 : index
    %c0_591 = arith.constant 0 : index
    %582 = tpu.strided_load %arg12[%c48_590, %c0_591] {strides = array<i32: 2, 1>} : memref<72x128xf32, #tpu.memory_space<vmem>>, vector<2x128xf32>
    %c6_592 = arith.constant 6 : index
    %c4_593 = arith.constant 4 : index
    %c0_594 = arith.constant 0 : index
    %583 = vector.load %arg14[%c6_592, %c4_593, %c0_594] : memref<9x8x128xf32, #tpu.memory_space<vmem>>, vector<1x2x128xf32>
    %584 = vector.shape_cast %583 : vector<1x2x128xf32> to vector<2x128xf32>
    %585 = vector.shape_cast %582 : vector<2x128xf32> to vector<1x2x128xf32>
    tpu.vector_store %arg14[%c6_592, %c4_593, %c0_594], %585 {strides = array<i32>} : memref<9x8x128xf32, #tpu.memory_space<vmem>>, vector<1x2x128xf32>,
    %c60_595 = arith.constant 60 : index
    %c0_596 = arith.constant 0 : index
    %586 = tpu.strided_load %arg12[%c60_595, %c0_596] {strides = array<i32: 2, 1>} : memref<72x128xf32, #tpu.memory_space<vmem>>, vector<2x128xf32>
    %c6_597 = arith.constant 6 : index
    %c6_598 = arith.constant 6 : index
    %c0_599 = arith.constant 0 : index
    %587 = vector.load %arg14[%c6_597, %c6_598, %c0_599] : memref<9x8x128xf32, #tpu.memory_space<vmem>>, vector<1x2x128xf32>
    %588 = vector.shape_cast %587 : vector<1x2x128xf32> to vector<2x128xf32>
    %589 = vector.shape_cast %586 : vector<2x128xf32> to vector<1x2x128xf32>
    tpu.vector_store %arg14[%c6_597, %c6_598, %c0_599], %589 {strides = array<i32>} : memref<9x8x128xf32, #tpu.memory_space<vmem>>, vector<1x2x128xf32>,
    %c13_600 = arith.constant 13 : index
    %c0_601 = arith.constant 0 : index
    %590 = tpu.strided_load %arg12[%c13_600, %c0_601] {strides = array<i32: 2, 1>} : memref<72x128xf32, #tpu.memory_space<vmem>>, vector<2x128xf32>
    %c7_602 = arith.constant 7 : index
    %c0_603 = arith.constant 0 : index
    %c0_604 = arith.constant 0 : index
    %591 = vector.load %arg14[%c7_602, %c0_603, %c0_604] : memref<9x8x128xf32, #tpu.memory_space<vmem>>, vector<1x2x128xf32>
    %592 = vector.shape_cast %591 : vector<1x2x128xf32> to vector<2x128xf32>
    %593 = vector.shape_cast %590 : vector<2x128xf32> to vector<1x2x128xf32>
    tpu.vector_store %arg14[%c7_602, %c0_603, %c0_604], %593 {strides = array<i32>} : memref<9x8x128xf32, #tpu.memory_space<vmem>>, vector<1x2x128xf32>,
    %c25_605 = arith.constant 25 : index
    %c0_606 = arith.constant 0 : index
    %594 = tpu.strided_load %arg12[%c25_605, %c0_606] {strides = array<i32: 2, 1>} : memref<72x128xf32, #tpu.memory_space<vmem>>, vector<2x128xf32>
    %c7_607 = arith.constant 7 : index
    %c2_608 = arith.constant 2 : index
    %c0_609 = arith.constant 0 : index
    %595 = vector.load %arg14[%c7_607, %c2_608, %c0_609] : memref<9x8x128xf32, #tpu.memory_space<vmem>>, vector<1x2x128xf32>
    %596 = vector.shape_cast %595 : vector<1x2x128xf32> to vector<2x128xf32>
    %597 = vector.shape_cast %594 : vector<2x128xf32> to vector<1x2x128xf32>
    tpu.vector_store %arg14[%c7_607, %c2_608, %c0_609], %597 {strides = array<i32>} : memref<9x8x128xf32, #tpu.memory_space<vmem>>, vector<1x2x128xf32>,
    %c49_610 = arith.constant 49 : index
    %c0_611 = arith.constant 0 : index
    %598 = tpu.strided_load %arg12[%c49_610, %c0_611] {strides = array<i32: 2, 1>} : memref<72x128xf32, #tpu.memory_space<vmem>>, vector<2x128xf32>
    %c7_612 = arith.constant 7 : index
    %c4_613 = arith.constant 4 : index
    %c0_614 = arith.constant 0 : index
    %599 = vector.load %arg14[%c7_612, %c4_613, %c0_614] : memref<9x8x128xf32, #tpu.memory_space<vmem>>, vector<1x2x128xf32>
    %600 = vector.shape_cast %599 : vector<1x2x128xf32> to vector<2x128xf32>
    %601 = vector.shape_cast %598 : vector<2x128xf32> to vector<1x2x128xf32>
    tpu.vector_store %arg14[%c7_612, %c4_613, %c0_614], %601 {strides = array<i32>} : memref<9x8x128xf32, #tpu.memory_space<vmem>>, vector<1x2x128xf32>,
    %c61_615 = arith.constant 61 : index
    %c0_616 = arith.constant 0 : index
    %602 = tpu.strided_load %arg12[%c61_615, %c0_616] {strides = array<i32: 2, 1>} : memref<72x128xf32, #tpu.memory_space<vmem>>, vector<2x128xf32>
    %c7_617 = arith.constant 7 : index
    %c6_618 = arith.constant 6 : index
    %c0_619 = arith.constant 0 : index
    %603 = vector.load %arg14[%c7_617, %c6_618, %c0_619] : memref<9x8x128xf32, #tpu.memory_space<vmem>>, vector<1x2x128xf32>
    %604 = vector.shape_cast %603 : vector<1x2x128xf32> to vector<2x128xf32>
    %605 = vector.shape_cast %602 : vector<2x128xf32> to vector<1x2x128xf32>
    tpu.vector_store %arg14[%c7_617, %c6_618, %c0_619], %605 {strides = array<i32>} : memref<9x8x128xf32, #tpu.memory_space<vmem>>, vector<1x2x128xf32>,
    %c14_620 = arith.constant 14 : index
    %c0_621 = arith.constant 0 : index
    %606 = tpu.strided_load %arg12[%c14_620, %c0_621] {strides = array<i32: 2, 1>} : memref<72x128xf32, #tpu.memory_space<vmem>>, vector<2x128xf32>
    %c8_622 = arith.constant 8 : index
    %c0_623 = arith.constant 0 : index
    %c0_624 = arith.constant 0 : index
    %607 = vector.load %arg14[%c8_622, %c0_623, %c0_624] : memref<9x8x128xf32, #tpu.memory_space<vmem>>, vector<1x2x128xf32>
    %608 = vector.shape_cast %607 : vector<1x2x128xf32> to vector<2x128xf32>
    %609 = vector.shape_cast %606 : vector<2x128xf32> to vector<1x2x128xf32>
    tpu.vector_store %arg14[%c8_622, %c0_623, %c0_624], %609 {strides = array<i32>} : memref<9x8x128xf32, #tpu.memory_space<vmem>>, vector<1x2x128xf32>,
    %c26 = arith.constant 26 : index
    %c0_625 = arith.constant 0 : index
    %610 = tpu.strided_load %arg12[%c26, %c0_625] {strides = array<i32: 2, 1>} : memref<72x128xf32, #tpu.memory_space<vmem>>, vector<2x128xf32>
    %c8_626 = arith.constant 8 : index
    %c2_627 = arith.constant 2 : index
    %c0_628 = arith.constant 0 : index
    %611 = vector.load %arg14[%c8_626, %c2_627, %c0_628] : memref<9x8x128xf32, #tpu.memory_space<vmem>>, vector<1x2x128xf32>
    %612 = vector.shape_cast %611 : vector<1x2x128xf32> to vector<2x128xf32>
    %613 = vector.shape_cast %610 : vector<2x128xf32> to vector<1x2x128xf32>
    tpu.vector_store %arg14[%c8_626, %c2_627, %c0_628], %613 {strides = array<i32>} : memref<9x8x128xf32, #tpu.memory_space<vmem>>, vector<1x2x128xf32>,
    %c50_629 = arith.constant 50 : index
    %c0_630 = arith.constant 0 : index
    %614 = tpu.strided_load %arg12[%c50_629, %c0_630] {strides = array<i32: 2, 1>} : memref<72x128xf32, #tpu.memory_space<vmem>>, vector<2x128xf32>
    %c8_631 = arith.constant 8 : index
    %c4_632 = arith.constant 4 : index
    %c0_633 = arith.constant 0 : index
    %615 = vector.load %arg14[%c8_631, %c4_632, %c0_633] : memref<9x8x128xf32, #tpu.memory_space<vmem>>, vector<1x2x128xf32>
    %616 = vector.shape_cast %615 : vector<1x2x128xf32> to vector<2x128xf32>
    %617 = vector.shape_cast %614 : vector<2x128xf32> to vector<1x2x128xf32>
    tpu.vector_store %arg14[%c8_631, %c4_632, %c0_633], %617 {strides = array<i32>} : memref<9x8x128xf32, #tpu.memory_space<vmem>>, vector<1x2x128xf32>,
    %c62_634 = arith.constant 62 : index
    %c0_635 = arith.constant 0 : index
    %618 = tpu.strided_load %arg12[%c62_634, %c0_635] {strides = array<i32: 2, 1>} : memref<72x128xf32, #tpu.memory_space<vmem>>, vector<2x128xf32>
    %c8_636 = arith.constant 8 : index
    %c6_637 = arith.constant 6 : index
    %c0_638 = arith.constant 0 : index
    %619 = vector.load %arg14[%c8_636, %c6_637, %c0_638] : memref<9x8x128xf32, #tpu.memory_space<vmem>>, vector<1x2x128xf32>
    %620 = vector.shape_cast %619 : vector<1x2x128xf32> to vector<2x128xf32>
    %621 = vector.shape_cast %618 : vector<2x128xf32> to vector<1x2x128xf32>
    tpu.vector_store %arg14[%c8_636, %c6_637, %c0_638], %621 {strides = array<i32>} : memref<9x8x128xf32, #tpu.memory_space<vmem>>, vector<1x2x128xf32>,
    %c0_639 = arith.constant 0 : index
    %c0_640 = arith.constant 0 : index
    %c0_641 = arith.constant 0 : index
    %622 = vector.load %arg14[%c0_639, %c0_640, %c0_641] : memref<9x8x128xf32, #tpu.memory_space<vmem>>, vector<1x8x128xf32>
    %623 = vector.shape_cast %622 : vector<1x8x128xf32> to vector<8x128xf32>
    %c0_642 = arith.constant 0 : index
    %c0_643 = arith.constant 0 : index
    %c0_644 = arith.constant 0 : index
    %624 = vector.load %arg7[%c0_642, %c0_643, %c0_644] : memref<9x128x128xf32, #tpu.memory_space<vmem>>, vector<1x128x128xf32>
    %625 = vector.shape_cast %624 : vector<1x128x128xf32> to vector<128x128xf32>
    %cst_645 = arith.constant dense<0.000000e+00> : vector<8x128xf32>
    %626 = tpu.matmul %623, %625, %cst_645 {dimension_numbers = #tpu.dot_dimension_numbers<[1], [0], [0], [1], [0, 0, 1, 1], [], []>} : vector<8x128xf32>, vector<128x128xf32>, vector<8x128xf32> -> vector<8x128xf32>
    %c1_646 = arith.constant 1 : index
    %c0_647 = arith.constant 0 : index
    %c0_648 = arith.constant 0 : index
    %627 = vector.load %arg14[%c1_646, %c0_647, %c0_648] : memref<9x8x128xf32, #tpu.memory_space<vmem>>, vector<1x8x128xf32>
    %628 = vector.shape_cast %627 : vector<1x8x128xf32> to vector<8x128xf32>
    %c1_649 = arith.constant 1 : index
    %c0_650 = arith.constant 0 : index
    %c0_651 = arith.constant 0 : index
    %629 = vector.load %arg7[%c1_649, %c0_650, %c0_651] : memref<9x128x128xf32, #tpu.memory_space<vmem>>, vector<1x128x128xf32>
    %630 = vector.shape_cast %629 : vector<1x128x128xf32> to vector<128x128xf32>
    %cst_652 = arith.constant dense<0.000000e+00> : vector<8x128xf32>
    %631 = tpu.matmul %628, %630, %cst_652 {dimension_numbers = #tpu.dot_dimension_numbers<[1], [0], [0], [1], [0, 0, 1, 1], [], []>} : vector<8x128xf32>, vector<128x128xf32>, vector<8x128xf32> -> vector<8x128xf32>
    %632 = arith.addf %626, %631 : vector<8x128xf32>
    %c2_653 = arith.constant 2 : index
    %c0_654 = arith.constant 0 : index
    %c0_655 = arith.constant 0 : index
    %633 = vector.load %arg14[%c2_653, %c0_654, %c0_655] : memref<9x8x128xf32, #tpu.memory_space<vmem>>, vector<1x8x128xf32>
    %634 = vector.shape_cast %633 : vector<1x8x128xf32> to vector<8x128xf32>
    %c2_656 = arith.constant 2 : index
    %c0_657 = arith.constant 0 : index
    %c0_658 = arith.constant 0 : index
    %635 = vector.load %arg7[%c2_656, %c0_657, %c0_658] : memref<9x128x128xf32, #tpu.memory_space<vmem>>, vector<1x128x128xf32>
    %636 = vector.shape_cast %635 : vector<1x128x128xf32> to vector<128x128xf32>
    %cst_659 = arith.constant dense<0.000000e+00> : vector<8x128xf32>
    %637 = tpu.matmul %634, %636, %cst_659 {dimension_numbers = #tpu.dot_dimension_numbers<[1], [0], [0], [1], [0, 0, 1, 1], [], []>} : vector<8x128xf32>, vector<128x128xf32>, vector<8x128xf32> -> vector<8x128xf32>
    %638 = arith.addf %632, %637 : vector<8x128xf32>
    %c3_660 = arith.constant 3 : index
    %c0_661 = arith.constant 0 : index
    %c0_662 = arith.constant 0 : index
    %639 = vector.load %arg14[%c3_660, %c0_661, %c0_662] : memref<9x8x128xf32, #tpu.memory_space<vmem>>, vector<1x8x128xf32>
    %640 = vector.shape_cast %639 : vector<1x8x128xf32> to vector<8x128xf32>
    %c3_663 = arith.constant 3 : index
    %c0_664 = arith.constant 0 : index
    %c0_665 = arith.constant 0 : index
    %641 = vector.load %arg7[%c3_663, %c0_664, %c0_665] : memref<9x128x128xf32, #tpu.memory_space<vmem>>, vector<1x128x128xf32>
    %642 = vector.shape_cast %641 : vector<1x128x128xf32> to vector<128x128xf32>
    %cst_666 = arith.constant dense<0.000000e+00> : vector<8x128xf32>
    %643 = tpu.matmul %640, %642, %cst_666 {dimension_numbers = #tpu.dot_dimension_numbers<[1], [0], [0], [1], [0, 0, 1, 1], [], []>} : vector<8x128xf32>, vector<128x128xf32>, vector<8x128xf32> -> vector<8x128xf32>
    %644 = arith.addf %638, %643 : vector<8x128xf32>
    %c4_667 = arith.constant 4 : index
    %c0_668 = arith.constant 0 : index
    %c0_669 = arith.constant 0 : index
    %645 = vector.load %arg14[%c4_667, %c0_668, %c0_669] : memref<9x8x128xf32, #tpu.memory_space<vmem>>, vector<1x8x128xf32>
    %646 = vector.shape_cast %645 : vector<1x8x128xf32> to vector<8x128xf32>
    %c4_670 = arith.constant 4 : index
    %c0_671 = arith.constant 0 : index
    %c0_672 = arith.constant 0 : index
    %647 = vector.load %arg7[%c4_670, %c0_671, %c0_672] : memref<9x128x128xf32, #tpu.memory_space<vmem>>, vector<1x128x128xf32>
    %648 = vector.shape_cast %647 : vector<1x128x128xf32> to vector<128x128xf32>
    %cst_673 = arith.constant dense<0.000000e+00> : vector<8x128xf32>
    %649 = tpu.matmul %646, %648, %cst_673 {dimension_numbers = #tpu.dot_dimension_numbers<[1], [0], [0], [1], [0, 0, 1, 1], [], []>} : vector<8x128xf32>, vector<128x128xf32>, vector<8x128xf32> -> vector<8x128xf32>
    %650 = arith.addf %644, %649 : vector<8x128xf32>
    %c5_674 = arith.constant 5 : index
    %c0_675 = arith.constant 0 : index
    %c0_676 = arith.constant 0 : index
    %651 = vector.load %arg14[%c5_674, %c0_675, %c0_676] : memref<9x8x128xf32, #tpu.memory_space<vmem>>, vector<1x8x128xf32>
    %652 = vector.shape_cast %651 : vector<1x8x128xf32> to vector<8x128xf32>
    %c5_677 = arith.constant 5 : index
    %c0_678 = arith.constant 0 : index
    %c0_679 = arith.constant 0 : index
    %653 = vector.load %arg7[%c5_677, %c0_678, %c0_679] : memref<9x128x128xf32, #tpu.memory_space<vmem>>, vector<1x128x128xf32>
    %654 = vector.shape_cast %653 : vector<1x128x128xf32> to vector<128x128xf32>
    %cst_680 = arith.constant dense<0.000000e+00> : vector<8x128xf32>
    %655 = tpu.matmul %652, %654, %cst_680 {dimension_numbers = #tpu.dot_dimension_numbers<[1], [0], [0], [1], [0, 0, 1, 1], [], []>} : vector<8x128xf32>, vector<128x128xf32>, vector<8x128xf32> -> vector<8x128xf32>
    %656 = arith.addf %650, %655 : vector<8x128xf32>
    %c6_681 = arith.constant 6 : index
    %c0_682 = arith.constant 0 : index
    %c0_683 = arith.constant 0 : index
    %657 = vector.load %arg14[%c6_681, %c0_682, %c0_683] : memref<9x8x128xf32, #tpu.memory_space<vmem>>, vector<1x8x128xf32>
    %658 = vector.shape_cast %657 : vector<1x8x128xf32> to vector<8x128xf32>
    %c6_684 = arith.constant 6 : index
    %c0_685 = arith.constant 0 : index
    %c0_686 = arith.constant 0 : index
    %659 = vector.load %arg7[%c6_684, %c0_685, %c0_686] : memref<9x128x128xf32, #tpu.memory_space<vmem>>, vector<1x128x128xf32>
    %660 = vector.shape_cast %659 : vector<1x128x128xf32> to vector<128x128xf32>
    %cst_687 = arith.constant dense<0.000000e+00> : vector<8x128xf32>
    %661 = tpu.matmul %658, %660, %cst_687 {dimension_numbers = #tpu.dot_dimension_numbers<[1], [0], [0], [1], [0, 0, 1, 1], [], []>} : vector<8x128xf32>, vector<128x128xf32>, vector<8x128xf32> -> vector<8x128xf32>
    %662 = arith.addf %656, %661 : vector<8x128xf32>
    %c7_688 = arith.constant 7 : index
    %c0_689 = arith.constant 0 : index
    %c0_690 = arith.constant 0 : index
    %663 = vector.load %arg14[%c7_688, %c0_689, %c0_690] : memref<9x8x128xf32, #tpu.memory_space<vmem>>, vector<1x8x128xf32>
    %664 = vector.shape_cast %663 : vector<1x8x128xf32> to vector<8x128xf32>
    %c7_691 = arith.constant 7 : index
    %c0_692 = arith.constant 0 : index
    %c0_693 = arith.constant 0 : index
    %665 = vector.load %arg7[%c7_691, %c0_692, %c0_693] : memref<9x128x128xf32, #tpu.memory_space<vmem>>, vector<1x128x128xf32>
    %666 = vector.shape_cast %665 : vector<1x128x128xf32> to vector<128x128xf32>
    %cst_694 = arith.constant dense<0.000000e+00> : vector<8x128xf32>
    %667 = tpu.matmul %664, %666, %cst_694 {dimension_numbers = #tpu.dot_dimension_numbers<[1], [0], [0], [1], [0, 0, 1, 1], [], []>} : vector<8x128xf32>, vector<128x128xf32>, vector<8x128xf32> -> vector<8x128xf32>
    %668 = arith.addf %662, %667 : vector<8x128xf32>
    %c8_695 = arith.constant 8 : index
    %c0_696 = arith.constant 0 : index
    %c0_697 = arith.constant 0 : index
    %669 = vector.load %arg14[%c8_695, %c0_696, %c0_697] : memref<9x8x128xf32, #tpu.memory_space<vmem>>, vector<1x8x128xf32>
    %670 = vector.shape_cast %669 : vector<1x8x128xf32> to vector<8x128xf32>
    %c8_698 = arith.constant 8 : index
    %c0_699 = arith.constant 0 : index
    %c0_700 = arith.constant 0 : index
    %671 = vector.load %arg7[%c8_698, %c0_699, %c0_700] : memref<9x128x128xf32, #tpu.memory_space<vmem>>, vector<1x128x128xf32>
    %672 = vector.shape_cast %671 : vector<1x128x128xf32> to vector<128x128xf32>
    %cst_701 = arith.constant dense<0.000000e+00> : vector<8x128xf32>
    %673 = tpu.matmul %670, %672, %cst_701 {dimension_numbers = #tpu.dot_dimension_numbers<[1], [0], [0], [1], [0, 0, 1, 1], [], []>} : vector<8x128xf32>, vector<128x128xf32>, vector<8x128xf32> -> vector<8x128xf32>
    %674 = arith.addf %668, %673 : vector<8x128xf32>
    %cst_702 = arith.constant dense<0.000000e+00> : vector<128xf32>
    %675 = vector.multi_reduction <add>, %674, %cst_702 [0] : vector<8x128xf32> to vector<128xf32>
    %676 = vector.shape_cast %675 : vector<128xf32> to vector<1x128xf32>
    %677 = arith.mulf %674, %674 : vector<8x128xf32>
    %cst_703 = arith.constant dense<0.000000e+00> : vector<128xf32>
    %678 = vector.multi_reduction <add>, %677, %cst_703 [0] : vector<8x128xf32> to vector<128xf32>
    %679 = vector.shape_cast %678 : vector<128xf32> to vector<1x128xf32>
    %cst_704 = arith.constant 1.250000e-01 : f32
    %680 = vector.broadcast %cst_704 : f32 to vector<1x128xf32>
    %681 = arith.mulf %676, %680 : vector<1x128xf32>
    %cst_705 = arith.constant 1.250000e-01 : f32
    %682 = vector.broadcast %cst_705 : f32 to vector<1x128xf32>
    %683 = arith.mulf %679, %682 : vector<1x128xf32>
    %684 = arith.mulf %681, %681 : vector<1x128xf32>
    %685 = arith.subf %683, %684 : vector<1x128xf32>
    %cst_706 = arith.constant 0.000000e+00 : f32
    %686 = vector.broadcast %cst_706 : f32 to vector<1x128xf32>
    %687 = arith.maximumf %685, %686 : vector<1x128xf32>
    %cst_707 = arith.constant 9.99999974E-6 : f32
    %688 = vector.broadcast %cst_707 : f32 to vector<1x128xf32>
    %689 = arith.addf %687, %688 : vector<1x128xf32>
    %690 = math.rsqrt %689 : vector<1x128xf32>
    %c0_708 = arith.constant 0 : index
    %c0_709 = arith.constant 0 : index
    %691 = vector.load %arg8[%c0_708, %c0_709] : memref<1x128xf32, #tpu.memory_space<vmem>>, vector<1x128xf32>
    %692 = arith.mulf %690, %691 : vector<1x128xf32>
    %693 = vector.broadcast %681 : vector<1x128xf32> to vector<8x128xf32>
    %694 = arith.subf %674, %693 : vector<8x128xf32>
    %695 = vector.broadcast %692 : vector<1x128xf32> to vector<8x128xf32>
    %696 = arith.mulf %694, %695 : vector<8x128xf32>
    %c0_710 = arith.constant 0 : index
    %c0_711 = arith.constant 0 : index
    %697 = vector.load %arg9[%c0_710, %c0_711] : memref<1x128xf32, #tpu.memory_space<vmem>>, vector<1x128xf32>
    %698 = vector.broadcast %697 : vector<1x128xf32> to vector<8x128xf32>
    %699 = arith.addf %696, %698 : vector<8x128xf32>
    %cst_712 = arith.constant 0.000000e+00 : f32
    %700 = vector.broadcast %cst_712 : f32 to vector<8x128xf32>
    %701 = arith.maximumf %699, %700 : vector<8x128xf32>
    %c0_713 = arith.constant 0 : index
    %c0_714 = arith.constant 0 : index
    %702 = vector.load %arg10[%c0_713, %c0_714] : memref<8x128xf32, #tpu.memory_space<vmem>>, vector<8x128xf32>
    tpu.vector_store %arg10[%c0_713, %c0_714], %701 {strides = array<i32>} : memref<8x128xf32, #tpu.memory_space<vmem>>, vector<8x128xf32>,
    return
  }
}

</mosaic_0001>

<llo_original>
// kernel: forward.1
$region0: #{forward.1}
  #allocation0 [shape = 'u32[]', space=smem, size = 0x4, offset = 0x4, fixed_abs, tag = 'smem constant byte address 0x4 - core index']
  #allocation1 [shape = 'u32[144,128]{1,0:T(1,128)}', space=vmem, size = 0x12000, scoped, tag = 'internal scratch']
  #allocation2 [shape = 'f32[200,128]{1,0:T(8,128)}', space=vmem, size = 0x19000, scoped, tag = 'scratch operand']
  #allocation3 [shape = 'f32[72,128]{1,0:T(8,128)}', space=vmem, size = 0x9000, scoped, tag = 'scratch operand']
  #allocation4 [shape = 'f32[9,32,128]{2,1,0:T(8,128)}', space=vmem, size = 0x24000, scoped, tag = 'scratch operand']
  #allocation5 [shape = 'f32[9,8,128]{2,1,0:T(8,128)}', space=vmem, size = 0x9000, scoped, tag = 'scratch operand']
  %s0 = inlined_call_operand.vmem [shape: f32[128,36], index: 0, kind: input, shape index: {}]
  %s1 = inlined_call_operand.vmem [shape: f32[36,128], index: 1, kind: input, shape index: {}]
  %s2 = inlined_call_operand.vmem [shape: f32[1,128], index: 2, kind: input, shape index: {}]
  %s3 = inlined_call_operand.vmem [shape: f32[1,128], index: 3, kind: input, shape index: {}, may-alias: {3,6,9}]
  %s4 = inlined_call_operand.vmem [shape: f32[9,128,128], index: 4, kind: input, shape index: {}]
  %s5 = inlined_call_operand.vmem [shape: f32[1,128], index: 5, kind: input, shape index: {}, may-alias: {5,8}]
  %s6 = inlined_call_operand.vmem [shape: f32[1,128], index: 6, kind: input, shape index: {}, may-alias: {3,6,9}]
  %s7 = inlined_call_operand.vmem [shape: f32[9,128,128], index: 7, kind: input, shape index: {}]
  %s8 = inlined_call_operand.vmem [shape: f32[1,128], index: 8, kind: input, shape index: {}, may-alias: {5,8}]
  %s9 = inlined_call_operand.vmem [shape: f32[1,128], index: 9, kind: input, shape index: {}, may-alias: {3,6,9}]
  %s10 = inlined_call_operand.hbm [shape: f32[8,128], index: 10, kind: output, shape index: {}]
  %s11 = sld [smem:[#allocation0]]
  $region50: #{forward.1} parent=0
    _
  %s13 = ssub.s32 1, %s11
  %s14 = scalar_select 0, %s13, %s11
  $region1: #{forward.1} parent=0
    #allocation6 [shape = 'u8[4096]{0}', space=vmem, size = 0x1000, scoped, tag = 'output window, operand 0, single buffered']
    #allocation7 [shape = 's32[1]{0}', space=sflag, size = 0x4, scoped, tag = 'scoped memory for forward.1']
    %15 = vsyncpa [#allocation7], 0
    // Predicated region
    $region2: #{forward.1} parent=1 // pred_check
      _
    $region3: #{forward.1} parent=1 // pred_check_branch
      %17 = sbr.rel (0) target = $region5
    $region4: #{forward.1} parent=1 // pred_region
      _
    $region5: #{forward.1} parent=1 // pred_fallthru
      _
    // Predicated region
    $region6: #{forward.1} parent=1 // pred_check
      _
    $region7: #{forward.1} parent=1 // pred_check_branch
      %19 = sbr.rel (0) target = $region9
    $region8: #{forward.1} parent=1 // pred_region
      _
    $region9: #{forward.1} parent=1 // pred_fallthru
      _
    // Predicated region
    $region10: #{forward.1} parent=1 // pred_check
      _
    $region11: #{forward.1} parent=1 // pred_check_branch
      %21 = sbr.rel (0) target = $region13
    $region12: #{forward.1} parent=1 // pred_region
      _
    $region13: #{forward.1} parent=1 // pred_fallthru
      _
    // Predicated region
    $region14: #{forward.1} parent=1 // pred_check
      _
    $region15: #{forward.1} parent=1 // pred_check_branch
      %23 = sbr.rel (0) target = $region17
    $region16: #{forward.1} parent=1 // pred_region
      _
    $region17: #{forward.1} parent=1 // pred_fallthru
      _
    // Predicated region
    $region18: #{forward.1} parent=1 // pred_check
      _
    $region19: #{forward.1} parent=1 // pred_check_branch
      %25 = sbr.rel (0) target = $region21
    $region20: #{forward.1} parent=1 // pred_region
      _
    $region21: #{forward.1} parent=1 // pred_fallthru
      _
    // Predicated region
    $region22: #{forward.1} parent=1 // pred_check
      _
    $region23: #{forward.1} parent=1 // pred_check_branch
      %27 = sbr.rel (0) target = $region25
    $region24: #{forward.1} parent=1 // pred_region
      _
    $region25: #{forward.1} parent=1 // pred_fallthru
      _
    // Predicated region
    $region26: #{forward.1} parent=1 // pred_check
      _
    $region27: #{forward.1} parent=1 // pred_check_branch
      %29 = sbr.rel (0) target = $region29
    $region28: #{forward.1} parent=1 // pred_region
      _
    $region29: #{forward.1} parent=1 // pred_fallthru
      _
    // Predicated region
    $region30: #{forward.1} parent=1 // pred_check
      _
    $region31: #{forward.1} parent=1 // pred_check_branch
      %31 = sbr.rel (0) target = $region33
    $region32: #{forward.1} parent=1 // pred_region
      _
    $region33: #{forward.1} parent=1 // pred_fallthru
      _
    // Predicated region
    $region34: #{forward.1} parent=1 // pred_check
      _
    $region35: #{forward.1} parent=1 // pred_check_branch
      %33 = sbr.rel (0) target = $region37
    $region36: #{forward.1} parent=1 // pred_region
      _
    $region37: #{forward.1} parent=1 // pred_fallthru
      _
    // Predicated region
    $region38: #{forward.1} parent=1 // pred_check
      _
    $region39: #{forward.1} parent=1 // pred_check_branch
      %35 = sbr.rel (0) target = $region41
    $region40: #{forward.1} parent=1 // pred_region
      _
    $region41: #{forward.1} parent=1 // pred_fallthru
      _
    %v36 = vld [vmem:[%s0] sm:$0xff]
    %v37 = vld [vmem:[%s0 + $0x8] sm:$0xff]
    %v38 = vld [vmem:[%s0 + $0x10] sm:$0xff]
    %v39 = vld [vmem:[%s0 + $0x18] sm:$0xff]
    %v40 = vld [vmem:[%s0 + $0x20] sm:$0xff]
    %v41 = vld [vmem:[%s0 + $0x28] sm:$0xff]
    %v42 = vld [vmem:[%s0 + $0x30] sm:$0xff]
    %v43 = vld [vmem:[%s0 + $0x38] sm:$0xff]
    %v44 = vld [vmem:[%s0 + $0x40] sm:$0xff]
    %v45 = vld [vmem:[%s0 + $0x48] sm:$0xff]
    %v46 = vld [vmem:[%s0 + $0x50] sm:$0xff]
    %v47 = vld [vmem:[%s0 + $0x58] sm:$0xff]
    %v48 = vld [vmem:[%s0 + $0x60] sm:$0xff]
    %v49 = vld [vmem:[%s0 + $0x68] sm:$0xff]
    %v50 = vld [vmem:[%s0 + $0x70] sm:$0xff]
    %v51 = vld [vmem:[%s0 + $0x78] sm:$0xff]
    %v52 = vld [vmem:[%s1] sm:$0xff]
    %v53 = vld [vmem:[%s1 + $0x8] sm:$0xff]
    %v54 = vld [vmem:[%s1 + $0x10] sm:$0xff]
    %v55 = vld [vmem:[%s1 + $0x18] sm:$0xff]
    %v56 = vld [vmem:[%s1 + $0x20] sm:$0xf]
    %vm57 = vcmask 293888
    %v59 = vsel %vm57, %v36, 0
    %v62 = vsel %vm57, %v37, 0
    %v65 = vsel %vm57, %v38, 0
    %v68 = vsel %vm57, %v39, 0
    %v71 = vsel %vm57, %v40, 0
    %v74 = vsel %vm57, %v41, 0
    %v77 = vsel %vm57, %v42, 0
    %v80 = vsel %vm57, %v43, 0
    %v83 = vsel %vm57, %v44, 0
    %v86 = vsel %vm57, %v45, 0
    %v89 = vsel %vm57, %v46, 0
    %v92 = vsel %vm57, %v47, 0
    %v95 = vsel %vm57, %v48, 0
    %v98 = vsel %vm57, %v49, 0
    %v101 = vsel %vm57, %v50, 0
    %v104 = vsel %vm57, %v51, 0
    %vm106 = vcmask 1043456
    %v108 = vsel %vm106, %v56, 0
    %110 = vmatprep.subr.mxu0 0.0
    %111 = vmatpush1.msra.mxu0 %v52
    %112 = vmatprep.subr.mxu0 0.0
    %113 = vmatpush1.msra.mxu0 %v53
    %114 = vmatprep.subr.mxu0 0.0
    %115 = vmatpush1.msra.mxu0 %v54
    %116 = vmatprep.subr.mxu0 0.0
    %117 = vmatpush1.msra.mxu0 %v55
    %118 = vmatprep.subr.mxu0 0.0
    %119 = vmatpush1.msra.mxu0 %v108
    %120 = vmatprep.subr.mxu0 0.0
    %121 = vmatpush1.msra.mxu0 0.0
    %122 = vmatprep.subr.mxu0 0.0
    %123 = vmatpush1.msra.mxu0 0.0
    %124 = vmatprep.subr.mxu0 0.0
    %125 = vmatpush1.msra.mxu0 0.0
    %126 = vmatprep.subr.mxu0 0.0
    %127 = vmatpush1.msra.mxu0 0.0
    %128 = vmatprep.subr.mxu0 0.0
    %129 = vmatpush1.msra.mxu0 0.0
    %130 = vmatprep.subr.mxu0 0.0
    %131 = vmatpush1.msra.mxu0 0.0
    %132 = vmatprep.subr.mxu0 0.0
    %133 = vmatpush1.msra.mxu0 0.0
    %134 = vmatprep.subr.mxu0 0.0
    %135 = vmatpush1.msra.mxu0 0.0
    %136 = vmatprep.subr.mxu0 0.0
    %137 = vmatpush1.msra.mxu0 0.0
    %138 = vmatprep.subr.mxu0 0.0
    %139 = vmatpush1.msra.mxu0 0.0
    %140 = vmatprep.subr.mxu0 0.0
    %141 = vmatpush1.msra.mxu0 0.0
    %142 = vmatprep.subr.mxu0 0.0
    %143 = vmatpush1.msra.mxu0 0.0
    %144 = vmatprep.subr.mxu0 0.0
    %145 = vmatpush1.msra.mxu0 0.0
    %146 = vmatprep.subr.mxu0 0.0
    %147 = vmatpush1.msra.mxu0 0.0
    %148 = vmatprep.subr.mxu0 0.0
    %149 = vmatpush1.msra.mxu0 0.0
    %150 = vmatprep.subr.mxu0 0.0
    %151 = vmatpush1.msra.mxu0 0.0
    %152 = vmatprep.subr.mxu0 0.0
    %153 = vmatpush1.msra.mxu0 0.0
    %154 = vmatprep.subr.mxu0 0.0
    %155 = vmatpush1.msra.mxu0 0.0
    %156 = vmatprep.subr.mxu0 0.0
    %157 = vmatpush1.msra.mxu0 0.0
    %158 = vmatprep.subr.mxu0 0.0
    %159 = vmatpush1.msra.mxu0 0.0
    %160 = vmatprep.subr.mxu0 0.0
    %161 = vmatpush1.msra.mxu0 0.0
    %162 = vmatprep.subr.mxu0 0.0
    %163 = vmatpush1.msra.mxu0 0.0
    %164 = vmatprep.subr.mxu0 0.0
    %165 = vmatpush1.msra.mxu0 0.0
    %166 = vmatprep.subr.mxu0 0.0
    %167 = vmatpush1.msra.mxu0 0.0
    %168 = vmatprep.subr.mxu0 0.0
    %169 = vmatpush1.msra.mxu0 0.0
    %170 = vmatprep.subr.mxu0 0.0
    %171 = vmatpush1.msra.mxu0 0.0
    %172 = vmatprep.subr.mxu0 0.0
    %173 = vmatpush1.msra.mxu0 0.0
    %174 = vmatprep.mubr.f32.mxu0 0.0
    %175 = vmatmul.mubr.f32.gmra.mrb[0].mxu0 %v59
    %v176 = vpop.f32.mrb[0].mxu0
    %v177 = vadd.f32 0.0, %v176
    %v178 = vpop.f32.mrb[0].mxu0
    %179 = vmatprep.mubr.f32.mxu0 0.0
    %180 = vmatmul.mubr.f32.gmra.mrb[0].mxu0 %v62
    %v181 = vpop.f32.mrb[0].mxu0
    %v182 = vadd.f32 0.0, %v181
    %v183 = vpop.f32.mrb[0].mxu0
    %184 = vmatprep.mubr.f32.mxu0 0.0
    %185 = vmatmul.mubr.f32.gmra.mrb[0].mxu0 %v65
    %v186 = vpop.f32.mrb[0].mxu0
    %v187 = vadd.f32 0.0, %v186
    %v188 = vpop.f32.mrb[0].mxu0
    %189 = vmatprep.mubr.f32.mxu0 0.0
    %190 = vmatmul.mubr.f32.gmra.mrb[0].mxu0 %v68
    %v191 = vpop.f32.mrb[0].mxu0
    %v192 = vadd.f32 0.0, %v191
    %v193 = vpop.f32.mrb[0].mxu0
    %194 = vmatprep.mubr.f32.mxu0 0.0
    %195 = vmatmul.mubr.f32.gmra.mrb[0].mxu0 %v71
    %v196 = vpop.f32.mrb[0].mxu0
    %v197 = vadd.f32 0.0, %v196
    %v198 = vpop.f32.mrb[0].mxu0
    %199 = vmatprep.mubr.f32.mxu0 0.0
    %200 = vmatmul.mubr.f32.gmra.mrb[0].mxu0 %v74
    %v201 = vpop.f32.mrb[0].mxu0
    %v202 = vadd.f32 0.0, %v201
    %v203 = vpop.f32.mrb[0].mxu0
    %204 = vmatprep.mubr.f32.mxu0 0.0
    %205 = vmatmul.mubr.f32.gmra.mrb[0].mxu0 %v77
    %v206 = vpop.f32.mrb[0].mxu0
    %v207 = vadd.f32 0.0, %v206
    %v208 = vpop.f32.mrb[0].mxu0
    %209 = vmatprep.mubr.f32.mxu0 0.0
    %210 = vmatmul.mubr.f32.gmra.mrb[0].mxu0 %v80
    %v211 = vpop.f32.mrb[0].mxu0
    %v212 = vadd.f32 0.0, %v211
    %v213 = vpop.f32.mrb[0].mxu0
    %214 = vmatprep.mubr.f32.mxu0 0.0
    %215 = vmatmul.mubr.f32.gmra.mrb[0].mxu0 %v83
    %v216 = vpop.f32.mrb[0].mxu0
    %v217 = vadd.f32 0.0, %v216
    %v218 = vpop.f32.mrb[0].mxu0
    %219 = vmatprep.mubr.f32.mxu0 0.0
    %220 = vmatmul.mubr.f32.gmra.mrb[0].mxu0 %v86
    %v221 = vpop.f32.mrb[0].mxu0
    %v222 = vadd.f32 0.0, %v221
    %v223 = vpop.f32.mrb[0].mxu0
    %224 = vmatprep.mubr.f32.mxu0 0.0
    %225 = vmatmul.mubr.f32.gmra.mrb[0].mxu0 %v89
    %v226 = vpop.f32.mrb[0].mxu0
    %v227 = vadd.f32 0.0, %v226
    %v228 = vpop.f32.mrb[0].mxu0
    %229 = vmatprep.mubr.f32.mxu0 0.0
    %230 = vmatmul.mubr.f32.gmra.mrb[0].mxu0 %v92
    %v231 = vpop.f32.mrb[0].mxu0
    %v232 = vadd.f32 0.0, %v231
    %v233 = vpop.f32.mrb[0].mxu0
    %234 = vmatprep.mubr.f32.mxu0 0.0
    %235 = vmatmul.mubr.f32.gmra.mrb[0].mxu0 %v95
    %v236 = vpop.f32.mrb[0].mxu0
    %v237 = vadd.f32 0.0, %v236
    %v238 = vpop.f32.mrb[0].mxu0
    %239 = vmatprep.mubr.f32.mxu0 0.0
    %240 = vmatmul.mubr.f32.gmra.mrb[0].mxu0 %v98
    %v241 = vpop.f32.mrb[0].mxu0
    %v242 = vadd.f32 0.0, %v241
    %v243 = vpop.f32.mrb[0].mxu0
    %244 = vmatprep.mubr.f32.mxu0 0.0
    %245 = vmatmul.mubr.f32.gmra.mrb[0].mxu0 %v101
    %v246 = vpop.f32.mrb[0].mxu0
    %v247 = vadd.f32 0.0, %v246
    %v248 = vpop.f32.mrb[0].mxu0
    %249 = vmatprep.mubr.f32.mxu0 0.0
    %250 = vmatmul.mubr.f32.gmra.mrb[0].mxu0 %v104
    %v251 = vpop.f32.mrb[0].mxu0
    %v252 = vadd.f32 0.0, %v251
    %v253 = vpop.f32.mrb[0].mxu0
    %254 = vdwg.mxu0
    %v255 = vadd.f32 %v177, %v182
    %v256 = vadd.f32 %v255, %v187
    %v257 = vadd.f32 %v256, %v192
    %v258 = vadd.f32 %v257, %v197
    %v259 = vadd.f32 %v258, %v202
    %v260 = vadd.f32 %v259, %v207
    %v261 = vadd.f32 %v260, %v212
    %v262 = vadd.f32 %v261, %v217
    %v263 = vadd.f32 %v262, %v222
    %v264 = vadd.f32 %v263, %v227
    %v265 = vadd.f32 %v264, %v232
    %v266 = vadd.f32 %v265, %v237
    %v267 = vadd.f32 %v266, %v242
    %v268 = vadd.f32 %v267, %v247
    %v269 = vadd.f32 %v268, %v252
    %v270 = vrot.slane %v269, 4
    %v271 = vadd.f32 %v269, %v270
    %v272 = vrot.slane %v271, 2
    %v273 = vadd.f32 %v271, %v272
    %v274 = vrot.slane %v273, 1
    %v275 = vadd.f32 %v273, %v274
    %v276 = vmul.f32 %v177, %v177
    %v277 = vmul.f32 %v182, %v182
    %v278 = vmul.f32 %v187, %v187
    %v279 = vmul.f32 %v192, %v192
    %v280 = vmul.f32 %v197, %v197
    %v281 = vmul.f32 %v202, %v202
    %v282 = vmul.f32 %v207, %v207
    %v283 = vmul.f32 %v212, %v212
    %v284 = vmul.f32 %v217, %v217
    %v285 = vmul.f32 %v222, %v222
    %v286 = vmul.f32 %v227, %v227
    %v287 = vmul.f32 %v232, %v232
    %v288 = vmul.f32 %v237, %v237
    %v289 = vmul.f32 %v242, %v242
    %v290 = vmul.f32 %v247, %v247
    %v291 = vmul.f32 %v252, %v252
    %v292 = vadd.f32 %v276, %v277
    %v293 = vadd.f32 %v292, %v278
    %v294 = vadd.f32 %v293, %v279
    %v295 = vadd.f32 %v294, %v280
    %v296 = vadd.f32 %v295, %v281
    %v297 = vadd.f32 %v296, %v282
    %v298 = vadd.f32 %v297, %v283
    %v299 = vadd.f32 %v298, %v284
    %v300 = vadd.f32 %v299, %v285
    %v301 = vadd.f32 %v300, %v286
    %v302 = vadd.f32 %v301, %v287
    %v303 = vadd.f32 %v302, %v288
    %v304 = vadd.f32 %v303, %v289
    %v305 = vadd.f32 %v304, %v290
    %v306 = vadd.f32 %v305, %v291
    %v307 = vrot.slane %v306, 4
    %v308 = vadd.f32 %v306, %v307
    %v309 = vrot.slane %v308, 2
    %v310 = vadd.f32 %v308, %v309
    %v311 = vrot.slane %v310, 1
    %v312 = vadd.f32 %v310, %v311
    %v313 = vmul.f32 %v275, 0.0078125
    %v314 = vmul.f32 %v312, 0.0078125
    %v315 = vmul.f32 %v313, %v313
    %v316 = vsub.f32 %v314, %v315
    %v317 = vmax.f32 %v316, 0.0
    %v318 = vadd.f32 %v317, 1e-05
    %v319 = vrsqrt.pop %v318
    %v320 = vld [vmem:[%s2] sm:$0x1]
    %v321 = vmul.f32 %v319, %v320
    %v322 = vsub.f32 %v177, %v313
    %v323 = vsub.f32 %v182, %v313
    %v324 = vsub.f32 %v187, %v313
    %v325 = vsub.f32 %v192, %v313
    %v326 = vsub.f32 %v197, %v313
    %v327 = vsub.f32 %v202, %v313
    %v328 = vsub.f32 %v207, %v313
    %v329 = vsub.f32 %v212, %v313
    %v330 = vsub.f32 %v217, %v313
    %v331 = vsub.f32 %v222, %v313
    %v332 = vsub.f32 %v227, %v313
    %v333 = vsub.f32 %v232, %v313
    %v334 = vsub.f32 %v237, %v313
    %v335 = vsub.f32 %v242, %v313
    %v336 = vsub.f32 %v247, %v313
    %v337 = vsub.f32 %v252, %v313
    %v338 = vlaneseq
    %v339 = vshrl.u32 %v338, 7
    %v340 = vsub.s32 0, %v339
    %v341 = vrot.slane %v321, %v340
    %v342 = vmul.f32 %v322, %v341
    %v343 = vmul.f32 %v323, %v341
    %v344 = vmul.f32 %v324, %v341
    %v345 = vmul.f32 %v325, %v341
    %v346 = vmul.f32 %v326, %v341
    %v347 = vmul.f32 %v327, %v341
    %v348 = vmul.f32 %v328, %v341
    %v349 = vmul.f32 %v329, %v341
    %v350 = vmul.f32 %v330, %v341
    %v351 = vmul.f32 %v331, %v341
    %v352 = vmul.f32 %v332, %v341
    %v353 = vmul.f32 %v333, %v341
    %v354 = vmul.f32 %v334, %v341
    %v355 = vmul.f32 %v335, %v341
    %v356 = vmul.f32 %v336, %v341
    %v357 = vmul.f32 %v337, %v341
    %v358 = vld [vmem:[%s3] sm:$0x1]
    %v360 = vlaneseq
    %v361 = vshrl.u32 %v360, 7
    %v362 = vsub.s32 0, %v361
    %v363 = vrot.slane %v358, %v362
    %v365 = vadd.f32 %v342, %v363
    %v366 = vadd.f32 %v343, %v363
    %v367 = vadd.f32 %v344, %v363
    %v368 = vadd.f32 %v345, %v363
    %v369 = vadd.f32 %v346, %v363
    %v370 = vadd.f32 %v347, %v363
    %v371 = vadd.f32 %v348, %v363
    %v372 = vadd.f32 %v349, %v363
    %v373 = vadd.f32 %v350, %v363
    %v374 = vadd.f32 %v351, %v363
    %v375 = vadd.f32 %v352, %v363
    %v376 = vadd.f32 %v353, %v363
    %v377 = vadd.f32 %v354, %v363
    %v378 = vadd.f32 %v355, %v363
    %v379 = vadd.f32 %v356, %v363
    %v380 = vadd.f32 %v357, %v363
    %v381 = vmax.f32 %v365, 0.0
    %v382 = vmax.f32 %v366, 0.0
    %v383 = vmax.f32 %v367, 0.0
    %v384 = vmax.f32 %v368, 0.0
    %v385 = vmax.f32 %v369, 0.0
    %v386 = vmax.f32 %v370, 0.0
    %v387 = vmax.f32 %v371, 0.0
    %v388 = vmax.f32 %v372, 0.0
    %v389 = vmax.f32 %v373, 0.0
    %v390 = vmax.f32 %v374, 0.0
    %v391 = vmax.f32 %v375, 0.0
    %v392 = vmax.f32 %v376, 0.0
    %v393 = vmax.f32 %v377, 0.0
    %v394 = vmax.f32 %v378, 0.0
    %v395 = vmax.f32 %v379, 0.0
    %v396 = vmax.f32 %v380, 0.0
    %397 = vst [vmem:[#allocation2] sm:$0xff] 0.0
    %398 = vst [vmem:[#allocation2 + $0x8] sm:$0x7] 0.0
    %399 = vst [vmem:[#allocation2 + $0x13] sm:$0x3] 0.0
    %400 = vst [vmem:[#allocation2 + $0x1d] sm:$0x3] 0.0
    %401 = vst [vmem:[#allocation2 + $0x27] sm:$0x3] 0.0
    %402 = vst [vmem:[#allocation2 + $0x31] sm:$0x3] 0.0
    %403 = vst [vmem:[#allocation2 + $0x3b] sm:$0x3] 0.0
    %404 = vst [vmem:[#allocation2 + $0x45] sm:$0x3] 0.0
    %405 = vst [vmem:[#allocation2 + $0x4f] sm:$0x3] 0.0
    %406 = vst [vmem:[#allocation2 + $0x59] sm:$0xff] 0.0
    %407 = vst [vmem:[#allocation2 + $0x61] sm:$0x7] 0.0
    %408 = vst [vmem:[#allocation2 + $0x64] sm:$0xff] 0.0
    %409 = vst [vmem:[#allocation2 + $0x6c] sm:$0x7] 0.0
    %410 = vst [vmem:[#allocation2 + $0x77] sm:$0x3] 0.0
    %411 = vst [vmem:[#allocation2 + $0x81] sm:$0x3] 0.0
    %412 = vst [vmem:[#allocation2 + $0x8b] sm:$0x3] 0.0
    %413 = vst [vmem:[#allocation2 + $0x95] sm:$0x3] 0.0
    %414 = vst [vmem:[#allocation2 + $0x9f] sm:$0x3] 0.0
    %415 = vst [vmem:[#allocation2 + $0xa9] sm:$0x3] 0.0
    %416 = vst [vmem:[#allocation2 + $0xb3] sm:$0x3] 0.0
    %417 = vst [vmem:[#allocation2 + $0xbd] sm:$0xff] 0.0
    %418 = vst [vmem:[#allocation2 + $0xc5] sm:$0x7] 0.0
    %419 = vst [vmem:[#allocation2 + $0xb] sm:$0xff] %v381
    %420 = vst [vmem:[#allocation2 + $0x15] sm:$0xff] %v382
    %421 = vst [vmem:[#allocation2 + $0x1f] sm:$0xff] %v383
    %422 = vst [vmem:[#allocation2 + $0x29] sm:$0xff] %v384
    %423 = vst [vmem:[#allocation2 + $0x33] sm:$0xff] %v385
    %424 = vst [vmem:[#allocation2 + $0x3d] sm:$0xff] %v386
    %425 = vst [vmem:[#allocation2 + $0x47] sm:$0xff] %v387
    %426 = vst [vmem:[#allocation2 + $0x51] sm:$0xff] %v388
    %427 = vst [vmem:[#allocation2 + $0x6f] sm:$0xff] %v389
    %428 = vst [vmem:[#allocation2 + $0x79] sm:$0xff] %v390
    %429 = vst [vmem:[#allocation2 + $0x83] sm:$0xff] %v391
    %430 = vst [vmem:[#allocation2 + $0x8d] sm:$0xff] %v392
    %431 = vst [vmem:[#allocation2 + $0x97] sm:$0xff] %v393
    %432 = vst [vmem:[#allocation2 + $0xa1] sm:$0xff] %v394
    %433 = vst [vmem:[#allocation2 + $0xab] sm:$0xff] %v395
    %434 = vst [vmem:[#allocation2 + $0xb5] sm:$0xff] %v396
    %v435 = vld [vmem:[#allocation2] ss:$2 sm:$0xf]
    %436 = vst [vmem:[#allocation4] sm:$0xf] %v435
    %s437 = scalar_lea.vmem [#allocation2], 20
    %v438 = vld [vmem:[%s437] ss:$2 sm:$0xf]
    %439 = vst [vmem:[#allocation4 + $0x4] sm:$0xf] %v438
    %s440 = scalar_lea.vmem [#allocation2], 40
    %v441 = vld [vmem:[%s440] ss:$2 sm:$0xf]
    %442 = vst [vmem:[#allocation4 + $0x8] sm:$0xf] %v441
    %s443 = scalar_lea.vmem [#allocation2], 60
    %v444 = vld [vmem:[%s443] ss:$2 sm:$0xf]
    %445 = vst [vmem:[#allocation4 + $0xc] sm:$0xf] %v444
    %s446 = scalar_lea.vmem [#allocation2], 100
    %v447 = vld [vmem:[%s446] ss:$2 sm:$0xf]
    %448 = vst [vmem:[#allocation4 + $0x10] sm:$0xf] %v447
    %s449 = scalar_lea.vmem [#allocation2], 120
    %v450 = vld [vmem:[%s449] ss:$2 sm:$0xf]
    %451 = vst [vmem:[#allocation4 + $0x14] sm:$0xf] %v450
    %s452 = scalar_lea.vmem [#allocation2], 140
    %v453 = vld [vmem:[%s452] ss:$2 sm:$0xf]
    %454 = vst [vmem:[#allocation4 + $0x18] sm:$0xf] %v453
    %s455 = scalar_lea.vmem [#allocation2], 160
    %v456 = vld [vmem:[%s455] ss:$2 sm:$0xf]
    %457 = vst [vmem:[#allocation4 + $0x1c] sm:$0xf] %v456
    %s458 = scalar_lea.vmem [#allocation2], 1
    %v459 = vld [vmem:[%s458] ss:$2 sm:$0xf]
    %s460 = scalar_lea.vmem [#allocation4], 32
    %461 = vst [vmem:[%s460] sm:$0xf] %v459
    %s462 = scalar_lea.vmem [#allocation2], 21
    %v463 = vld [vmem:[%s462] ss:$2 sm:$0xf]
    %464 = vst [vmem:[%s460 + $0x4] sm:$0xf] %v463
    %s465 = scalar_lea.vmem [#allocation2], 41
    %v466 = vld [vmem:[%s465] ss:$2 sm:$0xf]
    %467 = vst [vmem:[%s460 + $0x8] sm:$0xf] %v466
    %s468 = scalar_lea.vmem [#allocation2], 61
    %v469 = vld [vmem:[%s468] ss:$2 sm:$0xf]
    %470 = vst [vmem:[%s460 + $0xc] sm:$0xf] %v469
    %s471 = scalar_lea.vmem [#allocation2], 101
    %v472 = vld [vmem:[%s471] ss:$2 sm:$0xf]
    %473 = vst [vmem:[%s460 + $0x10] sm:$0xf] %v472
    %s474 = scalar_lea.vmem [#allocation2], 121
    %v475 = vld [vmem:[%s474] ss:$2 sm:$0xf]
    %476 = vst [vmem:[%s460 + $0x14] sm:$0xf] %v475
    %s477 = scalar_lea.vmem [#allocation2], 141
    %v478 = vld [vmem:[%s477] ss:$2 sm:$0xf]
    %479 = vst [vmem:[%s460 + $0x18] sm:$0xf] %v478
    %s480 = scalar_lea.vmem [#allocation2], 161
    %v481 = vld [vmem:[%s480] ss:$2 sm:$0xf]
    %482 = vst [vmem:[%s460 + $0x1c] sm:$0xf] %v481
    %s483 = scalar_lea.vmem [#allocation2], 2
    %v484 = vld [vmem:[%s483] ss:$2 sm:$0xf]
    %s485 = scalar_lea.vmem [#allocation4], 64
    %486 = vst [vmem:[%s485] sm:$0xf] %v484
    %s487 = scalar_lea.vmem [#allocation2], 22
    %v488 = vld [vmem:[%s487] ss:$2 sm:$0xf]
    %489 = vst [vmem:[%s485 + $0x4] sm:$0xf] %v488
    %s490 = scalar_lea.vmem [#allocation2], 42
    %v491 = vld [vmem:[%s490] ss:$2 sm:$0xf]
    %492 = vst [vmem:[%s485 + $0x8] sm:$0xf] %v491
    %s493 = scalar_lea.vmem [#allocation2], 62
    %v494 = vld [vmem:[%s493] ss:$2 sm:$0xf]
    %495 = vst [vmem:[%s485 + $0xc] sm:$0xf] %v494
    %s496 = scalar_lea.vmem [#allocation2], 102
    %v497 = vld [vmem:[%s496] ss:$2 sm:$0xf]
    %498 = vst [vmem:[%s485 + $0x10] sm:$0xf] %v497
    %s499 = scalar_lea.vmem [#allocation2], 122
    %v500 = vld [vmem:[%s499] ss:$2 sm:$0xf]
    %501 = vst [vmem:[%s485 + $0x14] sm:$0xf] %v500
    %s502 = scalar_lea.vmem [#allocation2], 142
    %v503 = vld [vmem:[%s502] ss:$2 sm:$0xf]
    %504 = vst [vmem:[%s485 + $0x18] sm:$0xf] %v503
    %s505 = scalar_lea.vmem [#allocation2], 162
    %v506 = vld [vmem:[%s505] ss:$2 sm:$0xf]
    %507 = vst [vmem:[%s485 + $0x1c] sm:$0xf] %v506
    %s508 = scalar_lea.vmem [#allocation2], 10
    %v509 = vld [vmem:[%s508] ss:$2 sm:$0xf]
    %s510 = scalar_lea.vmem [#allocation4], 96
    %511 = vst [vmem:[%s510] sm:$0xf] %v509
    %s512 = scalar_lea.vmem [#allocation2], 30
    %v513 = vld [vmem:[%s512] ss:$2 sm:$0xf]
    %514 = vst [vmem:[%s510 + $0x4] sm:$0xf] %v513
    %s515 = scalar_lea.vmem [#allocation2], 50
    %v516 = vld [vmem:[%s515] ss:$2 sm:$0xf]
    %517 = vst [vmem:[%s510 + $0x8] sm:$0xf] %v516
    %s518 = scalar_lea.vmem [#allocation2], 70
    %v519 = vld [vmem:[%s518] ss:$2 sm:$0xf]
    %520 = vst [vmem:[%s510 + $0xc] sm:$0xf] %v519
    %s521 = scalar_lea.vmem [#allocation2], 110
    %v522 = vld [vmem:[%s521] ss:$2 sm:$0xf]
    %523 = vst [vmem:[%s510 + $0x10] sm:$0xf] %v522
    %s524 = scalar_lea.vmem [#allocation2], 130
    %v525 = vld [vmem:[%s524] ss:$2 sm:$0xf]
    %526 = vst [vmem:[%s510 + $0x14] sm:$0xf] %v525
    %s527 = scalar_lea.vmem [#allocation2], 150
    %v528 = vld [vmem:[%s527] ss:$2 sm:$0xf]
    %529 = vst [vmem:[%s510 + $0x18] sm:$0xf] %v528
    %s530 = scalar_lea.vmem [#allocation2], 170
    %v531 = vld [vmem:[%s530] ss:$2 sm:$0xf]
    %532 = vst [vmem:[%s510 + $0x1c] sm:$0xf] %v531
    %s533 = scalar_lea.vmem [#allocation2], 11
    %v534 = vld [vmem:[%s533] ss:$2 sm:$0xf]
    %s535 = scalar_lea.vmem [#allocation4], 128
    %536 = vst [vmem:[%s535] sm:$0xf] %v534
    %s537 = scalar_lea.vmem [#allocation2], 31
    %v538 = vld [vmem:[%s537] ss:$2 sm:$0xf]
    %539 = vst [vmem:[%s535 + $0x4] sm:$0xf] %v538
    %s540 = scalar_lea.vmem [#allocation2], 51
    %v541 = vld [vmem:[%s540] ss:$2 sm:$0xf]
    %542 = vst [vmem:[%s535 + $0x8] sm:$0xf] %v541
    %s543 = scalar_lea.vmem [#allocation2], 71
    %v544 = vld [vmem:[%s543] ss:$2 sm:$0xf]
    %545 = vst [vmem:[%s535 + $0xc] sm:$0xf] %v544
    %s546 = scalar_lea.vmem [#allocation2], 111
    %v547 = vld [vmem:[%s546] ss:$2 sm:$0xf]
    %548 = vst [vmem:[%s535 + $0x10] sm:$0xf] %v547
    %s549 = scalar_lea.vmem [#allocation2], 131
    %v550 = vld [vmem:[%s549] ss:$2 sm:$0xf]
    %551 = vst [vmem:[%s535 + $0x14] sm:$0xf] %v550
    %s552 = scalar_lea.vmem [#allocation2], 151
    %v553 = vld [vmem:[%s552] ss:$2 sm:$0xf]
    %554 = vst [vmem:[%s535 + $0x18] sm:$0xf] %v553
    %s555 = scalar_lea.vmem [#allocation2], 171
    %v556 = vld [vmem:[%s555] ss:$2 sm:$0xf]
    %557 = vst [vmem:[%s535 + $0x1c] sm:$0xf] %v556
    %s558 = scalar_lea.vmem [#allocation2], 12
    %v559 = vld [vmem:[%s558] ss:$2 sm:$0xf]
    %s560 = scalar_lea.vmem [#allocation4], 160
    %561 = vst [vmem:[%s560] sm:$0xf] %v559
    %s562 = scalar_lea.vmem [#allocation2], 32
    %v563 = vld [vmem:[%s562] ss:$2 sm:$0xf]
    %564 = vst [vmem:[%s560 + $0x4] sm:$0xf] %v563
    %s565 = scalar_lea.vmem [#allocation2], 52
    %v566 = vld [vmem:[%s565] ss:$2 sm:$0xf]
    %567 = vst [vmem:[%s560 + $0x8] sm:$0xf] %v566
    %s568 = scalar_lea.vmem [#allocation2], 72
    %v569 = vld [vmem:[%s568] ss:$2 sm:$0xf]
    %570 = vst [vmem:[%s560 + $0xc] sm:$0xf] %v569
    %s571 = scalar_lea.vmem [#allocation2], 112
    %v572 = vld [vmem:[%s571] ss:$2 sm:$0xf]
    %573 = vst [vmem:[%s560 + $0x10] sm:$0xf] %v572
    %s574 = scalar_lea.vmem [#allocation2], 132
    %v575 = vld [vmem:[%s574] ss:$2 sm:$0xf]
    %576 = vst [vmem:[%s560 + $0x14] sm:$0xf] %v575
    %s577 = scalar_lea.vmem [#allocation2], 152
    %v578 = vld [vmem:[%s577] ss:$2 sm:$0xf]
    %579 = vst [vmem:[%s560 + $0x18] sm:$0xf] %v578
    %s580 = scalar_lea.vmem [#allocation2], 172
    %v581 = vld [vmem:[%s580] ss:$2 sm:$0xf]
    %582 = vst [vmem:[%s560 + $0x1c] sm:$0xf] %v581
    %v583 = vld [vmem:[%s437] ss:$2 sm:$0xf]
    %s584 = scalar_lea.vmem [#allocation4], 192
    %585 = vst [vmem:[%s584] sm:$0xf] %v583
    %v586 = vld [vmem:[%s440] ss:$2 sm:$0xf]
    %587 = vst [vmem:[%s584 + $0x4] sm:$0xf] %v586
    %v588 = vld [vmem:[%s443] ss:$2 sm:$0xf]
    %589 = vst [vmem:[%s584 + $0x8] sm:$0xf] %v588
    %s590 = scalar_lea.vmem [#allocation2], 80
    %v591 = vld [vmem:[%s590] ss:$2 sm:$0xf]
    %592 = vst [vmem:[%s584 + $0xc] sm:$0xf] %v591
    %v593 = vld [vmem:[%s449] ss:$2 sm:$0xf]
    %594 = vst [vmem:[%s584 + $0x10] sm:$0xf] %v593
    %v595 = vld [vmem:[%s452] ss:$2 sm:$0xf]
    %596 = vst [vmem:[%s584 + $0x14] sm:$0xf] %v595
    %v597 = vld [vmem:[%s455] ss:$2 sm:$0xf]
    %598 = vst [vmem:[%s584 + $0x18] sm:$0xf] %v597
    %s599 = scalar_lea.vmem [#allocation2], 180
    %v600 = vld [vmem:[%s599] ss:$2 sm:$0xf]
    %601 = vst [vmem:[%s584 + $0x1c] sm:$0xf] %v600
    %v602 = vld [vmem:[%s462] ss:$2 sm:$0xf]
    %s603 = scalar_lea.vmem [#allocation4], 224
    %604 = vst [vmem:[%s603] sm:$0xf] %v602
    %v605 = vld [vmem:[%s465] ss:$2 sm:$0xf]
    %606 = vst [vmem:[%s603 + $0x4] sm:$0xf] %v605
    %v607 = vld [vmem:[%s468] ss:$2 sm:$0xf]
    %608 = vst [vmem:[%s603 + $0x8] sm:$0xf] %v607
    %s609 = scalar_lea.vmem [#allocation2], 81
    %v610 = vld [vmem:[%s609] ss:$2 sm:$0xf]
    %611 = vst [vmem:[%s603 + $0xc] sm:$0xf] %v610
    %v612 = vld [vmem:[%s474] ss:$2 sm:$0xf]
    %613 = vst [vmem:[%s603 + $0x10] sm:$0xf] %v612
    %v614 = vld [vmem:[%s477] ss:$2 sm:$0xf]
    %615 = vst [vmem:[%s603 + $0x14] sm:$0xf] %v614
    %v616 = vld [vmem:[%s480] ss:$2 sm:$0xf]
    %617 = vst [vmem:[%s603 + $0x18] sm:$0xf] %v616
    %s618 = scalar_lea.vmem [#allocation2], 181
    %v619 = vld [vmem:[%s618] ss:$2 sm:$0xf]
    %620 = vst [vmem:[%s603 + $0x1c] sm:$0xf] %v619
    %v621 = vld [vmem:[%s487] ss:$2 sm:$0xf]
    %s622 = scalar_lea.vmem [#allocation4], 256
    %623 = vst [vmem:[%s622] sm:$0xf] %v621
    %v624 = vld [vmem:[%s490] ss:$2 sm:$0xf]
    %625 = vst [vmem:[%s622 + $0x4] sm:$0xf] %v624
    %v626 = vld [vmem:[%s493] ss:$2 sm:$0xf]
    %627 = vst [vmem:[%s622 + $0x8] sm:$0xf] %v626
    %s628 = scalar_lea.vmem [#allocation2], 82
    %v629 = vld [vmem:[%s628] ss:$2 sm:$0xf]
    %630 = vst [vmem:[%s622 + $0xc] sm:$0xf] %v629
    %v631 = vld [vmem:[%s499] ss:$2 sm:$0xf]
    %632 = vst [vmem:[%s622 + $0x10] sm:$0xf] %v631
    %v633 = vld [vmem:[%s502] ss:$2 sm:$0xf]
    %634 = vst [vmem:[%s622 + $0x14] sm:$0xf] %v633
    %v635 = vld [vmem:[%s505] ss:$2 sm:$0xf]
    %636 = vst [vmem:[%s622 + $0x18] sm:$0xf] %v635
    %s637 = scalar_lea.vmem [#allocation2], 182
    %v638 = vld [vmem:[%s637] ss:$2 sm:$0xf]
    %639 = vst [vmem:[%s622 + $0x1c] sm:$0xf] %v638
    %v640 = vld [vmem:[#allocation4] sm:$0xff]
    %v641 = vld [vmem:[#allocation4 + $0x8] sm:$0xff]
    %v642 = vld [vmem:[#allocation4 + $0x10] sm:$0xff]
    %v643 = vld [vmem:[#allocation4 + $0x18] sm:$0xff]
    %v644 = vld [vmem:[%s4] sm:$0xff]
    %v645 = vld [vmem:[%s4 + $0x8] sm:$0xff]
    %v646 = vld [vmem:[%s4 + $0x10] sm:$0xff]
    %v647 = vld [vmem:[%s4 + $0x18] sm:$0xff]
    %v648 = vld [vmem:[%s4 + $0x20] sm:$0xff]
    %v649 = vld [vmem:[%s4 + $0x28] sm:$0xff]
    %v650 = vld [vmem:[%s4 + $0x30] sm:$0xff]
    %v651 = vld [vmem:[%s4 + $0x38] sm:$0xff]
    %v652 = vld [vmem:[%s4 + $0x40] sm:$0xff]
    %v653 = vld [vmem:[%s4 + $0x48] sm:$0xff]
    %v654 = vld [vmem:[%s4 + $0x50] sm:$0xff]
    %v655 = vld [vmem:[%s4 + $0x58] sm:$0xff]
    %v656 = vld [vmem:[%s4 + $0x60] sm:$0xff]
    %v657 = vld [vmem:[%s4 + $0x68] sm:$0xff]
    %v658 = vld [vmem:[%s4 + $0x70] sm:$0xff]
    %v659 = vld [vmem:[%s4 + $0x78] sm:$0xff]
    %v660 = vld [vmem:[%s460] sm:$0xff]
    %v661 = vld [vmem:[%s460 + $0x8] sm:$0xff]
    %v662 = vld [vmem:[%s460 + $0x10] sm:$0xff]
    %v663 = vld [vmem:[%s460 + $0x18] sm:$0xff]
    %s664 = scalar_lea.vmem %s4, 128
    %v665 = vld [vmem:[%s664] sm:$0xff]
    %v666 = vld [vmem:[%s664 + $0x8] sm:$0xff]
    %v667 = vld [vmem:[%s664 + $0x10] sm:$0xff]
    %v668 = vld [vmem:[%s664 + $0x18] sm:$0xff]
    %v669 = vld [vmem:[%s664 + $0x20] sm:$0xff]
    %v670 = vld [vmem:[%s664 + $0x28] sm:$0xff]
    %v671 = vld [vmem:[%s664 + $0x30] sm:$0xff]
    %v672 = vld [vmem:[%s664 + $0x38] sm:$0xff]
    %v673 = vld [vmem:[%s664 + $0x40] sm:$0xff]
    %v674 = vld [vmem:[%s664 + $0x48] sm:$0xff]
    %v675 = vld [vmem:[%s664 + $0x50] sm:$0xff]
    %v676 = vld [vmem:[%s664 + $0x58] sm:$0xff]
    %v677 = vld [vmem:[%s664 + $0x60] sm:$0xff]
    %v678 = vld [vmem:[%s664 + $0x68] sm:$0xff]
    %v679 = vld [vmem:[%s664 + $0x70] sm:$0xff]
    %v680 = vld [vmem:[%s664 + $0x78] sm:$0xff]
    %681 = vmatprep.subr.mxu0 0.0
    %682 = vmatpush1.msra.mxu0 %v665
    %683 = vmatprep.subr.mxu0 0.0
    %684 = vmatpush1.msra.mxu0 %v666
    %685 = vmatprep.subr.mxu0 0.0
    %686 = vmatpush1.msra.mxu0 %v667
    %687 = vmatprep.subr.mxu0 0.0
    %688 = vmatpush1.msra.mxu0 %v668
    %689 = vmatprep.subr.mxu0 0.0
    %690 = vmatpush1.msra.mxu0 %v669
    %691 = vmatprep.subr.mxu0 0.0
    %692 = vmatpush1.msra.mxu0 %v670
    %693 = vmatprep.subr.mxu0 0.0
    %694 = vmatpush1.msra.mxu0 %v671
    %695 = vmatprep.subr.mxu0 0.0
    %696 = vmatpush1.msra.mxu0 %v672
    %697 = vmatprep.subr.mxu0 0.0
    %698 = vmatpush1.msra.mxu0 %v673
    %699 = vmatprep.subr.mxu0 0.0
    %700 = vmatpush1.msra.mxu0 %v674
    %701 = vmatprep.subr.mxu0 0.0
    %702 = vmatpush1.msra.mxu0 %v675
    %703 = vmatprep.subr.mxu0 0.0
    %704 = vmatpush1.msra.mxu0 %v676
    %705 = vmatprep.subr.mxu0 0.0
    %706 = vmatpush1.msra.mxu0 %v677
    %707 = vmatprep.subr.mxu0 0.0
    %708 = vmatpush1.msra.mxu0 %v678
    %709 = vmatprep.subr.mxu0 0.0
    %710 = vmatpush1.msra.mxu0 %v679
    %711 = vmatprep.subr.mxu0 0.0
    %712 = vmatpush1.msra.mxu0 %v680
    %713 = vmatprep.subr.mxu0 0.0
    %714 = vmatpush1.msra.mxu0 0.0
    %715 = vmatprep.subr.mxu0 0.0
    %716 = vmatpush1.msra.mxu0 0.0
    %717 = vmatprep.subr.mxu0 0.0
    %718 = vmatpush1.msra.mxu0 0.0
    %719 = vmatprep.subr.mxu0 0.0
    %720 = vmatpush1.msra.mxu0 0.0
    %721 = vmatprep.subr.mxu0 0.0
    %722 = vmatpush1.msra.mxu0 0.0
    %723 = vmatprep.subr.mxu0 0.0
    %724 = vmatpush1.msra.mxu0 0.0
    %725 = vmatprep.subr.mxu0 0.0
    %726 = vmatpush1.msra.mxu0 0.0
    %727 = vmatprep.subr.mxu0 0.0
    %728 = vmatpush1.msra.mxu0 0.0
    %729 = vmatprep.subr.mxu0 0.0
    %730 = vmatpush1.msra.mxu0 0.0
    %731 = vmatprep.subr.mxu0 0.0
    %732 = vmatpush1.msra.mxu0 0.0
    %733 = vmatprep.subr.mxu0 0.0
    %734 = vmatpush1.msra.mxu0 0.0
    %735 = vmatprep.subr.mxu0 0.0
    %736 = vmatpush1.msra.mxu0 0.0
    %737 = vmatprep.subr.mxu0 0.0
    %738 = vmatpush1.msra.mxu0 0.0
    %739 = vmatprep.subr.mxu0 0.0
    %740 = vmatpush1.msra.mxu0 0.0
    %741 = vmatprep.subr.mxu0 0.0
    %742 = vmatpush1.msra.mxu0 0.0
    %743 = vmatprep.subr.mxu0 0.0
    %744 = vmatpush1.msra.mxu0 0.0
    %745 = vmatprep.mubr.f32.mxu0 0.0
    %746 = vmatmul.mubr.f32.gmra.mrb[0].mxu0 %v660
    %v747 = vpop.f32.mrb[0].mxu0
    %v748 = vadd.f32 0.0, %v747
    %v749 = vpop.f32.mrb[0].mxu0
    %750 = vmatprep.mubr.f32.mxu0 0.0
    %751 = vmatmul.mubr.f32.gmra.mrb[0].mxu0 %v661
    %v752 = vpop.f32.mrb[0].mxu0
    %v753 = vadd.f32 0.0, %v752
    %v754 = vpop.f32.mrb[0].mxu0
    %755 = vmatprep.mubr.f32.mxu0 0.0
    %756 = vmatmul.mubr.f32.gmra.mrb[0].mxu0 %v662
    %v757 = vpop.f32.mrb[0].mxu0
    %v758 = vadd.f32 0.0, %v757
    %v759 = vpop.f32.mrb[0].mxu0
    %760 = vmatprep.mubr.f32.mxu0 0.0
    %761 = vmatmul.mubr.f32.gmra.mrb[0].mxu0 %v663
    %v762 = vpop.f32.mrb[0].mxu0
    %v763 = vadd.f32 0.0, %v762
    %v764 = vpop.f32.mrb[0].mxu0
    %765 = vdwg.mxu0
    %766 = vmatprep.subr.mxu0 0.0
    %767 = vmatpush1.msra.mxu0 %v644
    %768 = vmatprep.subr.mxu0 0.0
    %769 = vmatpush1.msra.mxu0 %v645
    %770 = vmatprep.subr.mxu0 0.0
    %771 = vmatpush1.msra.mxu0 %v646
    %772 = vmatprep.subr.mxu0 0.0
    %773 = vmatpush1.msra.mxu0 %v647
    %774 = vmatprep.subr.mxu0 0.0
    %775 = vmatpush1.msra.mxu0 %v648
    %776 = vmatprep.subr.mxu0 0.0
    %777 = vmatpush1.msra.mxu0 %v649
    %778 = vmatprep.subr.mxu0 0.0
    %779 = vmatpush1.msra.mxu0 %v650
    %780 = vmatprep.subr.mxu0 0.0
    %781 = vmatpush1.msra.mxu0 %v651
    %782 = vmatprep.subr.mxu0 0.0
    %783 = vmatpush1.msra.mxu0 %v652
    %784 = vmatprep.subr.mxu0 0.0
    %785 = vmatpush1.msra.mxu0 %v653
    %786 = vmatprep.subr.mxu0 0.0
    %787 = vmatpush1.msra.mxu0 %v654
    %788 = vmatprep.subr.mxu0 0.0
    %789 = vmatpush1.msra.mxu0 %v655
    %790 = vmatprep.subr.mxu0 0.0
    %791 = vmatpush1.msra.mxu0 %v656
    %792 = vmatprep.subr.mxu0 0.0
    %793 = vmatpush1.msra.mxu0 %v657
    %794 = vmatprep.subr.mxu0 0.0
    %795 = vmatpush1.msra.mxu0 %v658
    %796 = vmatprep.subr.mxu0 0.0
    %797 = vmatpush1.msra.mxu0 %v659
    %798 = vmatprep.subr.mxu0 0.0
    %799 = vmatpush1.msra.mxu0 0.0
    %800 = vmatprep.subr.mxu0 0.0
    %801 = vmatpush1.msra.mxu0 0.0
    %802 = vmatprep.subr.mxu0 0.0
    %803 = vmatpush1.msra.mxu0 0.0
    %804 = vmatprep.subr.mxu0 0.0
    %805 = vmatpush1.msra.mxu0 0.0
    %806 = vmatprep.subr.mxu0 0.0
    %807 = vmatpush1.msra.mxu0 0.0
    %808 = vmatprep.subr.mxu0 0.0
    %809 = vmatpush1.msra.mxu0 0.0
    %810 = vmatprep.subr.mxu0 0.0
    %811 = vmatpush1.msra.mxu0 0.0
    %812 = vmatprep.subr.mxu0 0.0
    %813 = vmatpush1.msra.mxu0 0.0
    %814 = vmatprep.subr.mxu0 0.0
    %815 = vmatpush1.msra.mxu0 0.0
    %816 = vmatprep.subr.mxu0 0.0
    %817 = vmatpush1.msra.mxu0 0.0
    %818 = vmatprep.subr.mxu0 0.0
    %819 = vmatpush1.msra.mxu0 0.0
    %820 = vmatprep.subr.mxu0 0.0
    %821 = vmatpush1.msra.mxu0 0.0
    %822 = vmatprep.subr.mxu0 0.0
    %823 = vmatpush1.msra.mxu0 0.0
    %824 = vmatprep.subr.mxu0 0.0
    %825 = vmatpush1.msra.mxu0 0.0
    %826 = vmatprep.subr.mxu0 0.0
    %827 = vmatpush1.msra.mxu0 0.0
    %828 = vmatprep.subr.mxu0 0.0
    %829 = vmatpush1.msra.mxu0 0.0
    %830 = vmatprep.mubr.f32.mxu0 0.0
    %831 = vmatmul.mubr.f32.gmra.mrb[0].mxu0 %v640
    %v832 = vpop.f32.mrb[0].mxu0
    %v833 = vadd.f32 %v748, %v832
    %v834 = vpop.f32.mrb[0].mxu0
    %835 = vmatprep.mubr.f32.mxu0 0.0
    %836 = vmatmul.mubr.f32.gmra.mrb[0].mxu0 %v641
    %v837 = vpop.f32.mrb[0].mxu0
    %v838 = vadd.f32 %v753, %v837
    %v839 = vpop.f32.mrb[0].mxu0
    %840 = vmatprep.mubr.f32.mxu0 0.0
    %841 = vmatmul.mubr.f32.gmra.mrb[0].mxu0 %v642
    %v842 = vpop.f32.mrb[0].mxu0
    %v843 = vadd.f32 %v758, %v842
    %v844 = vpop.f32.mrb[0].mxu0
    %845 = vmatprep.mubr.f32.mxu0 0.0
    %846 = vmatmul.mubr.f32.gmra.mrb[0].mxu0 %v643
    %v847 = vpop.f32.mrb[0].mxu0
    %v848 = vadd.f32 %v763, %v847
    %v849 = vpop.f32.mrb[0].mxu0
    %850 = vdwg.mxu0
    %v851 = vld [vmem:[%s485] sm:$0xff]
    %v852 = vld [vmem:[%s485 + $0x8] sm:$0xff]
    %v853 = vld [vmem:[%s485 + $0x10] sm:$0xff]
    %v854 = vld [vmem:[%s485 + $0x18] sm:$0xff]
    %s855 = scalar_lea.vmem %s4, 256
    %v856 = vld [vmem:[%s855] sm:$0xff]
    %v857 = vld [vmem:[%s855 + $0x8] sm:$0xff]
    %v858 = vld [vmem:[%s855 + $0x10] sm:$0xff]
    %v859 = vld [vmem:[%s855 + $0x18] sm:$0xff]
    %v860 = vld [vmem:[%s855 + $0x20] sm:$0xff]
    %v861 = vld [vmem:[%s855 + $0x28] sm:$0xff]
    %v862 = vld [vmem:[%s855 + $0x30] sm:$0xff]
    %v863 = vld [vmem:[%s855 + $0x38] sm:$0xff]
    %v864 = vld [vmem:[%s855 + $0x40] sm:$0xff]
    %v865 = vld [vmem:[%s855 + $0x48] sm:$0xff]
    %v866 = vld [vmem:[%s855 + $0x50] sm:$0xff]
    %v867 = vld [vmem:[%s855 + $0x58] sm:$0xff]
    %v868 = vld [vmem:[%s855 + $0x60] sm:$0xff]
    %v869 = vld [vmem:[%s855 + $0x68] sm:$0xff]
    %v870 = vld [vmem:[%s855 + $0x70] sm:$0xff]
    %v871 = vld [vmem:[%s855 + $0x78] sm:$0xff]
    %872 = vmatprep.subr.mxu0 0.0
    %873 = vmatpush1.msra.mxu0 %v856
    %874 = vmatprep.subr.mxu0 0.0
    %875 = vmatpush1.msra.mxu0 %v857
    %876 = vmatprep.subr.mxu0 0.0
    %877 = vmatpush1.msra.mxu0 %v858
    %878 = vmatprep.subr.mxu0 0.0
    %879 = vmatpush1.msra.mxu0 %v859
    %880 = vmatprep.subr.mxu0 0.0
    %881 = vmatpush1.msra.mxu0 %v860
    %882 = vmatprep.subr.mxu0 0.0
    %883 = vmatpush1.msra.mxu0 %v861
    %884 = vmatprep.subr.mxu0 0.0
    %885 = vmatpush1.msra.mxu0 %v862
    %886 = vmatprep.subr.mxu0 0.0
    %887 = vmatpush1.msra.mxu0 %v863
    %888 = vmatprep.subr.mxu0 0.0
    %889 = vmatpush1.msra.mxu0 %v864
    %890 = vmatprep.subr.mxu0 0.0
    %891 = vmatpush1.msra.mxu0 %v865
    %892 = vmatprep.subr.mxu0 0.0
    %893 = vmatpush1.msra.mxu0 %v866
    %894 = vmatprep.subr.mxu0 0.0
    %895 = vmatpush1.msra.mxu0 %v867
    %896 = vmatprep.subr.mxu0 0.0
    %897 = vmatpush1.msra.mxu0 %v868
    %898 = vmatprep.subr.mxu0 0.0
    %899 = vmatpush1.msra.mxu0 %v869
    %900 = vmatprep.subr.mxu0 0.0
    %901 = vmatpush1.msra.mxu0 %v870
    %902 = vmatprep.subr.mxu0 0.0
    %903 = vmatpush1.msra.mxu0 %v871
    %904 = vmatprep.subr.mxu0 0.0
    %905 = vmatpush1.msra.mxu0 0.0
    %906 = vmatprep.subr.mxu0 0.0
    %907 = vmatpush1.msra.mxu0 0.0
    %908 = vmatprep.subr.mxu0 0.0
    %909 = vmatpush1.msra.mxu0 0.0
    %910 = vmatprep.subr.mxu0 0.0
    %911 = vmatpush1.msra.mxu0 0.0
    %912 = vmatprep.subr.mxu0 0.0
    %913 = vmatpush1.msra.mxu0 0.0
    %914 = vmatprep.subr.mxu0 0.0
    %915 = vmatpush1.msra.mxu0 0.0
    %916 = vmatprep.subr.mxu0 0.0
    %917 = vmatpush1.msra.mxu0 0.0
    %918 = vmatprep.subr.mxu0 0.0
    %919 = vmatpush1.msra.mxu0 0.0
    %920 = vmatprep.subr.mxu0 0.0
    %921 = vmatpush1.msra.mxu0 0.0
    %922 = vmatprep.subr.mxu0 0.0
    %923 = vmatpush1.msra.mxu0 0.0
    %924 = vmatprep.subr.mxu0 0.0
    %925 = vmatpush1.msra.mxu0 0.0
    %926 = vmatprep.subr.mxu0 0.0
    %927 = vmatpush1.msra.mxu0 0.0
    %928 = vmatprep.subr.mxu0 0.0
    %929 = vmatpush1.msra.mxu0 0.0
    %930 = vmatprep.subr.mxu0 0.0
    %931 = vmatpush1.msra.mxu0 0.0
    %932 = vmatprep.subr.mxu0 0.0
    %933 = vmatpush1.msra.mxu0 0.0
    %934 = vmatprep.subr.mxu0 0.0
    %935 = vmatpush1.msra.mxu0 0.0
    %936 = vmatprep.mubr.f32.mxu0 0.0
    %937 = vmatmul.mubr.f32.gmra.mrb[0].mxu0 %v851
    %v938 = vpop.f32.mrb[0].mxu0
    %v939 = vadd.f32 0.0, %v938
    %v940 = vpop.f32.mrb[0].mxu0
    %941 = vmatprep.mubr.f32.mxu0 0.0
    %942 = vmatmul.mubr.f32.gmra.mrb[0].mxu0 %v852
    %v943 = vpop.f32.mrb[0].mxu0
    %v944 = vadd.f32 0.0, %v943
    %v945 = vpop.f32.mrb[0].mxu0
    %946 = vmatprep.mubr.f32.mxu0 0.0
    %947 = vmatmul.mubr.f32.gmra.mrb[0].mxu0 %v853
    %v948 = vpop.f32.mrb[0].mxu0
    %v949 = vadd.f32 0.0, %v948
    %v950 = vpop.f32.mrb[0].mxu0
    %951 = vmatprep.mubr.f32.mxu0 0.0
    %952 = vmatmul.mubr.f32.gmra.mrb[0].mxu0 %v854
    %v953 = vpop.f32.mrb[0].mxu0
    %v954 = vadd.f32 0.0, %v953
    %v955 = vpop.f32.mrb[0].mxu0
    %956 = vdwg.mxu0
    %v957 = vadd.f32 %v833, %v939
    %v958 = vadd.f32 %v838, %v944
    %v959 = vadd.f32 %v843, %v949
    %v960 = vadd.f32 %v848, %v954
    %v961 = vld [vmem:[%s510] sm:$0xff]
    %v962 = vld [vmem:[%s510 + $0x8] sm:$0xff]
    %v963 = vld [vmem:[%s510 + $0x10] sm:$0xff]
    %v964 = vld [vmem:[%s510 + $0x18] sm:$0xff]
    %s965 = scalar_lea.vmem %s4, 384
    %v966 = vld [vmem:[%s965] sm:$0xff]
    %v967 = vld [vmem:[%s965 + $0x8] sm:$0xff]
    %v968 = vld [vmem:[%s965 + $0x10] sm:$0xff]
    %v969 = vld [vmem:[%s965 + $0x18] sm:$0xff]
    %v970 = vld [vmem:[%s965 + $0x20] sm:$0xff]
    %v971 = vld [vmem:[%s965 + $0x28] sm:$0xff]
    %v972 = vld [vmem:[%s965 + $0x30] sm:$0xff]
    %v973 = vld [vmem:[%s965 + $0x38] sm:$0xff]
    %v974 = vld [vmem:[%s965 + $0x40] sm:$0xff]
    %v975 = vld [vmem:[%s965 + $0x48] sm:$0xff]
    %v976 = vld [vmem:[%s965 + $0x50] sm:$0xff]
    %v977 = vld [vmem:[%s965 + $0x58] sm:$0xff]
    %v978 = vld [vmem:[%s965 + $0x60] sm:$0xff]
    %v979 = vld [vmem:[%s965 + $0x68] sm:$0xff]
    %v980 = vld [vmem:[%s965 + $0x70] sm:$0xff]
    %v981 = vld [vmem:[%s965 + $0x78] sm:$0xff]
    %982 = vmatprep.subr.mxu0 0.0
    %983 = vmatpush1.msra.mxu0 %v966
    %984 = vmatprep.subr.mxu0 0.0
    %985 = vmatpush1.msra.mxu0 %v967
    %986 = vmatprep.subr.mxu0 0.0
    %987 = vmatpush1.msra.mxu0 %v968
    %988 = vmatprep.subr.mxu0 0.0
    %989 = vmatpush1.msra.mxu0 %v969
    %990 = vmatprep.subr.mxu0 0.0
    %991 = vmatpush1.msra.mxu0 %v970
    %992 = vmatprep.subr.mxu0 0.0
    %993 = vmatpush1.msra.mxu0 %v971
    %994 = vmatprep.subr.mxu0 0.0
    %995 = vmatpush1.msra.mxu0 %v972
    %996 = vmatprep.subr.mxu0 0.0
    %997 = vmatpush1.msra.mxu0 %v973
    %998 = vmatprep.subr.mxu0 0.0
    %999 = vmatpush1.msra.mxu0 %v974
    %1000 = vmatprep.subr.mxu0 0.0
    %1001 = vmatpush1.msra.mxu0 %v975
    %1002 = vmatprep.subr.mxu0 0.0
    %1003 = vmatpush1.msra.mxu0 %v976
    %1004 = vmatprep.subr.mxu0 0.0
    %1005 = vmatpush1.msra.mxu0 %v977
    %1006 = vmatprep.subr.mxu0 0.0
    %1007 = vmatpush1.msra.mxu0 %v978
    %1008 = vmatprep.subr.mxu0 0.0
    %1009 = vmatpush1.msra.mxu0 %v979
    %1010 = vmatprep.subr.mxu0 0.0
    %1011 = vmatpush1.msra.mxu0 %v980
    %1012 = vmatprep.subr.mxu0 0.0
    %1013 = vmatpush1.msra.mxu0 %v981
    %1014 = vmatprep.subr.mxu0 0.0
    %1015 = vmatpush1.msra.mxu0 0.0
    %1016 = vmatprep.subr.mxu0 0.0
    %1017 = vmatpush1.msra.mxu0 0.0
    %1018 = vmatprep.subr.mxu0 0.0
    %1019 = vmatpush1.msra.mxu0 0.0
    %1020 = vmatprep.subr.mxu0 0.0
    %1021 = vmatpush1.msra.mxu0 0.0
    %1022 = vmatprep.subr.mxu0 0.0
    %1023 = vmatpush1.msra.mxu0 0.0
    %1024 = vmatprep.subr.mxu0 0.0
    %1025 = vmatpush1.msra.mxu0 0.0
    %1026 = vmatprep.subr.mxu0 0.0
    %1027 = vmatpush1.msra.mxu0 0.0
    %1028 = vmatprep.subr.mxu0 0.0
    %1029 = vmatpush1.msra.mxu0 0.0
    %1030 = vmatprep.subr.mxu0 0.0
    %1031 = vmatpush1.msra.mxu0 0.0
    %1032 = vmatprep.subr.mxu0 0.0
    %1033 = vmatpush1.msra.mxu0 0.0
    %1034 = vmatprep.subr.mxu0 0.0
    %1035 = vmatpush1.msra.mxu0 0.0
    %1036 = vmatprep.subr.mxu0 0.0
    %1037 = vmatpush1.msra.mxu0 0.0
    %1038 = vmatprep.subr.mxu0 0.0
    %1039 = vmatpush1.msra.mxu0 0.0
    %1040 = vmatprep.subr.mxu0 0.0
    %1041 = vmatpush1.msra.mxu0 0.0
    %1042 = vmatprep.subr.mxu0 0.0
    %1043 = vmatpush1.msra.mxu0 0.0
    %1044 = vmatprep.subr.mxu0 0.0
    %1045 = vmatpush1.msra.mxu0 0.0
    %1046 = vmatprep.mubr.f32.mxu0 0.0
    %1047 = vmatmul.mubr.f32.gmra.mrb[0].mxu0 %v961
    %v1048 = vpop.f32.mrb[0].mxu0
    %v1049 = vadd.f32 0.0, %v1048
    %v1050 = vpop.f32.mrb[0].mxu0
    %1051 = vmatprep.mubr.f32.mxu0 0.0
    %1052 = vmatmul.mubr.f32.gmra.mrb[0].mxu0 %v962
    %v1053 = vpop.f32.mrb[0].mxu0
    %v1054 = vadd.f32 0.0, %v1053
    %v1055 = vpop.f32.mrb[0].mxu0
    %1056 = vmatprep.mubr.f32.mxu0 0.0
    %1057 = vmatmul.mubr.f32.gmra.mrb[0].mxu0 %v963
    %v1058 = vpop.f32.mrb[0].mxu0
    %v1059 = vadd.f32 0.0, %v1058
    %v1060 = vpop.f32.mrb[0].mxu0
    %1061 = vmatprep.mubr.f32.mxu0 0.0
    %1062 = vmatmul.mubr.f32.gmra.mrb[0].mxu0 %v964
    %v1063 = vpop.f32.mrb[0].mxu0
    %v1064 = vadd.f32 0.0, %v1063
    %v1065 = vpop.f32.mrb[0].mxu0
    %1066 = vdwg.mxu0
    %v1067 = vadd.f32 %v957, %v1049
    %v1068 = vadd.f32 %v958, %v1054
    %v1069 = vadd.f32 %v959, %v1059
    %v1070 = vadd.f32 %v960, %v1064
    %v1071 = vld [vmem:[%s535] sm:$0xff]
    %v1072 = vld [vmem:[%s535 + $0x8] sm:$0xff]
    %v1073 = vld [vmem:[%s535 + $0x10] sm:$0xff]
    %v1074 = vld [vmem:[%s535 + $0x18] sm:$0xff]
    %s1075 = scalar_lea.vmem %s4, 512
    %v1076 = vld [vmem:[%s1075] sm:$0xff]
    %v1077 = vld [vmem:[%s1075 + $0x8] sm:$0xff]
    %v1078 = vld [vmem:[%s1075 + $0x10] sm:$0xff]
    %v1079 = vld [vmem:[%s1075 + $0x18] sm:$0xff]
    %v1080 = vld [vmem:[%s1075 + $0x20] sm:$0xff]
    %v1081 = vld [vmem:[%s1075 + $0x28] sm:$0xff]
    %v1082 = vld [vmem:[%s1075 + $0x30] sm:$0xff]
    %v1083 = vld [vmem:[%s1075 + $0x38] sm:$0xff]
    %v1084 = vld [vmem:[%s1075 + $0x40] sm:$0xff]
    %v1085 = vld [vmem:[%s1075 + $0x48] sm:$0xff]
    %v1086 = vld [vmem:[%s1075 + $0x50] sm:$0xff]
    %v1087 = vld [vmem:[%s1075 + $0x58] sm:$0xff]
    %v1088 = vld [vmem:[%s1075 + $0x60] sm:$0xff]
    %v1089 = vld [vmem:[%s1075 + $0x68] sm:$0xff]
    %v1090 = vld [vmem:[%s1075 + $0x70] sm:$0xff]
    %v1091 = vld [vmem:[%s1075 + $0x78] sm:$0xff]
    %1092 = vmatprep.subr.mxu0 0.0
    %1093 = vmatpush1.msra.mxu0 %v1076
    %1094 = vmatprep.subr.mxu0 0.0
    %1095 = vmatpush1.msra.mxu0 %v1077
    %1096 = vmatprep.subr.mxu0 0.0
    %1097 = vmatpush1.msra.mxu0 %v1078
    %1098 = vmatprep.subr.mxu0 0.0
    %1099 = vmatpush1.msra.mxu0 %v1079
    %1100 = vmatprep.subr.mxu0 0.0
    %1101 = vmatpush1.msra.mxu0 %v1080
    %1102 = vmatprep.subr.mxu0 0.0
    %1103 = vmatpush1.msra.mxu0 %v1081
    %1104 = vmatprep.subr.mxu0 0.0
    %1105 = vmatpush1.msra.mxu0 %v1082
    %1106 = vmatprep.subr.mxu0 0.0
    %1107 = vmatpush1.msra.mxu0 %v1083
    %1108 = vmatprep.subr.mxu0 0.0
    %1109 = vmatpush1.msra.mxu0 %v1084
    %1110 = vmatprep.subr.mxu0 0.0
    %1111 = vmatpush1.msra.mxu0 %v1085
    %1112 = vmatprep.subr.mxu0 0.0
    %1113 = vmatpush1.msra.mxu0 %v1086
    %1114 = vmatprep.subr.mxu0 0.0
    %1115 = vmatpush1.msra.mxu0 %v1087
    %1116 = vmatprep.subr.mxu0 0.0
    %1117 = vmatpush1.msra.mxu0 %v1088
    %1118 = vmatprep.subr.mxu0 0.0
    %1119 = vmatpush1.msra.mxu0 %v1089
    %1120 = vmatprep.subr.mxu0 0.0
    %1121 = vmatpush1.msra.mxu0 %v1090
    %1122 = vmatprep.subr.mxu0 0.0
    %1123 = vmatpush1.msra.mxu0 %v1091
    %1124 = vmatprep.subr.mxu0 0.0
    %1125 = vmatpush1.msra.mxu0 0.0
    %1126 = vmatprep.subr.mxu0 0.0
    %1127 = vmatpush1.msra.mxu0 0.0
    %1128 = vmatprep.subr.mxu0 0.0
    %1129 = vmatpush1.msra.mxu0 0.0
    %1130 = vmatprep.subr.mxu0 0.0
    %1131 = vmatpush1.msra.mxu0 0.0
    %1132 = vmatprep.subr.mxu0 0.0
    %1133 = vmatpush1.msra.mxu0 0.0
    %1134 = vmatprep.subr.mxu0 0.0
    %1135 = vmatpush1.msra.mxu0 0.0
    %1136 = vmatprep.subr.mxu0 0.0
    %1137 = vmatpush1.msra.mxu0 0.0
    %1138 = vmatprep.subr.mxu0 0.0
    %1139 = vmatpush1.msra.mxu0 0.0
    %1140 = vmatprep.subr.mxu0 0.0
    %1141 = vmatpush1.msra.mxu0 0.0
    %1142 = vmatprep.subr.mxu0 0.0
    %1143 = vmatpush1.msra.mxu0 0.0
    %1144 = vmatprep.subr.mxu0 0.0
    %1145 = vmatpush1.msra.mxu0 0.0
    %1146 = vmatprep.subr.mxu0 0.0
    %1147 = vmatpush1.msra.mxu0 0.0
    %1148 = vmatprep.subr.mxu0 0.0
    %1149 = vmatpush1.msra.mxu0 0.0
    %1150 = vmatprep.subr.mxu0 0.0
    %1151 = vmatpush1.msra.mxu0 0.0
    %1152 = vmatprep.subr.mxu0 0.0
    %1153 = vmatpush1.msra.mxu0 0.0
    %1154 = vmatprep.subr.mxu0 0.0
    %1155 = vmatpush1.msra.mxu0 0.0
    %1156 = vmatprep.mubr.f32.mxu0 0.0
    %1157 = vmatmul.mubr.f32.gmra.mrb[0].mxu0 %v1071
    %v1158 = vpop.f32.mrb[0].mxu0
    %v1159 = vadd.f32 0.0, %v1158
    %v1160 = vpop.f32.mrb[0].mxu0
    %1161 = vmatprep.mubr.f32.mxu0 0.0
    %1162 = vmatmul.mubr.f32.gmra.mrb[0].mxu0 %v1072
    %v1163 = vpop.f32.mrb[0].mxu0
    %v1164 = vadd.f32 0.0, %v1163
    %v1165 = vpop.f32.mrb[0].mxu0
    %1166 = vmatprep.mubr.f32.mxu0 0.0
    %1167 = vmatmul.mubr.f32.gmra.mrb[0].mxu0 %v1073
    %v1168 = vpop.f32.mrb[0].mxu0
    %v1169 = vadd.f32 0.0, %v1168
    %v1170 = vpop.f32.mrb[0].mxu0
    %1171 = vmatprep.mubr.f32.mxu0 0.0
    %1172 = vmatmul.mubr.f32.gmra.mrb[0].mxu0 %v1074
    %v1173 = vpop.f32.mrb[0].mxu0
    %v1174 = vadd.f32 0.0, %v1173
    %v1175 = vpop.f32.mrb[0].mxu0
    %1176 = vdwg.mxu0
    %v1177 = vadd.f32 %v1067, %v1159
    %v1178 = vadd.f32 %v1068, %v1164
    %v1179 = vadd.f32 %v1069, %v1169
    %v1180 = vadd.f32 %v1070, %v1174
    %v1181 = vld [vmem:[%s560] sm:$0xff]
    %v1182 = vld [vmem:[%s560 + $0x8] sm:$0xff]
    %v1183 = vld [vmem:[%s560 + $0x10] sm:$0xff]
    %v1184 = vld [vmem:[%s560 + $0x18] sm:$0xff]
    %s1185 = scalar_lea.vmem %s4, 640
    %v1186 = vld [vmem:[%s1185] sm:$0xff]
    %v1187 = vld [vmem:[%s1185 + $0x8] sm:$0xff]
    %v1188 = vld [vmem:[%s1185 + $0x10] sm:$0xff]
    %v1189 = vld [vmem:[%s1185 + $0x18] sm:$0xff]
    %v1190 = vld [vmem:[%s1185 + $0x20] sm:$0xff]
    %v1191 = vld [vmem:[%s1185 + $0x28] sm:$0xff]
    %v1192 = vld [vmem:[%s1185 + $0x30] sm:$0xff]
    %v1193 = vld [vmem:[%s1185 + $0x38] sm:$0xff]
    %v1194 = vld [vmem:[%s1185 + $0x40] sm:$0xff]
    %v1195 = vld [vmem:[%s1185 + $0x48] sm:$0xff]
    %v1196 = vld [vmem:[%s1185 + $0x50] sm:$0xff]
    %v1197 = vld [vmem:[%s1185 + $0x58] sm:$0xff]
    %v1198 = vld [vmem:[%s1185 + $0x60] sm:$0xff]
    %v1199 = vld [vmem:[%s1185 + $0x68] sm:$0xff]
    %v1200 = vld [vmem:[%s1185 + $0x70] sm:$0xff]
    %v1201 = vld [vmem:[%s1185 + $0x78] sm:$0xff]
    %1202 = vmatprep.subr.mxu0 0.0
    %1203 = vmatpush1.msra.mxu0 %v1186
    %1204 = vmatprep.subr.mxu0 0.0
    %1205 = vmatpush1.msra.mxu0 %v1187
    %1206 = vmatprep.subr.mxu0 0.0
    %1207 = vmatpush1.msra.mxu0 %v1188
    %1208 = vmatprep.subr.mxu0 0.0
    %1209 = vmatpush1.msra.mxu0 %v1189
    %1210 = vmatprep.subr.mxu0 0.0
    %1211 = vmatpush1.msra.mxu0 %v1190
    %1212 = vmatprep.subr.mxu0 0.0
    %1213 = vmatpush1.msra.mxu0 %v1191
    %1214 = vmatprep.subr.mxu0 0.0
    %1215 = vmatpush1.msra.mxu0 %v1192
    %1216 = vmatprep.subr.mxu0 0.0
    %1217 = vmatpush1.msra.mxu0 %v1193
    %1218 = vmatprep.subr.mxu0 0.0
    %1219 = vmatpush1.msra.mxu0 %v1194
    %1220 = vmatprep.subr.mxu0 0.0
    %1221 = vmatpush1.msra.mxu0 %v1195
    %1222 = vmatprep.subr.mxu0 0.0
    %1223 = vmatpush1.msra.mxu0 %v1196
    %1224 = vmatprep.subr.mxu0 0.0
    %1225 = vmatpush1.msra.mxu0 %v1197
    %1226 = vmatprep.subr.mxu0 0.0
    %1227 = vmatpush1.msra.mxu0 %v1198
    %1228 = vmatprep.subr.mxu0 0.0
    %1229 = vmatpush1.msra.mxu0 %v1199
    %1230 = vmatprep.subr.mxu0 0.0
    %1231 = vmatpush1.msra.mxu0 %v1200
    %1232 = vmatprep.subr.mxu0 0.0
    %1233 = vmatpush1.msra.mxu0 %v1201
    %1234 = vmatprep.subr.mxu0 0.0
    %1235 = vmatpush1.msra.mxu0 0.0
    %1236 = vmatprep.subr.mxu0 0.0
    %1237 = vmatpush1.msra.mxu0 0.0
    %1238 = vmatprep.subr.mxu0 0.0
    %1239 = vmatpush1.msra.mxu0 0.0
    %1240 = vmatprep.subr.mxu0 0.0
    %1241 = vmatpush1.msra.mxu0 0.0
    %1242 = vmatprep.subr.mxu0 0.0
    %1243 = vmatpush1.msra.mxu0 0.0
    %1244 = vmatprep.subr.mxu0 0.0
    %1245 = vmatpush1.msra.mxu0 0.0
    %1246 = vmatprep.subr.mxu0 0.0
    %1247 = vmatpush1.msra.mxu0 0.0
    %1248 = vmatprep.subr.mxu0 0.0
    %1249 = vmatpush1.msra.mxu0 0.0
    %1250 = vmatprep.subr.mxu0 0.0
    %1251 = vmatpush1.msra.mxu0 0.0
    %1252 = vmatprep.subr.mxu0 0.0
    %1253 = vmatpush1.msra.mxu0 0.0
    %1254 = vmatprep.subr.mxu0 0.0
    %1255 = vmatpush1.msra.mxu0 0.0
    %1256 = vmatprep.subr.mxu0 0.0
    %1257 = vmatpush1.msra.mxu0 0.0
    %1258 = vmatprep.subr.mxu0 0.0
    %1259 = vmatpush1.msra.mxu0 0.0
    %1260 = vmatprep.subr.mxu0 0.0
    %1261 = vmatpush1.msra.mxu0 0.0
    %1262 = vmatprep.subr.mxu0 0.0
    %1263 = vmatpush1.msra.mxu0 0.0
    %1264 = vmatprep.subr.mxu0 0.0
    %1265 = vmatpush1.msra.mxu0 0.0
    %1266 = vmatprep.mubr.f32.mxu0 0.0
    %1267 = vmatmul.mubr.f32.gmra.mrb[0].mxu0 %v1181
    %v1268 = vpop.f32.mrb[0].mxu0
    %v1269 = vadd.f32 0.0, %v1268
    %v1270 = vpop.f32.mrb[0].mxu0
    %1271 = vmatprep.mubr.f32.mxu0 0.0
    %1272 = vmatmul.mubr.f32.gmra.mrb[0].mxu0 %v1182
    %v1273 = vpop.f32.mrb[0].mxu0
    %v1274 = vadd.f32 0.0, %v1273
    %v1275 = vpop.f32.mrb[0].mxu0
    %1276 = vmatprep.mubr.f32.mxu0 0.0
    %1277 = vmatmul.mubr.f32.gmra.mrb[0].mxu0 %v1183
    %v1278 = vpop.f32.mrb[0].mxu0
    %v1279 = vadd.f32 0.0, %v1278
    %v1280 = vpop.f32.mrb[0].mxu0
    %1281 = vmatprep.mubr.f32.mxu0 0.0
    %1282 = vmatmul.mubr.f32.gmra.mrb[0].mxu0 %v1184
    %v1283 = vpop.f32.mrb[0].mxu0
    %v1284 = vadd.f32 0.0, %v1283
    %v1285 = vpop.f32.mrb[0].mxu0
    %1286 = vdwg.mxu0
    %v1287 = vadd.f32 %v1177, %v1269
    %v1288 = vadd.f32 %v1178, %v1274
    %v1289 = vadd.f32 %v1179, %v1279
    %v1290 = vadd.f32 %v1180, %v1284
    %v1291 = vld [vmem:[%s584] sm:$0xff]
    %v1292 = vld [vmem:[%s584 + $0x8] sm:$0xff]
    %v1293 = vld [vmem:[%s584 + $0x10] sm:$0xff]
    %v1294 = vld [vmem:[%s584 + $0x18] sm:$0xff]
    %s1295 = scalar_lea.vmem %s4, 768
    %v1296 = vld [vmem:[%s1295] sm:$0xff]
    %v1297 = vld [vmem:[%s1295 + $0x8] sm:$0xff]
    %v1298 = vld [vmem:[%s1295 + $0x10] sm:$0xff]
    %v1299 = vld [vmem:[%s1295 + $0x18] sm:$0xff]
    %v1300 = vld [vmem:[%s1295 + $0x20] sm:$0xff]
    %v1301 = vld [vmem:[%s1295 + $0x28] sm:$0xff]
    %v1302 = vld [vmem:[%s1295 + $0x30] sm:$0xff]
    %v1303 = vld [vmem:[%s1295 + $0x38] sm:$0xff]
    %v1304 = vld [vmem:[%s1295 + $0x40] sm:$0xff]
    %v1305 = vld [vmem:[%s1295 + $0x48] sm:$0xff]
    %v1306 = vld [vmem:[%s1295 + $0x50] sm:$0xff]
    %v1307 = vld [vmem:[%s1295 + $0x58] sm:$0xff]
    %v1308 = vld [vmem:[%s1295 + $0x60] sm:$0xff]
    %v1309 = vld [vmem:[%s1295 + $0x68] sm:$0xff]
    %v1310 = vld [vmem:[%s1295 + $0x70] sm:$0xff]
    %v1311 = vld [vmem:[%s1295 + $0x78] sm:$0xff]
    %1312 = vmatprep.subr.mxu0 0.0
    %1313 = vmatpush1.msra.mxu0 %v1296
    %1314 = vmatprep.subr.mxu0 0.0
    %1315 = vmatpush1.msra.mxu0 %v1297
    %1316 = vmatprep.subr.mxu0 0.0
    %1317 = vmatpush1.msra.mxu0 %v1298
    %1318 = vmatprep.subr.mxu0 0.0
    %1319 = vmatpush1.msra.mxu0 %v1299
    %1320 = vmatprep.subr.mxu0 0.0
    %1321 = vmatpush1.msra.mxu0 %v1300
    %1322 = vmatprep.subr.mxu0 0.0
    %1323 = vmatpush1.msra.mxu0 %v1301
    %1324 = vmatprep.subr.mxu0 0.0
    %1325 = vmatpush1.msra.mxu0 %v1302
    %1326 = vmatprep.subr.mxu0 0.0
    %1327 = vmatpush1.msra.mxu0 %v1303
    %1328 = vmatprep.subr.mxu0 0.0
    %1329 = vmatpush1.msra.mxu0 %v1304
    %1330 = vmatprep.subr.mxu0 0.0
    %1331 = vmatpush1.msra.mxu0 %v1305
    %1332 = vmatprep.subr.mxu0 0.0
    %1333 = vmatpush1.msra.mxu0 %v1306
    %1334 = vmatprep.subr.mxu0 0.0
    %1335 = vmatpush1.msra.mxu0 %v1307
    %1336 = vmatprep.subr.mxu0 0.0
    %1337 = vmatpush1.msra.mxu0 %v1308
    %1338 = vmatprep.subr.mxu0 0.0
    %1339 = vmatpush1.msra.mxu0 %v1309
    %1340 = vmatprep.subr.mxu0 0.0
    %1341 = vmatpush1.msra.mxu0 %v1310
    %1342 = vmatprep.subr.mxu0 0.0
    %1343 = vmatpush1.msra.mxu0 %v1311
    %1344 = vmatprep.subr.mxu0 0.0
    %1345 = vmatpush1.msra.mxu0 0.0
    %1346 = vmatprep.subr.mxu0 0.0
    %1347 = vmatpush1.msra.mxu0 0.0
    %1348 = vmatprep.subr.mxu0 0.0
    %1349 = vmatpush1.msra.mxu0 0.0
    %1350 = vmatprep.subr.mxu0 0.0
    %1351 = vmatpush1.msra.mxu0 0.0
    %1352 = vmatprep.subr.mxu0 0.0
    %1353 = vmatpush1.msra.mxu0 0.0
    %1354 = vmatprep.subr.mxu0 0.0
    %1355 = vmatpush1.msra.mxu0 0.0
    %1356 = vmatprep.subr.mxu0 0.0
    %1357 = vmatpush1.msra.mxu0 0.0
    %1358 = vmatprep.subr.mxu0 0.0
    %1359 = vmatpush1.msra.mxu0 0.0
    %1360 = vmatprep.subr.mxu0 0.0
    %1361 = vmatpush1.msra.mxu0 0.0
    %1362 = vmatprep.subr.mxu0 0.0
    %1363 = vmatpush1.msra.mxu0 0.0
    %1364 = vmatprep.subr.mxu0 0.0
    %1365 = vmatpush1.msra.mxu0 0.0
    %1366 = vmatprep.subr.mxu0 0.0
    %1367 = vmatpush1.msra.mxu0 0.0
    %1368 = vmatprep.subr.mxu0 0.0
    %1369 = vmatpush1.msra.mxu0 0.0
    %1370 = vmatprep.subr.mxu0 0.0
    %1371 = vmatpush1.msra.mxu0 0.0
    %1372 = vmatprep.subr.mxu0 0.0
    %1373 = vmatpush1.msra.mxu0 0.0
    %1374 = vmatprep.subr.mxu0 0.0
    %1375 = vmatpush1.msra.mxu0 0.0
    %1376 = vmatprep.mubr.f32.mxu0 0.0
    %1377 = vmatmul.mubr.f32.gmra.mrb[0].mxu0 %v1291
    %v1378 = vpop.f32.mrb[0].mxu0
    %v1379 = vadd.f32 0.0, %v1378
    %v1380 = vpop.f32.mrb[0].mxu0
    %1381 = vmatprep.mubr.f32.mxu0 0.0
    %1382 = vmatmul.mubr.f32.gmra.mrb[0].mxu0 %v1292
    %v1383 = vpop.f32.mrb[0].mxu0
    %v1384 = vadd.f32 0.0, %v1383
    %v1385 = vpop.f32.mrb[0].mxu0
    %1386 = vmatprep.mubr.f32.mxu0 0.0
    %1387 = vmatmul.mubr.f32.gmra.mrb[0].mxu0 %v1293
    %v1388 = vpop.f32.mrb[0].mxu0
    %v1389 = vadd.f32 0.0, %v1388
    %v1390 = vpop.f32.mrb[0].mxu0
    %1391 = vmatprep.mubr.f32.mxu0 0.0
    %1392 = vmatmul.mubr.f32.gmra.mrb[0].mxu0 %v1294
    %v1393 = vpop.f32.mrb[0].mxu0
    %v1394 = vadd.f32 0.0, %v1393
    %v1395 = vpop.f32.mrb[0].mxu0
    %1396 = vdwg.mxu0
    %v1397 = vadd.f32 %v1287, %v1379
    %v1398 = vadd.f32 %v1288, %v1384
    %v1399 = vadd.f32 %v1289, %v1389
    %v1400 = vadd.f32 %v1290, %v1394
    %v1401 = vld [vmem:[%s603] sm:$0xff]
    %v1402 = vld [vmem:[%s603 + $0x8] sm:$0xff]
    %v1403 = vld [vmem:[%s603 + $0x10] sm:$0xff]
    %v1404 = vld [vmem:[%s603 + $0x18] sm:$0xff]
    %s1405 = scalar_lea.vmem %s4, 896
    %v1406 = vld [vmem:[%s1405] sm:$0xff]
    %v1407 = vld [vmem:[%s1405 + $0x8] sm:$0xff]
    %v1408 = vld [vmem:[%s1405 + $0x10] sm:$0xff]
    %v1409 = vld [vmem:[%s1405 + $0x18] sm:$0xff]
    %v1410 = vld [vmem:[%s1405 + $0x20] sm:$0xff]
    %v1411 = vld [vmem:[%s1405 + $0x28] sm:$0xff]
    %v1412 = vld [vmem:[%s1405 + $0x30] sm:$0xff]
    %v1413 = vld [vmem:[%s1405 + $0x38] sm:$0xff]
    %v1414 = vld [vmem:[%s1405 + $0x40] sm:$0xff]
    %v1415 = vld [vmem:[%s1405 + $0x48] sm:$0xff]
    %v1416 = vld [vmem:[%s1405 + $0x50] sm:$0xff]
    %v1417 = vld [vmem:[%s1405 + $0x58] sm:$0xff]
    %v1418 = vld [vmem:[%s1405 + $0x60] sm:$0xff]
    %v1419 = vld [vmem:[%s1405 + $0x68] sm:$0xff]
    %v1420 = vld [vmem:[%s1405 + $0x70] sm:$0xff]
    %v1421 = vld [vmem:[%s1405 + $0x78] sm:$0xff]
    %1422 = vmatprep.subr.mxu0 0.0
    %1423 = vmatpush1.msra.mxu0 %v1406
    %1424 = vmatprep.subr.mxu0 0.0
    %1425 = vmatpush1.msra.mxu0 %v1407
    %1426 = vmatprep.subr.mxu0 0.0
    %1427 = vmatpush1.msra.mxu0 %v1408
    %1428 = vmatprep.subr.mxu0 0.0
    %1429 = vmatpush1.msra.mxu0 %v1409
    %1430 = vmatprep.subr.mxu0 0.0
    %1431 = vmatpush1.msra.mxu0 %v1410
    %1432 = vmatprep.subr.mxu0 0.0
    %1433 = vmatpush1.msra.mxu0 %v1411
    %1434 = vmatprep.subr.mxu0 0.0
    %1435 = vmatpush1.msra.mxu0 %v1412
    %1436 = vmatprep.subr.mxu0 0.0
    %1437 = vmatpush1.msra.mxu0 %v1413
    %1438 = vmatprep.subr.mxu0 0.0
    %1439 = vmatpush1.msra.mxu0 %v1414
    %1440 = vmatprep.subr.mxu0 0.0
    %1441 = vmatpush1.msra.mxu0 %v1415
    %1442 = vmatprep.subr.mxu0 0.0
    %1443 = vmatpush1.msra.mxu0 %v1416
    %1444 = vmatprep.subr.mxu0 0.0
    %1445 = vmatpush1.msra.mxu0 %v1417
    %1446 = vmatprep.subr.mxu0 0.0
    %1447 = vmatpush1.msra.mxu0 %v1418
    %1448 = vmatprep.subr.mxu0 0.0
    %1449 = vmatpush1.msra.mxu0 %v1419
    %1450 = vmatprep.subr.mxu0 0.0
    %1451 = vmatpush1.msra.mxu0 %v1420
    %1452 = vmatprep.subr.mxu0 0.0
    %1453 = vmatpush1.msra.mxu0 %v1421
    %1454 = vmatprep.subr.mxu0 0.0
    %1455 = vmatpush1.msra.mxu0 0.0
    %1456 = vmatprep.subr.mxu0 0.0
    %1457 = vmatpush1.msra.mxu0 0.0
    %1458 = vmatprep.subr.mxu0 0.0
    %1459 = vmatpush1.msra.mxu0 0.0
    %1460 = vmatprep.subr.mxu0 0.0
    %1461 = vmatpush1.msra.mxu0 0.0
    %1462 = vmatprep.subr.mxu0 0.0
    %1463 = vmatpush1.msra.mxu0 0.0
    %1464 = vmatprep.subr.mxu0 0.0
    %1465 = vmatpush1.msra.mxu0 0.0
    %1466 = vmatprep.subr.mxu0 0.0
    %1467 = vmatpush1.msra.mxu0 0.0
    %1468 = vmatprep.subr.mxu0 0.0
    %1469 = vmatpush1.msra.mxu0 0.0
    %1470 = vmatprep.subr.mxu0 0.0
    %1471 = vmatpush1.msra.mxu0 0.0
    %1472 = vmatprep.subr.mxu0 0.0
    %1473 = vmatpush1.msra.mxu0 0.0
    %1474 = vmatprep.subr.mxu0 0.0
    %1475 = vmatpush1.msra.mxu0 0.0
    %1476 = vmatprep.subr.mxu0 0.0
    %1477 = vmatpush1.msra.mxu0 0.0
    %1478 = vmatprep.subr.mxu0 0.0
    %1479 = vmatpush1.msra.mxu0 0.0
    %1480 = vmatprep.subr.mxu0 0.0
    %1481 = vmatpush1.msra.mxu0 0.0
    %1482 = vmatprep.subr.mxu0 0.0
    %1483 = vmatpush1.msra.mxu0 0.0
    %1484 = vmatprep.subr.mxu0 0.0
    %1485 = vmatpush1.msra.mxu0 0.0
    %1486 = vmatprep.mubr.f32.mxu0 0.0
    %1487 = vmatmul.mubr.f32.gmra.mrb[0].mxu0 %v1401
    %v1488 = vpop.f32.mrb[0].mxu0
    %v1489 = vadd.f32 0.0, %v1488
    %v1490 = vpop.f32.mrb[0].mxu0
    %1491 = vmatprep.mubr.f32.mxu0 0.0
    %1492 = vmatmul.mubr.f32.gmra.mrb[0].mxu0 %v1402
    %v1493 = vpop.f32.mrb[0].mxu0
    %v1494 = vadd.f32 0.0, %v1493
    %v1495 = vpop.f32.mrb[0].mxu0
    %1496 = vmatprep.mubr.f32.mxu0 0.0
    %1497 = vmatmul.mubr.f32.gmra.mrb[0].mxu0 %v1403
    %v1498 = vpop.f32.mrb[0].mxu0
    %v1499 = vadd.f32 0.0, %v1498
    %v1500 = vpop.f32.mrb[0].mxu0
    %1501 = vmatprep.mubr.f32.mxu0 0.0
    %1502 = vmatmul.mubr.f32.gmra.mrb[0].mxu0 %v1404
    %v1503 = vpop.f32.mrb[0].mxu0
    %v1504 = vadd.f32 0.0, %v1503
    %v1505 = vpop.f32.mrb[0].mxu0
    %1506 = vdwg.mxu0
    %v1507 = vadd.f32 %v1397, %v1489
    %v1508 = vadd.f32 %v1398, %v1494
    %v1509 = vadd.f32 %v1399, %v1499
    %v1510 = vadd.f32 %v1400, %v1504
    %v1511 = vld [vmem:[%s622] sm:$0xff]
    %v1512 = vld [vmem:[%s622 + $0x8] sm:$0xff]
    %v1513 = vld [vmem:[%s622 + $0x10] sm:$0xff]
    %v1514 = vld [vmem:[%s622 + $0x18] sm:$0xff]
    %s1515 = scalar_lea.vmem %s4, 1024
    %v1516 = vld [vmem:[%s1515] sm:$0xff]
    %v1517 = vld [vmem:[%s1515 + $0x8] sm:$0xff]
    %v1518 = vld [vmem:[%s1515 + $0x10] sm:$0xff]
    %v1519 = vld [vmem:[%s1515 + $0x18] sm:$0xff]
    %v1520 = vld [vmem:[%s1515 + $0x20] sm:$0xff]
    %v1521 = vld [vmem:[%s1515 + $0x28] sm:$0xff]
    %v1522 = vld [vmem:[%s1515 + $0x30] sm:$0xff]
    %v1523 = vld [vmem:[%s1515 + $0x38] sm:$0xff]
    %v1524 = vld [vmem:[%s1515 + $0x40] sm:$0xff]
    %v1525 = vld [vmem:[%s1515 + $0x48] sm:$0xff]
    %v1526 = vld [vmem:[%s1515 + $0x50] sm:$0xff]
    %v1527 = vld [vmem:[%s1515 + $0x58] sm:$0xff]
    %v1528 = vld [vmem:[%s1515 + $0x60] sm:$0xff]
    %v1529 = vld [vmem:[%s1515 + $0x68] sm:$0xff]
    %v1530 = vld [vmem:[%s1515 + $0x70] sm:$0xff]
    %v1531 = vld [vmem:[%s1515 + $0x78] sm:$0xff]
    %1532 = vmatprep.subr.mxu0 0.0
    %1533 = vmatpush1.msra.mxu0 %v1516
    %1534 = vmatprep.subr.mxu0 0.0
    %1535 = vmatpush1.msra.mxu0 %v1517
    %1536 = vmatprep.subr.mxu0 0.0
    %1537 = vmatpush1.msra.mxu0 %v1518
    %1538 = vmatprep.subr.mxu0 0.0
    %1539 = vmatpush1.msra.mxu0 %v1519
    %1540 = vmatprep.subr.mxu0 0.0
    %1541 = vmatpush1.msra.mxu0 %v1520
    %1542 = vmatprep.subr.mxu0 0.0
    %1543 = vmatpush1.msra.mxu0 %v1521
    %1544 = vmatprep.subr.mxu0 0.0
    %1545 = vmatpush1.msra.mxu0 %v1522
    %1546 = vmatprep.subr.mxu0 0.0
    %1547 = vmatpush1.msra.mxu0 %v1523
    %1548 = vmatprep.subr.mxu0 0.0
    %1549 = vmatpush1.msra.mxu0 %v1524
    %1550 = vmatprep.subr.mxu0 0.0
    %1551 = vmatpush1.msra.mxu0 %v1525
    %1552 = vmatprep.subr.mxu0 0.0
    %1553 = vmatpush1.msra.mxu0 %v1526
    %1554 = vmatprep.subr.mxu0 0.0
    %1555 = vmatpush1.msra.mxu0 %v1527
    %1556 = vmatprep.subr.mxu0 0.0
    %1557 = vmatpush1.msra.mxu0 %v1528
    %1558 = vmatprep.subr.mxu0 0.0
    %1559 = vmatpush1.msra.mxu0 %v1529
    %1560 = vmatprep.subr.mxu0 0.0
    %1561 = vmatpush1.msra.mxu0 %v1530
    %1562 = vmatprep.subr.mxu0 0.0
    %1563 = vmatpush1.msra.mxu0 %v1531
    %1564 = vmatprep.subr.mxu0 0.0
    %1565 = vmatpush1.msra.mxu0 0.0
    %1566 = vmatprep.subr.mxu0 0.0
    %1567 = vmatpush1.msra.mxu0 0.0
    %1568 = vmatprep.subr.mxu0 0.0
    %1569 = vmatpush1.msra.mxu0 0.0
    %1570 = vmatprep.subr.mxu0 0.0
    %1571 = vmatpush1.msra.mxu0 0.0
    %1572 = vmatprep.subr.mxu0 0.0
    %1573 = vmatpush1.msra.mxu0 0.0
    %1574 = vmatprep.subr.mxu0 0.0
    %1575 = vmatpush1.msra.mxu0 0.0
    %1576 = vmatprep.subr.mxu0 0.0
    %1577 = vmatpush1.msra.mxu0 0.0
    %1578 = vmatprep.subr.mxu0 0.0
    %1579 = vmatpush1.msra.mxu0 0.0
    %1580 = vmatprep.subr.mxu0 0.0
    %1581 = vmatpush1.msra.mxu0 0.0
    %1582 = vmatprep.subr.mxu0 0.0
    %1583 = vmatpush1.msra.mxu0 0.0
    %1584 = vmatprep.subr.mxu0 0.0
    %1585 = vmatpush1.msra.mxu0 0.0
    %1586 = vmatprep.subr.mxu0 0.0
    %1587 = vmatpush1.msra.mxu0 0.0
    %1588 = vmatprep.subr.mxu0 0.0
    %1589 = vmatpush1.msra.mxu0 0.0
    %1590 = vmatprep.subr.mxu0 0.0
    %1591 = vmatpush1.msra.mxu0 0.0
    %1592 = vmatprep.subr.mxu0 0.0
    %1593 = vmatpush1.msra.mxu0 0.0
    %1594 = vmatprep.subr.mxu0 0.0
    %1595 = vmatpush1.msra.mxu0 0.0
    %1596 = vmatprep.mubr.f32.mxu0 0.0
    %1597 = vmatmul.mubr.f32.gmra.mrb[0].mxu0 %v1511
    %v1598 = vpop.f32.mrb[0].mxu0
    %v1599 = vadd.f32 0.0, %v1598
    %v1600 = vpop.f32.mrb[0].mxu0
    %1601 = vmatprep.mubr.f32.mxu0 0.0
    %1602 = vmatmul.mubr.f32.gmra.mrb[0].mxu0 %v1512
    %v1603 = vpop.f32.mrb[0].mxu0
    %v1604 = vadd.f32 0.0, %v1603
    %v1605 = vpop.f32.mrb[0].mxu0
    %1606 = vmatprep.mubr.f32.mxu0 0.0
    %1607 = vmatmul.mubr.f32.gmra.mrb[0].mxu0 %v1513
    %v1608 = vpop.f32.mrb[0].mxu0
    %v1609 = vadd.f32 0.0, %v1608
    %v1610 = vpop.f32.mrb[0].mxu0
    %1611 = vmatprep.mubr.f32.mxu0 0.0
    %1612 = vmatmul.mubr.f32.gmra.mrb[0].mxu0 %v1514
    %v1613 = vpop.f32.mrb[0].mxu0
    %v1614 = vadd.f32 0.0, %v1613
    %v1615 = vpop.f32.mrb[0].mxu0
    %1616 = vdwg.mxu0
    %v1617 = vadd.f32 %v1507, %v1599
    %v1618 = vadd.f32 %v1508, %v1604
    %v1619 = vadd.f32 %v1509, %v1609
    %v1620 = vadd.f32 %v1510, %v1614
    %v1621 = vadd.f32 %v1617, %v1618
    %v1622 = vadd.f32 %v1621, %v1619
    %v1623 = vadd.f32 %v1622, %v1620
    %v1624 = vrot.slane %v1623, 4
    %v1625 = vadd.f32 %v1623, %v1624
    %v1626 = vrot.slane %v1625, 2
    %v1627 = vadd.f32 %v1625, %v1626
    %v1628 = vrot.slane %v1627, 1
    %v1629 = vadd.f32 %v1627, %v1628
    %v1630 = vmul.f32 %v1617, %v1617
    %v1631 = vmul.f32 %v1618, %v1618
    %v1632 = vmul.f32 %v1619, %v1619
    %v1633 = vmul.f32 %v1620, %v1620
    %v1634 = vadd.f32 %v1630, %v1631
    %v1635 = vadd.f32 %v1634, %v1632
    %v1636 = vadd.f32 %v1635, %v1633
    %v1637 = vrot.slane %v1636, 4
    %v1638 = vadd.f32 %v1636, %v1637
    %v1639 = vrot.slane %v1638, 2
    %v1640 = vadd.f32 %v1638, %v1639
    %v1641 = vrot.slane %v1640, 1
    %v1642 = vadd.f32 %v1640, %v1641
    %v1643 = vmul.f32 %v1629, 0.03125
    %v1644 = vmul.f32 %v1642, 0.03125
    %v1645 = vmul.f32 %v1643, %v1643
    %v1646 = vsub.f32 %v1644, %v1645
    %v1647 = vmax.f32 %v1646, 0.0
    %v1648 = vadd.f32 %v1647, 1e-05
    %v1649 = vrsqrt.pop %v1648
    %v1650 = vld [vmem:[%s5] sm:$0x1]
    %v1651 = vmul.f32 %v1649, %v1650
    %v1652 = vsub.f32 %v1617, %v1643
    %v1653 = vsub.f32 %v1618, %v1643
    %v1654 = vsub.f32 %v1619, %v1643
    %v1655 = vsub.f32 %v1620, %v1643
    %v1656 = vlaneseq
    %v1657 = vshrl.u32 %v1656, 7
    %v1658 = vsub.s32 0, %v1657
    %v1659 = vrot.slane %v1651, %v1658
    %v1660 = vmul.f32 %v1652, %v1659
    %v1661 = vmul.f32 %v1653, %v1659
    %v1662 = vmul.f32 %v1654, %v1659
    %v1663 = vmul.f32 %v1655, %v1659
    %v1664 = vld [vmem:[%s6] sm:$0x1]
    %v1666 = vlaneseq
    %v1667 = vshrl.u32 %v1666, 7
    %v1668 = vsub.s32 0, %v1667
    %v1669 = vrot.slane %v1664, %v1668
    %v1671 = vadd.f32 %v1660, %v1669
    %v1672 = vadd.f32 %v1661, %v1669
    %v1673 = vadd.f32 %v1662, %v1669
    %v1674 = vadd.f32 %v1663, %v1669
    %v1675 = vmax.f32 %v1671, 0.0
    %v1676 = vmax.f32 %v1672, 0.0
    %v1677 = vmax.f32 %v1673, 0.0
    %v1678 = vmax.f32 %v1674, 0.0
    %1679 = vst [vmem:[#allocation3] sm:$0x7f] 0.0
    %1680 = vst [vmem:[#allocation3 + $0xb] sm:$0x3] 0.0
    %1681 = vst [vmem:[#allocation3 + $0x11] sm:$0x3] 0.0
    %1682 = vst [vmem:[#allocation3 + $0x17] sm:$0x3] 0.0
    %1683 = vst [vmem:[#allocation3 + $0x1d] sm:$0x7f] 0.0
    %1684 = vst [vmem:[#allocation3 + $0x24] sm:$0x7f] 0.0
    %1685 = vst [vmem:[#allocation3 + $0x2f] sm:$0x3] 0.0
    %1686 = vst [vmem:[#allocation3 + $0x35] sm:$0x3] 0.0
    %1687 = vst [vmem:[#allocation3 + $0x3b] sm:$0x3] 0.0
    %1688 = vst [vmem:[#allocation3 + $0x41] sm:$0x7f] 0.0
    %1689 = vst [vmem:[#allocation3 + $0x7] sm:$0xf] %v1675
    %1690 = vst [vmem:[#allocation3 + $0x9] sm:$0xf0] %v1675
    %1691 = vst [vmem:[#allocation3 + $0x13] sm:$0xf] %v1676
    %1692 = vst [vmem:[#allocation3 + $0x15] sm:$0xf0] %v1676
    %1693 = vst [vmem:[#allocation3 + $0x2b] sm:$0xf] %v1677
    %1694 = vst [vmem:[#allocation3 + $0x2d] sm:$0xf0] %v1677
    %1695 = vst [vmem:[#allocation3 + $0x37] sm:$0xf] %v1678
    %1696 = vst [vmem:[#allocation3 + $0x39] sm:$0xf0] %v1678
    %v1697 = vld [vmem:[#allocation3] ss:$2 sm:$0x3]
    %1698 = vst [vmem:[#allocation5] sm:$0x3] %v1697
    %s1699 = scalar_lea.vmem [#allocation3], 12
    %v1700 = vld [vmem:[%s1699] ss:$2 sm:$0x3]
    %1701 = vst [vmem:[#allocation5 + $0x2] sm:$0x3] %v1700
    %s1702 = scalar_lea.vmem [#allocation3], 36
    %v1703 = vld [vmem:[%s1702] ss:$2 sm:$0x3]
    %1704 = vst [vmem:[#allocation5 + $0x4] sm:$0x3] %v1703
    %s1705 = scalar_lea.vmem [#allocation3], 48
    %v1706 = vld [vmem:[%s1705] ss:$2 sm:$0x3]
    %1707 = vst [vmem:[#allocation5 + $0x6] sm:$0x3] %v1706
    %s1708 = scalar_lea.vmem [#allocation3], 1
    %v1709 = vld [vmem:[%s1708] ss:$2 sm:$0x3]
    %s1710 = scalar_lea.vmem [#allocation5], 8
    %1711 = vst [vmem:[%s1710] sm:$0x3] %v1709
    %s1712 = scalar_lea.vmem [#allocation3], 13
    %v1713 = vld [vmem:[%s1712] ss:$2 sm:$0x3]
    %1714 = vst [vmem:[%s1710 + $0x2] sm:$0x3] %v1713
    %s1715 = scalar_lea.vmem [#allocation3], 37
    %v1716 = vld [vmem:[%s1715] ss:$2 sm:$0x3]
    %1717 = vst [vmem:[%s1710 + $0x4] sm:$0x3] %v1716
    %s1718 = scalar_lea.vmem [#allocation3], 49
    %v1719 = vld [vmem:[%s1718] ss:$2 sm:$0x3]
    %1720 = vst [vmem:[%s1710 + $0x6] sm:$0x3] %v1719
    %s1721 = scalar_lea.vmem [#allocation3], 2
    %v1722 = vld [vmem:[%s1721] ss:$2 sm:$0x3]
    %s1723 = scalar_lea.vmem [#allocation5], 16
    %1724 = vst [vmem:[%s1723] sm:$0x3] %v1722
    %s1725 = scalar_lea.vmem [#allocation3], 14
    %v1726 = vld [vmem:[%s1725] ss:$2 sm:$0x3]
    %1727 = vst [vmem:[%s1723 + $0x2] sm:$0x3] %v1726
    %s1728 = scalar_lea.vmem [#allocation3], 38
    %v1729 = vld [vmem:[%s1728] ss:$2 sm:$0x3]
    %1730 = vst [vmem:[%s1723 + $0x4] sm:$0x3] %v1729
    %s1731 = scalar_lea.vmem [#allocation3], 50
    %v1732 = vld [vmem:[%s1731] ss:$2 sm:$0x3]
    %1733 = vst [vmem:[%s1723 + $0x6] sm:$0x3] %v1732
    %s1734 = scalar_lea.vmem [#allocation3], 6
    %v1735 = vld [vmem:[%s1734] ss:$2 sm:$0x3]
    %s1736 = scalar_lea.vmem [#allocation5], 24
    %1737 = vst [vmem:[%s1736] sm:$0x3] %v1735
    %s1738 = scalar_lea.vmem [#allocation3], 18
    %v1739 = vld [vmem:[%s1738] ss:$2 sm:$0x3]
    %1740 = vst [vmem:[%s1736 + $0x2] sm:$0x3] %v1739
    %s1741 = scalar_lea.vmem [#allocation3], 42
    %v1742 = vld [vmem:[%s1741] ss:$2 sm:$0x3]
    %1743 = vst [vmem:[%s1736 + $0x4] sm:$0x3] %v1742
    %s1744 = scalar_lea.vmem [#allocation3], 54
    %v1745 = vld [vmem:[%s1744] ss:$2 sm:$0x3]
    %1746 = vst [vmem:[%s1736 + $0x6] sm:$0x3] %v1745
    %s1747 = scalar_lea.vmem [#allocation3], 7
    %v1748 = vld [vmem:[%s1747] ss:$2 sm:$0x3]
    %s1749 = scalar_lea.vmem [#allocation5], 32
    %1750 = vst [vmem:[%s1749] sm:$0x3] %v1748
    %s1751 = scalar_lea.vmem [#allocation3], 19
    %v1752 = vld [vmem:[%s1751] ss:$2 sm:$0x3]
    %1753 = vst [vmem:[%s1749 + $0x2] sm:$0x3] %v1752
    %s1754 = scalar_lea.vmem [#allocation3], 43
    %v1755 = vld [vmem:[%s1754] ss:$2 sm:$0x3]
    %1756 = vst [vmem:[%s1749 + $0x4] sm:$0x3] %v1755
    %s1757 = scalar_lea.vmem [#allocation3], 55
    %v1758 = vld [vmem:[%s1757] ss:$2 sm:$0x3]
    %1759 = vst [vmem:[%s1749 + $0x6] sm:$0x3] %v1758
    %s1760 = scalar_lea.vmem [#allocation3], 8
    %v1761 = vld [vmem:[%s1760] ss:$2 sm:$0x3]
    %s1762 = scalar_lea.vmem [#allocation5], 40
    %1763 = vst [vmem:[%s1762] sm:$0x3] %v1761
    %s1764 = scalar_lea.vmem [#allocation3], 20
    %v1765 = vld [vmem:[%s1764] ss:$2 sm:$0x3]
    %1766 = vst [vmem:[%s1762 + $0x2] sm:$0x3] %v1765
    %s1767 = scalar_lea.vmem [#allocation3], 44
    %v1768 = vld [vmem:[%s1767] ss:$2 sm:$0x3]
    %1769 = vst [vmem:[%s1762 + $0x4] sm:$0x3] %v1768
    %s1770 = scalar_lea.vmem [#allocation3], 56
    %v1771 = vld [vmem:[%s1770] ss:$2 sm:$0x3]
    %1772 = vst [vmem:[%s1762 + $0x6] sm:$0x3] %v1771
    %v1773 = vld [vmem:[%s1699] ss:$2 sm:$0x3]
    %s1774 = scalar_lea.vmem [#allocation5], 48
    %1775 = vst [vmem:[%s1774] sm:$0x3] %v1773
    %s1776 = scalar_lea.vmem [#allocation3], 24
    %v1777 = vld [vmem:[%s1776] ss:$2 sm:$0x3]
    %1778 = vst [vmem:[%s1774 + $0x2] sm:$0x3] %v1777
    %v1779 = vld [vmem:[%s1705] ss:$2 sm:$0x3]
    %1780 = vst [vmem:[%s1774 + $0x4] sm:$0x3] %v1779
    %s1781 = scalar_lea.vmem [#allocation3], 60
    %v1782 = vld [vmem:[%s1781] ss:$2 sm:$0x3]
    %1783 = vst [vmem:[%s1774 + $0x6] sm:$0x3] %v1782
    %v1784 = vld [vmem:[%s1712] ss:$2 sm:$0x3]
    %s1785 = scalar_lea.vmem [#allocation5], 56
    %1786 = vst [vmem:[%s1785] sm:$0x3] %v1784
    %s1787 = scalar_lea.vmem [#allocation3], 25
    %v1788 = vld [vmem:[%s1787] ss:$2 sm:$0x3]
    %1789 = vst [vmem:[%s1785 + $0x2] sm:$0x3] %v1788
    %v1790 = vld [vmem:[%s1718] ss:$2 sm:$0x3]
    %1791 = vst [vmem:[%s1785 + $0x4] sm:$0x3] %v1790
    %s1792 = scalar_lea.vmem [#allocation3], 61
    %v1793 = vld [vmem:[%s1792] ss:$2 sm:$0x3]
    %1794 = vst [vmem:[%s1785 + $0x6] sm:$0x3] %v1793
    %v1795 = vld [vmem:[%s1725] ss:$2 sm:$0x3]
    %s1796 = scalar_lea.vmem [#allocation5], 64
    %1797 = vst [vmem:[%s1796] sm:$0x3] %v1795
    %s1798 = scalar_lea.vmem [#allocation3], 26
    %v1799 = vld [vmem:[%s1798] ss:$2 sm:$0x3]
    %1800 = vst [vmem:[%s1796 + $0x2] sm:$0x3] %v1799
    %v1801 = vld [vmem:[%s1731] ss:$2 sm:$0x3]
    %1802 = vst [vmem:[%s1796 + $0x4] sm:$0x3] %v1801
    %s1803 = scalar_lea.vmem [#allocation3], 62
    %v1804 = vld [vmem:[%s1803] ss:$2 sm:$0x3]
    %1805 = vst [vmem:[%s1796 + $0x6] sm:$0x3] %v1804
    %v1806 = vld [vmem:[#allocation5] sm:$0xff]
    %v1807 = vld [vmem:[%s7] sm:$0xff]
    %v1808 = vld [vmem:[%s7 + $0x8] sm:$0xff]
    %v1809 = vld [vmem:[%s7 + $0x10] sm:$0xff]
    %v1810 = vld [vmem:[%s7 + $0x18] sm:$0xff]
    %v1811 = vld [vmem:[%s7 + $0x20] sm:$0xff]
    %v1812 = vld [vmem:[%s7 + $0x28] sm:$0xff]
    %v1813 = vld [vmem:[%s7 + $0x30] sm:$0xff]
    %v1814 = vld [vmem:[%s7 + $0x38] sm:$0xff]
    %v1815 = vld [vmem:[%s7 + $0x40] sm:$0xff]
    %v1816 = vld [vmem:[%s7 + $0x48] sm:$0xff]
    %v1817 = vld [vmem:[%s7 + $0x50] sm:$0xff]
    %v1818 = vld [vmem:[%s7 + $0x58] sm:$0xff]
    %v1819 = vld [vmem:[%s7 + $0x60] sm:$0xff]
    %v1820 = vld [vmem:[%s7 + $0x68] sm:$0xff]
    %v1821 = vld [vmem:[%s7 + $0x70] sm:$0xff]
    %v1822 = vld [vmem:[%s7 + $0x78] sm:$0xff]
    %v1823 = vld [vmem:[%s1710] sm:$0xff]
    %s1824 = scalar_lea.vmem %s7, 128
    %v1825 = vld [vmem:[%s1824] sm:$0xff]
    %v1826 = vld [vmem:[%s1824 + $0x8] sm:$0xff]
    %v1827 = vld [vmem:[%s1824 + $0x10] sm:$0xff]
    %v1828 = vld [vmem:[%s1824 + $0x18] sm:$0xff]
    %v1829 = vld [vmem:[%s1824 + $0x20] sm:$0xff]
    %v1830 = vld [vmem:[%s1824 + $0x28] sm:$0xff]
    %v1831 = vld [vmem:[%s1824 + $0x30] sm:$0xff]
    %v1832 = vld [vmem:[%s1824 + $0x38] sm:$0xff]
    %v1833 = vld [vmem:[%s1824 + $0x40] sm:$0xff]
    %v1834 = vld [vmem:[%s1824 + $0x48] sm:$0xff]
    %v1835 = vld [vmem:[%s1824 + $0x50] sm:$0xff]
    %v1836 = vld [vmem:[%s1824 + $0x58] sm:$0xff]
    %v1837 = vld [vmem:[%s1824 + $0x60] sm:$0xff]
    %v1838 = vld [vmem:[%s1824 + $0x68] sm:$0xff]
    %v1839 = vld [vmem:[%s1824 + $0x70] sm:$0xff]
    %v1840 = vld [vmem:[%s1824 + $0x78] sm:$0xff]
    %1841 = vmatprep.subr.mxu0 0.0
    %1842 = vmatpush1.msra.mxu0 %v1825
    %1843 = vmatprep.subr.mxu0 0.0
    %1844 = vmatpush1.msra.mxu0 %v1826
    %1845 = vmatprep.subr.mxu0 0.0
    %1846 = vmatpush1.msra.mxu0 %v1827
    %1847 = vmatprep.subr.mxu0 0.0
    %1848 = vmatpush1.msra.mxu0 %v1828
    %1849 = vmatprep.subr.mxu0 0.0
    %1850 = vmatpush1.msra.mxu0 %v1829
    %1851 = vmatprep.subr.mxu0 0.0
    %1852 = vmatpush1.msra.mxu0 %v1830
    %1853 = vmatprep.subr.mxu0 0.0
    %1854 = vmatpush1.msra.mxu0 %v1831
    %1855 = vmatprep.subr.mxu0 0.0
    %1856 = vmatpush1.msra.mxu0 %v1832
    %1857 = vmatprep.subr.mxu0 0.0
    %1858 = vmatpush1.msra.mxu0 %v1833
    %1859 = vmatprep.subr.mxu0 0.0
    %1860 = vmatpush1.msra.mxu0 %v1834
    %1861 = vmatprep.subr.mxu0 0.0
    %1862 = vmatpush1.msra.mxu0 %v1835
    %1863 = vmatprep.subr.mxu0 0.0
    %1864 = vmatpush1.msra.mxu0 %v1836
    %1865 = vmatprep.subr.mxu0 0.0
    %1866 = vmatpush1.msra.mxu0 %v1837
    %1867 = vmatprep.subr.mxu0 0.0
    %1868 = vmatpush1.msra.mxu0 %v1838
    %1869 = vmatprep.subr.mxu0 0.0
    %1870 = vmatpush1.msra.mxu0 %v1839
    %1871 = vmatprep.subr.mxu0 0.0
    %1872 = vmatpush1.msra.mxu0 %v1840
    %1873 = vmatprep.subr.mxu0 0.0
    %1874 = vmatpush1.msra.mxu0 0.0
    %1875 = vmatprep.subr.mxu0 0.0
    %1876 = vmatpush1.msra.mxu0 0.0
    %1877 = vmatprep.subr.mxu0 0.0
    %1878 = vmatpush1.msra.mxu0 0.0
    %1879 = vmatprep.subr.mxu0 0.0
    %1880 = vmatpush1.msra.mxu0 0.0
    %1881 = vmatprep.subr.mxu0 0.0
    %1882 = vmatpush1.msra.mxu0 0.0
    %1883 = vmatprep.subr.mxu0 0.0
    %1884 = vmatpush1.msra.mxu0 0.0
    %1885 = vmatprep.subr.mxu0 0.0
    %1886 = vmatpush1.msra.mxu0 0.0
    %1887 = vmatprep.subr.mxu0 0.0
    %1888 = vmatpush1.msra.mxu0 0.0
    %1889 = vmatprep.subr.mxu0 0.0
    %1890 = vmatpush1.msra.mxu0 0.0
    %1891 = vmatprep.subr.mxu0 0.0
    %1892 = vmatpush1.msra.mxu0 0.0
    %1893 = vmatprep.subr.mxu0 0.0
    %1894 = vmatpush1.msra.mxu0 0.0
    %1895 = vmatprep.subr.mxu0 0.0
    %1896 = vmatpush1.msra.mxu0 0.0
    %1897 = vmatprep.subr.mxu0 0.0
    %1898 = vmatpush1.msra.mxu0 0.0
    %1899 = vmatprep.subr.mxu0 0.0
    %1900 = vmatpush1.msra.mxu0 0.0
    %1901 = vmatprep.subr.mxu0 0.0
    %1902 = vmatpush1.msra.mxu0 0.0
    %1903 = vmatprep.subr.mxu0 0.0
    %1904 = vmatpush1.msra.mxu0 0.0
    %1905 = vmatprep.mubr.f32.mxu0 0.0
    %1906 = vmatmul.mubr.f32.gmra.mrb[0].mxu0 %v1823
    %v1907 = vpop.f32.mrb[0].mxu0
    %v1908 = vadd.f32 0.0, %v1907
    %v1909 = vpop.f32.mrb[0].mxu0
    %1910 = vdwg.mxu0
    %1911 = vmatprep.subr.mxu0 0.0
    %1912 = vmatpush1.msra.mxu0 %v1807
    %1913 = vmatprep.subr.mxu0 0.0
    %1914 = vmatpush1.msra.mxu0 %v1808
    %1915 = vmatprep.subr.mxu0 0.0
    %1916 = vmatpush1.msra.mxu0 %v1809
    %1917 = vmatprep.subr.mxu0 0.0
    %1918 = vmatpush1.msra.mxu0 %v1810
    %1919 = vmatprep.subr.mxu0 0.0
    %1920 = vmatpush1.msra.mxu0 %v1811
    %1921 = vmatprep.subr.mxu0 0.0
    %1922 = vmatpush1.msra.mxu0 %v1812
    %1923 = vmatprep.subr.mxu0 0.0
    %1924 = vmatpush1.msra.mxu0 %v1813
    %1925 = vmatprep.subr.mxu0 0.0
    %1926 = vmatpush1.msra.mxu0 %v1814
    %1927 = vmatprep.subr.mxu0 0.0
    %1928 = vmatpush1.msra.mxu0 %v1815
    %1929 = vmatprep.subr.mxu0 0.0
    %1930 = vmatpush1.msra.mxu0 %v1816
    %1931 = vmatprep.subr.mxu0 0.0
    %1932 = vmatpush1.msra.mxu0 %v1817
    %1933 = vmatprep.subr.mxu0 0.0
    %1934 = vmatpush1.msra.mxu0 %v1818
    %1935 = vmatprep.subr.mxu0 0.0
    %1936 = vmatpush1.msra.mxu0 %v1819
    %1937 = vmatprep.subr.mxu0 0.0
    %1938 = vmatpush1.msra.mxu0 %v1820
    %1939 = vmatprep.subr.mxu0 0.0
    %1940 = vmatpush1.msra.mxu0 %v1821
    %1941 = vmatprep.subr.mxu0 0.0
    %1942 = vmatpush1.msra.mxu0 %v1822
    %1943 = vmatprep.subr.mxu0 0.0
    %1944 = vmatpush1.msra.mxu0 0.0
    %1945 = vmatprep.subr.mxu0 0.0
    %1946 = vmatpush1.msra.mxu0 0.0
    %1947 = vmatprep.subr.mxu0 0.0
    %1948 = vmatpush1.msra.mxu0 0.0
    %1949 = vmatprep.subr.mxu0 0.0
    %1950 = vmatpush1.msra.mxu0 0.0
    %1951 = vmatprep.subr.mxu0 0.0
    %1952 = vmatpush1.msra.mxu0 0.0
    %1953 = vmatprep.subr.mxu0 0.0
    %1954 = vmatpush1.msra.mxu0 0.0
    %1955 = vmatprep.subr.mxu0 0.0
    %1956 = vmatpush1.msra.mxu0 0.0
    %1957 = vmatprep.subr.mxu0 0.0
    %1958 = vmatpush1.msra.mxu0 0.0
    %1959 = vmatprep.subr.mxu0 0.0
    %1960 = vmatpush1.msra.mxu0 0.0
    %1961 = vmatprep.subr.mxu0 0.0
    %1962 = vmatpush1.msra.mxu0 0.0
    %1963 = vmatprep.subr.mxu0 0.0
    %1964 = vmatpush1.msra.mxu0 0.0
    %1965 = vmatprep.subr.mxu0 0.0
    %1966 = vmatpush1.msra.mxu0 0.0
    %1967 = vmatprep.subr.mxu0 0.0
    %1968 = vmatpush1.msra.mxu0 0.0
    %1969 = vmatprep.subr.mxu0 0.0
    %1970 = vmatpush1.msra.mxu0 0.0
    %1971 = vmatprep.subr.mxu0 0.0
    %1972 = vmatpush1.msra.mxu0 0.0
    %1973 = vmatprep.subr.mxu0 0.0
    %1974 = vmatpush1.msra.mxu0 0.0
    %1975 = vmatprep.mubr.f32.mxu0 0.0
    %1976 = vmatmul.mubr.f32.gmra.mrb[0].mxu0 %v1806
    %v1977 = vpop.f32.mrb[0].mxu0
    %v1978 = vadd.f32 %v1908, %v1977
    %v1979 = vpop.f32.mrb[0].mxu0
    %1980 = vdwg.mxu0
    %v1981 = vld [vmem:[%s1723] sm:$0xff]
    %s1982 = scalar_lea.vmem %s7, 256
    %v1983 = vld [vmem:[%s1982] sm:$0xff]
    %v1984 = vld [vmem:[%s1982 + $0x8] sm:$0xff]
    %v1985 = vld [vmem:[%s1982 + $0x10] sm:$0xff]
    %v1986 = vld [vmem:[%s1982 + $0x18] sm:$0xff]
    %v1987 = vld [vmem:[%s1982 + $0x20] sm:$0xff]
    %v1988 = vld [vmem:[%s1982 + $0x28] sm:$0xff]
    %v1989 = vld [vmem:[%s1982 + $0x30] sm:$0xff]
    %v1990 = vld [vmem:[%s1982 + $0x38] sm:$0xff]
    %v1991 = vld [vmem:[%s1982 + $0x40] sm:$0xff]
    %v1992 = vld [vmem:[%s1982 + $0x48] sm:$0xff]
    %v1993 = vld [vmem:[%s1982 + $0x50] sm:$0xff]
    %v1994 = vld [vmem:[%s1982 + $0x58] sm:$0xff]
    %v1995 = vld [vmem:[%s1982 + $0x60] sm:$0xff]
    %v1996 = vld [vmem:[%s1982 + $0x68] sm:$0xff]
    %v1997 = vld [vmem:[%s1982 + $0x70] sm:$0xff]
    %v1998 = vld [vmem:[%s1982 + $0x78] sm:$0xff]
    %1999 = vmatprep.subr.mxu0 0.0
    %2000 = vmatpush1.msra.mxu0 %v1983
    %2001 = vmatprep.subr.mxu0 0.0
    %2002 = vmatpush1.msra.mxu0 %v1984
    %2003 = vmatprep.subr.mxu0 0.0
    %2004 = vmatpush1.msra.mxu0 %v1985
    %2005 = vmatprep.subr.mxu0 0.0
    %2006 = vmatpush1.msra.mxu0 %v1986
    %2007 = vmatprep.subr.mxu0 0.0
    %2008 = vmatpush1.msra.mxu0 %v1987
    %2009 = vmatprep.subr.mxu0 0.0
    %2010 = vmatpush1.msra.mxu0 %v1988
    %2011 = vmatprep.subr.mxu0 0.0
    %2012 = vmatpush1.msra.mxu0 %v1989
    %2013 = vmatprep.subr.mxu0 0.0
    %2014 = vmatpush1.msra.mxu0 %v1990
    %2015 = vmatprep.subr.mxu0 0.0
    %2016 = vmatpush1.msra.mxu0 %v1991
    %2017 = vmatprep.subr.mxu0 0.0
    %2018 = vmatpush1.msra.mxu0 %v1992
    %2019 = vmatprep.subr.mxu0 0.0
    %2020 = vmatpush1.msra.mxu0 %v1993
    %2021 = vmatprep.subr.mxu0 0.0
    %2022 = vmatpush1.msra.mxu0 %v1994
    %2023 = vmatprep.subr.mxu0 0.0
    %2024 = vmatpush1.msra.mxu0 %v1995
    %2025 = vmatprep.subr.mxu0 0.0
    %2026 = vmatpush1.msra.mxu0 %v1996
    %2027 = vmatprep.subr.mxu0 0.0
    %2028 = vmatpush1.msra.mxu0 %v1997
    %2029 = vmatprep.subr.mxu0 0.0
    %2030 = vmatpush1.msra.mxu0 %v1998
    %2031 = vmatprep.subr.mxu0 0.0
    %2032 = vmatpush1.msra.mxu0 0.0
    %2033 = vmatprep.subr.mxu0 0.0
    %2034 = vmatpush1.msra.mxu0 0.0
    %2035 = vmatprep.subr.mxu0 0.0
    %2036 = vmatpush1.msra.mxu0 0.0
    %2037 = vmatprep.subr.mxu0 0.0
    %2038 = vmatpush1.msra.mxu0 0.0
    %2039 = vmatprep.subr.mxu0 0.0
    %2040 = vmatpush1.msra.mxu0 0.0
    %2041 = vmatprep.subr.mxu0 0.0
    %2042 = vmatpush1.msra.mxu0 0.0
    %2043 = vmatprep.subr.mxu0 0.0
    %2044 = vmatpush1.msra.mxu0 0.0
    %2045 = vmatprep.subr.mxu0 0.0
    %2046 = vmatpush1.msra.mxu0 0.0
    %2047 = vmatprep.subr.mxu0 0.0
    %2048 = vmatpush1.msra.mxu0 0.0
    %2049 = vmatprep.subr.mxu0 0.0
    %2050 = vmatpush1.msra.mxu0 0.0
    %2051 = vmatprep.subr.mxu0 0.0
    %2052 = vmatpush1.msra.mxu0 0.0
    %2053 = vmatprep.subr.mxu0 0.0
    %2054 = vmatpush1.msra.mxu0 0.0
    %2055 = vmatprep.subr.mxu0 0.0
    %2056 = vmatpush1.msra.mxu0 0.0
    %2057 = vmatprep.subr.mxu0 0.0
    %2058 = vmatpush1.msra.mxu0 0.0
    %2059 = vmatprep.subr.mxu0 0.0
    %2060 = vmatpush1.msra.mxu0 0.0
    %2061 = vmatprep.subr.mxu0 0.0
    %2062 = vmatpush1.msra.mxu0 0.0
    %2063 = vmatprep.mubr.f32.mxu0 0.0
    %2064 = vmatmul.mubr.f32.gmra.mrb[0].mxu0 %v1981
    %v2065 = vpop.f32.mrb[0].mxu0
    %v2066 = vadd.f32 0.0, %v2065
    %v2067 = vpop.f32.mrb[0].mxu0
    %2068 = vdwg.mxu0
    %v2069 = vadd.f32 %v1978, %v2066
    %v2070 = vld [vmem:[%s1736] sm:$0xff]
    %s2071 = scalar_lea.vmem %s7, 384
    %v2072 = vld [vmem:[%s2071] sm:$0xff]
    %v2073 = vld [vmem:[%s2071 + $0x8] sm:$0xff]
    %v2074 = vld [vmem:[%s2071 + $0x10] sm:$0xff]
    %v2075 = vld [vmem:[%s2071 + $0x18] sm:$0xff]
    %v2076 = vld [vmem:[%s2071 + $0x20] sm:$0xff]
    %v2077 = vld [vmem:[%s2071 + $0x28] sm:$0xff]
    %v2078 = vld [vmem:[%s2071 + $0x30] sm:$0xff]
    %v2079 = vld [vmem:[%s2071 + $0x38] sm:$0xff]
    %v2080 = vld [vmem:[%s2071 + $0x40] sm:$0xff]
    %v2081 = vld [vmem:[%s2071 + $0x48] sm:$0xff]
    %v2082 = vld [vmem:[%s2071 + $0x50] sm:$0xff]
    %v2083 = vld [vmem:[%s2071 + $0x58] sm:$0xff]
    %v2084 = vld [vmem:[%s2071 + $0x60] sm:$0xff]
    %v2085 = vld [vmem:[%s2071 + $0x68] sm:$0xff]
    %v2086 = vld [vmem:[%s2071 + $0x70] sm:$0xff]
    %v2087 = vld [vmem:[%s2071 + $0x78] sm:$0xff]
    %2088 = vmatprep.subr.mxu0 0.0
    %2089 = vmatpush1.msra.mxu0 %v2072
    %2090 = vmatprep.subr.mxu0 0.0
    %2091 = vmatpush1.msra.mxu0 %v2073
    %2092 = vmatprep.subr.mxu0 0.0
    %2093 = vmatpush1.msra.mxu0 %v2074
    %2094 = vmatprep.subr.mxu0 0.0
    %2095 = vmatpush1.msra.mxu0 %v2075
    %2096 = vmatprep.subr.mxu0 0.0
    %2097 = vmatpush1.msra.mxu0 %v2076
    %2098 = vmatprep.subr.mxu0 0.0
    %2099 = vmatpush1.msra.mxu0 %v2077
    %2100 = vmatprep.subr.mxu0 0.0
    %2101 = vmatpush1.msra.mxu0 %v2078
    %2102 = vmatprep.subr.mxu0 0.0
    %2103 = vmatpush1.msra.mxu0 %v2079
    %2104 = vmatprep.subr.mxu0 0.0
    %2105 = vmatpush1.msra.mxu0 %v2080
    %2106 = vmatprep.subr.mxu0 0.0
    %2107 = vmatpush1.msra.mxu0 %v2081
    %2108 = vmatprep.subr.mxu0 0.0
    %2109 = vmatpush1.msra.mxu0 %v2082
    %2110 = vmatprep.subr.mxu0 0.0
    %2111 = vmatpush1.msra.mxu0 %v2083
    %2112 = vmatprep.subr.mxu0 0.0
    %2113 = vmatpush1.msra.mxu0 %v2084
    %2114 = vmatprep.subr.mxu0 0.0
    %2115 = vmatpush1.msra.mxu0 %v2085
    %2116 = vmatprep.subr.mxu0 0.0
    %2117 = vmatpush1.msra.mxu0 %v2086
    %2118 = vmatprep.subr.mxu0 0.0
    %2119 = vmatpush1.msra.mxu0 %v2087
    %2120 = vmatprep.subr.mxu0 0.0
    %2121 = vmatpush1.msra.mxu0 0.0
    %2122 = vmatprep.subr.mxu0 0.0
    %2123 = vmatpush1.msra.mxu0 0.0
    %2124 = vmatprep.subr.mxu0 0.0
    %2125 = vmatpush1.msra.mxu0 0.0
    %2126 = vmatprep.subr.mxu0 0.0
    %2127 = vmatpush1.msra.mxu0 0.0
    %2128 = vmatprep.subr.mxu0 0.0
    %2129 = vmatpush1.msra.mxu0 0.0
    %2130 = vmatprep.subr.mxu0 0.0
    %2131 = vmatpush1.msra.mxu0 0.0
    %2132 = vmatprep.subr.mxu0 0.0
    %2133 = vmatpush1.msra.mxu0 0.0
    %2134 = vmatprep.subr.mxu0 0.0
    %2135 = vmatpush1.msra.mxu0 0.0
    %2136 = vmatprep.subr.mxu0 0.0
    %2137 = vmatpush1.msra.mxu0 0.0
    %2138 = vmatprep.subr.mxu0 0.0
    %2139 = vmatpush1.msra.mxu0 0.0
    %2140 = vmatprep.subr.mxu0 0.0
    %2141 = vmatpush1.msra.mxu0 0.0
    %2142 = vmatprep.subr.mxu0 0.0
    %2143 = vmatpush1.msra.mxu0 0.0
    %2144 = vmatprep.subr.mxu0 0.0
    %2145 = vmatpush1.msra.mxu0 0.0
    %2146 = vmatprep.subr.mxu0 0.0
    %2147 = vmatpush1.msra.mxu0 0.0
    %2148 = vmatprep.subr.mxu0 0.0
    %2149 = vmatpush1.msra.mxu0 0.0
    %2150 = vmatprep.subr.mxu0 0.0
    %2151 = vmatpush1.msra.mxu0 0.0
    %2152 = vmatprep.mubr.f32.mxu0 0.0
    %2153 = vmatmul.mubr.f32.gmra.mrb[0].mxu0 %v2070
    %v2154 = vpop.f32.mrb[0].mxu0
    %v2155 = vadd.f32 0.0, %v2154
    %v2156 = vpop.f32.mrb[0].mxu0
    %2157 = vdwg.mxu0
    %v2158 = vadd.f32 %v2069, %v2155
    %v2159 = vld [vmem:[%s1749] sm:$0xff]
    %s2160 = scalar_lea.vmem %s7, 512
    %v2161 = vld [vmem:[%s2160] sm:$0xff]
    %v2162 = vld [vmem:[%s2160 + $0x8] sm:$0xff]
    %v2163 = vld [vmem:[%s2160 + $0x10] sm:$0xff]
    %v2164 = vld [vmem:[%s2160 + $0x18] sm:$0xff]
    %v2165 = vld [vmem:[%s2160 + $0x20] sm:$0xff]
    %v2166 = vld [vmem:[%s2160 + $0x28] sm:$0xff]
    %v2167 = vld [vmem:[%s2160 + $0x30] sm:$0xff]
    %v2168 = vld [vmem:[%s2160 + $0x38] sm:$0xff]
    %v2169 = vld [vmem:[%s2160 + $0x40] sm:$0xff]
    %v2170 = vld [vmem:[%s2160 + $0x48] sm:$0xff]
    %v2171 = vld [vmem:[%s2160 + $0x50] sm:$0xff]
    %v2172 = vld [vmem:[%s2160 + $0x58] sm:$0xff]
    %v2173 = vld [vmem:[%s2160 + $0x60] sm:$0xff]
    %v2174 = vld [vmem:[%s2160 + $0x68] sm:$0xff]
    %v2175 = vld [vmem:[%s2160 + $0x70] sm:$0xff]
    %v2176 = vld [vmem:[%s2160 + $0x78] sm:$0xff]
    %2177 = vmatprep.subr.mxu0 0.0
    %2178 = vmatpush1.msra.mxu0 %v2161
    %2179 = vmatprep.subr.mxu0 0.0
    %2180 = vmatpush1.msra.mxu0 %v2162
    %2181 = vmatprep.subr.mxu0 0.0
    %2182 = vmatpush1.msra.mxu0 %v2163
    %2183 = vmatprep.subr.mxu0 0.0
    %2184 = vmatpush1.msra.mxu0 %v2164
    %2185 = vmatprep.subr.mxu0 0.0
    %2186 = vmatpush1.msra.mxu0 %v2165
    %2187 = vmatprep.subr.mxu0 0.0
    %2188 = vmatpush1.msra.mxu0 %v2166
    %2189 = vmatprep.subr.mxu0 0.0
    %2190 = vmatpush1.msra.mxu0 %v2167
    %2191 = vmatprep.subr.mxu0 0.0
    %2192 = vmatpush1.msra.mxu0 %v2168
    %2193 = vmatprep.subr.mxu0 0.0
    %2194 = vmatpush1.msra.mxu0 %v2169
    %2195 = vmatprep.subr.mxu0 0.0
    %2196 = vmatpush1.msra.mxu0 %v2170
    %2197 = vmatprep.subr.mxu0 0.0
    %2198 = vmatpush1.msra.mxu0 %v2171
    %2199 = vmatprep.subr.mxu0 0.0
    %2200 = vmatpush1.msra.mxu0 %v2172
    %2201 = vmatprep.subr.mxu0 0.0
    %2202 = vmatpush1.msra.mxu0 %v2173
    %2203 = vmatprep.subr.mxu0 0.0
    %2204 = vmatpush1.msra.mxu0 %v2174
    %2205 = vmatprep.subr.mxu0 0.0
    %2206 = vmatpush1.msra.mxu0 %v2175
    %2207 = vmatprep.subr.mxu0 0.0
    %2208 = vmatpush1.msra.mxu0 %v2176
    %2209 = vmatprep.subr.mxu0 0.0
    %2210 = vmatpush1.msra.mxu0 0.0
    %2211 = vmatprep.subr.mxu0 0.0
    %2212 = vmatpush1.msra.mxu0 0.0
    %2213 = vmatprep.subr.mxu0 0.0
    %2214 = vmatpush1.msra.mxu0 0.0
    %2215 = vmatprep.subr.mxu0 0.0
    %2216 = vmatpush1.msra.mxu0 0.0
    %2217 = vmatprep.subr.mxu0 0.0
    %2218 = vmatpush1.msra.mxu0 0.0
    %2219 = vmatprep.subr.mxu0 0.0
    %2220 = vmatpush1.msra.mxu0 0.0
    %2221 = vmatprep.subr.mxu0 0.0
    %2222 = vmatpush1.msra.mxu0 0.0
    %2223 = vmatprep.subr.mxu0 0.0
    %2224 = vmatpush1.msra.mxu0 0.0
    %2225 = vmatprep.subr.mxu0 0.0
    %2226 = vmatpush1.msra.mxu0 0.0
    %2227 = vmatprep.subr.mxu0 0.0
    %2228 = vmatpush1.msra.mxu0 0.0
    %2229 = vmatprep.subr.mxu0 0.0
    %2230 = vmatpush1.msra.mxu0 0.0
    %2231 = vmatprep.subr.mxu0 0.0
    %2232 = vmatpush1.msra.mxu0 0.0
    %2233 = vmatprep.subr.mxu0 0.0
    %2234 = vmatpush1.msra.mxu0 0.0
    %2235 = vmatprep.subr.mxu0 0.0
    %2236 = vmatpush1.msra.mxu0 0.0
    %2237 = vmatprep.subr.mxu0 0.0
    %2238 = vmatpush1.msra.mxu0 0.0
    %2239 = vmatprep.subr.mxu0 0.0
    %2240 = vmatpush1.msra.mxu0 0.0
    %2241 = vmatprep.mubr.f32.mxu0 0.0
    %2242 = vmatmul.mubr.f32.gmra.mrb[0].mxu0 %v2159
    %v2243 = vpop.f32.mrb[0].mxu0
    %v2244 = vadd.f32 0.0, %v2243
    %v2245 = vpop.f32.mrb[0].mxu0
    %2246 = vdwg.mxu0
    %v2247 = vadd.f32 %v2158, %v2244
    %v2248 = vld [vmem:[%s1762] sm:$0xff]
    %s2249 = scalar_lea.vmem %s7, 640
    %v2250 = vld [vmem:[%s2249] sm:$0xff]
    %v2251 = vld [vmem:[%s2249 + $0x8] sm:$0xff]
    %v2252 = vld [vmem:[%s2249 + $0x10] sm:$0xff]
    %v2253 = vld [vmem:[%s2249 + $0x18] sm:$0xff]
    %v2254 = vld [vmem:[%s2249 + $0x20] sm:$0xff]
    %v2255 = vld [vmem:[%s2249 + $0x28] sm:$0xff]
    %v2256 = vld [vmem:[%s2249 + $0x30] sm:$0xff]
    %v2257 = vld [vmem:[%s2249 + $0x38] sm:$0xff]
    %v2258 = vld [vmem:[%s2249 + $0x40] sm:$0xff]
    %v2259 = vld [vmem:[%s2249 + $0x48] sm:$0xff]
    %v2260 = vld [vmem:[%s2249 + $0x50] sm:$0xff]
    %v2261 = vld [vmem:[%s2249 + $0x58] sm:$0xff]
    %v2262 = vld [vmem:[%s2249 + $0x60] sm:$0xff]
    %v2263 = vld [vmem:[%s2249 + $0x68] sm:$0xff]
    %v2264 = vld [vmem:[%s2249 + $0x70] sm:$0xff]
    %v2265 = vld [vmem:[%s2249 + $0x78] sm:$0xff]
    %2266 = vmatprep.subr.mxu0 0.0
    %2267 = vmatpush1.msra.mxu0 %v2250
    %2268 = vmatprep.subr.mxu0 0.0
    %2269 = vmatpush1.msra.mxu0 %v2251
    %2270 = vmatprep.subr.mxu0 0.0
    %2271 = vmatpush1.msra.mxu0 %v2252
    %2272 = vmatprep.subr.mxu0 0.0
    %2273 = vmatpush1.msra.mxu0 %v2253
    %2274 = vmatprep.subr.mxu0 0.0
    %2275 = vmatpush1.msra.mxu0 %v2254
    %2276 = vmatprep.subr.mxu0 0.0
    %2277 = vmatpush1.msra.mxu0 %v2255
    %2278 = vmatprep.subr.mxu0 0.0
    %2279 = vmatpush1.msra.mxu0 %v2256
    %2280 = vmatprep.subr.mxu0 0.0
    %2281 = vmatpush1.msra.mxu0 %v2257
    %2282 = vmatprep.subr.mxu0 0.0
    %2283 = vmatpush1.msra.mxu0 %v2258
    %2284 = vmatprep.subr.mxu0 0.0
    %2285 = vmatpush1.msra.mxu0 %v2259
    %2286 = vmatprep.subr.mxu0 0.0
    %2287 = vmatpush1.msra.mxu0 %v2260
    %2288 = vmatprep.subr.mxu0 0.0
    %2289 = vmatpush1.msra.mxu0 %v2261
    %2290 = vmatprep.subr.mxu0 0.0
    %2291 = vmatpush1.msra.mxu0 %v2262
    %2292 = vmatprep.subr.mxu0 0.0
    %2293 = vmatpush1.msra.mxu0 %v2263
    %2294 = vmatprep.subr.mxu0 0.0
    %2295 = vmatpush1.msra.mxu0 %v2264
    %2296 = vmatprep.subr.mxu0 0.0
    %2297 = vmatpush1.msra.mxu0 %v2265
    %2298 = vmatprep.subr.mxu0 0.0
    %2299 = vmatpush1.msra.mxu0 0.0
    %2300 = vmatprep.subr.mxu0 0.0
    %2301 = vmatpush1.msra.mxu0 0.0
    %2302 = vmatprep.subr.mxu0 0.0
    %2303 = vmatpush1.msra.mxu0 0.0
    %2304 = vmatprep.subr.mxu0 0.0
    %2305 = vmatpush1.msra.mxu0 0.0
    %2306 = vmatprep.subr.mxu0 0.0
    %2307 = vmatpush1.msra.mxu0 0.0
    %2308 = vmatprep.subr.mxu0 0.0
    %2309 = vmatpush1.msra.mxu0 0.0
    %2310 = vmatprep.subr.mxu0 0.0
    %2311 = vmatpush1.msra.mxu0 0.0
    %2312 = vmatprep.subr.mxu0 0.0
    %2313 = vmatpush1.msra.mxu0 0.0
    %2314 = vmatprep.subr.mxu0 0.0
    %2315 = vmatpush1.msra.mxu0 0.0
    %2316 = vmatprep.subr.mxu0 0.0
    %2317 = vmatpush1.msra.mxu0 0.0
    %2318 = vmatprep.subr.mxu0 0.0
    %2319 = vmatpush1.msra.mxu0 0.0
    %2320 = vmatprep.subr.mxu0 0.0
    %2321 = vmatpush1.msra.mxu0 0.0
    %2322 = vmatprep.subr.mxu0 0.0
    %2323 = vmatpush1.msra.mxu0 0.0
    %2324 = vmatprep.subr.mxu0 0.0
    %2325 = vmatpush1.msra.mxu0 0.0
    %2326 = vmatprep.subr.mxu0 0.0
    %2327 = vmatpush1.msra.mxu0 0.0
    %2328 = vmatprep.subr.mxu0 0.0
    %2329 = vmatpush1.msra.mxu0 0.0
    %2330 = vmatprep.mubr.f32.mxu0 0.0
    %2331 = vmatmul.mubr.f32.gmra.mrb[0].mxu0 %v2248
    %v2332 = vpop.f32.mrb[0].mxu0
    %v2333 = vadd.f32 0.0, %v2332
    %v2334 = vpop.f32.mrb[0].mxu0
    %2335 = vdwg.mxu0
    %v2336 = vadd.f32 %v2247, %v2333
    %v2337 = vld [vmem:[%s1774] sm:$0xff]
    %s2338 = scalar_lea.vmem %s7, 768
    %v2339 = vld [vmem:[%s2338] sm:$0xff]
    %v2340 = vld [vmem:[%s2338 + $0x8] sm:$0xff]
    %v2341 = vld [vmem:[%s2338 + $0x10] sm:$0xff]
    %v2342 = vld [vmem:[%s2338 + $0x18] sm:$0xff]
    %v2343 = vld [vmem:[%s2338 + $0x20] sm:$0xff]
    %v2344 = vld [vmem:[%s2338 + $0x28] sm:$0xff]
    %v2345 = vld [vmem:[%s2338 + $0x30] sm:$0xff]
    %v2346 = vld [vmem:[%s2338 + $0x38] sm:$0xff]
    %v2347 = vld [vmem:[%s2338 + $0x40] sm:$0xff]
    %v2348 = vld [vmem:[%s2338 + $0x48] sm:$0xff]
    %v2349 = vld [vmem:[%s2338 + $0x50] sm:$0xff]
    %v2350 = vld [vmem:[%s2338 + $0x58] sm:$0xff]
    %v2351 = vld [vmem:[%s2338 + $0x60] sm:$0xff]
    %v2352 = vld [vmem:[%s2338 + $0x68] sm:$0xff]
    %v2353 = vld [vmem:[%s2338 + $0x70] sm:$0xff]
    %v2354 = vld [vmem:[%s2338 + $0x78] sm:$0xff]
    %2355 = vmatprep.subr.mxu0 0.0
    %2356 = vmatpush1.msra.mxu0 %v2339
    %2357 = vmatprep.subr.mxu0 0.0
    %2358 = vmatpush1.msra.mxu0 %v2340
    %2359 = vmatprep.subr.mxu0 0.0
    %2360 = vmatpush1.msra.mxu0 %v2341
    %2361 = vmatprep.subr.mxu0 0.0
    %2362 = vmatpush1.msra.mxu0 %v2342
    %2363 = vmatprep.subr.mxu0 0.0
    %2364 = vmatpush1.msra.mxu0 %v2343
    %2365 = vmatprep.subr.mxu0 0.0
    %2366 = vmatpush1.msra.mxu0 %v2344
    %2367 = vmatprep.subr.mxu0 0.0
    %2368 = vmatpush1.msra.mxu0 %v2345
    %2369 = vmatprep.subr.mxu0 0.0
    %2370 = vmatpush1.msra.mxu0 %v2346
    %2371 = vmatprep.subr.mxu0 0.0
    %2372 = vmatpush1.msra.mxu0 %v2347
    %2373 = vmatprep.subr.mxu0 0.0
    %2374 = vmatpush1.msra.mxu0 %v2348
    %2375 = vmatprep.subr.mxu0 0.0
    %2376 = vmatpush1.msra.mxu0 %v2349
    %2377 = vmatprep.subr.mxu0 0.0
    %2378 = vmatpush1.msra.mxu0 %v2350
    %2379 = vmatprep.subr.mxu0 0.0
    %2380 = vmatpush1.msra.mxu0 %v2351
    %2381 = vmatprep.subr.mxu0 0.0
    %2382 = vmatpush1.msra.mxu0 %v2352
    %2383 = vmatprep.subr.mxu0 0.0
    %2384 = vmatpush1.msra.mxu0 %v2353
    %2385 = vmatprep.subr.mxu0 0.0
    %2386 = vmatpush1.msra.mxu0 %v2354
    %2387 = vmatprep.subr.mxu0 0.0
    %2388 = vmatpush1.msra.mxu0 0.0
    %2389 = vmatprep.subr.mxu0 0.0
    %2390 = vmatpush1.msra.mxu0 0.0
    %2391 = vmatprep.subr.mxu0 0.0
    %2392 = vmatpush1.msra.mxu0 0.0
    %2393 = vmatprep.subr.mxu0 0.0
    %2394 = vmatpush1.msra.mxu0 0.0
    %2395 = vmatprep.subr.mxu0 0.0
    %2396 = vmatpush1.msra.mxu0 0.0
    %2397 = vmatprep.subr.mxu0 0.0
    %2398 = vmatpush1.msra.mxu0 0.0
    %2399 = vmatprep.subr.mxu0 0.0
    %2400 = vmatpush1.msra.mxu0 0.0
    %2401 = vmatprep.subr.mxu0 0.0
    %2402 = vmatpush1.msra.mxu0 0.0
    %2403 = vmatprep.subr.mxu0 0.0
    %2404 = vmatpush1.msra.mxu0 0.0
    %2405 = vmatprep.subr.mxu0 0.0
    %2406 = vmatpush1.msra.mxu0 0.0
    %2407 = vmatprep.subr.mxu0 0.0
    %2408 = vmatpush1.msra.mxu0 0.0
    %2409 = vmatprep.subr.mxu0 0.0
    %2410 = vmatpush1.msra.mxu0 0.0
    %2411 = vmatprep.subr.mxu0 0.0
    %2412 = vmatpush1.msra.mxu0 0.0
    %2413 = vmatprep.subr.mxu0 0.0
    %2414 = vmatpush1.msra.mxu0 0.0
    %2415 = vmatprep.subr.mxu0 0.0
    %2416 = vmatpush1.msra.mxu0 0.0
    %2417 = vmatprep.subr.mxu0 0.0
    %2418 = vmatpush1.msra.mxu0 0.0
    %2419 = vmatprep.mubr.f32.mxu0 0.0
    %2420 = vmatmul.mubr.f32.gmra.mrb[0].mxu0 %v2337
    %v2421 = vpop.f32.mrb[0].mxu0
    %v2422 = vadd.f32 0.0, %v2421
    %v2423 = vpop.f32.mrb[0].mxu0
    %2424 = vdwg.mxu0
    %v2425 = vadd.f32 %v2336, %v2422
    %v2426 = vld [vmem:[%s1785] sm:$0xff]
    %s2427 = scalar_lea.vmem %s7, 896
    %v2428 = vld [vmem:[%s2427] sm:$0xff]
    %v2429 = vld [vmem:[%s2427 + $0x8] sm:$0xff]
    %v2430 = vld [vmem:[%s2427 + $0x10] sm:$0xff]
    %v2431 = vld [vmem:[%s2427 + $0x18] sm:$0xff]
    %v2432 = vld [vmem:[%s2427 + $0x20] sm:$0xff]
    %v2433 = vld [vmem:[%s2427 + $0x28] sm:$0xff]
    %v2434 = vld [vmem:[%s2427 + $0x30] sm:$0xff]
    %v2435 = vld [vmem:[%s2427 + $0x38] sm:$0xff]
    %v2436 = vld [vmem:[%s2427 + $0x40] sm:$0xff]
    %v2437 = vld [vmem:[%s2427 + $0x48] sm:$0xff]
    %v2438 = vld [vmem:[%s2427 + $0x50] sm:$0xff]
    %v2439 = vld [vmem:[%s2427 + $0x58] sm:$0xff]
    %v2440 = vld [vmem:[%s2427 + $0x60] sm:$0xff]
    %v2441 = vld [vmem:[%s2427 + $0x68] sm:$0xff]
    %v2442 = vld [vmem:[%s2427 + $0x70] sm:$0xff]
    %v2443 = vld [vmem:[%s2427 + $0x78] sm:$0xff]
    %2444 = vmatprep.subr.mxu0 0.0
    %2445 = vmatpush1.msra.mxu0 %v2428
    %2446 = vmatprep.subr.mxu0 0.0
    %2447 = vmatpush1.msra.mxu0 %v2429
    %2448 = vmatprep.subr.mxu0 0.0
    %2449 = vmatpush1.msra.mxu0 %v2430
    %2450 = vmatprep.subr.mxu0 0.0
    %2451 = vmatpush1.msra.mxu0 %v2431
    %2452 = vmatprep.subr.mxu0 0.0
    %2453 = vmatpush1.msra.mxu0 %v2432
    %2454 = vmatprep.subr.mxu0 0.0
    %2455 = vmatpush1.msra.mxu0 %v2433
    %2456 = vmatprep.subr.mxu0 0.0
    %2457 = vmatpush1.msra.mxu0 %v2434
    %2458 = vmatprep.subr.mxu0 0.0
    %2459 = vmatpush1.msra.mxu0 %v2435
    %2460 = vmatprep.subr.mxu0 0.0
    %2461 = vmatpush1.msra.mxu0 %v2436
    %2462 = vmatprep.subr.mxu0 0.0
    %2463 = vmatpush1.msra.mxu0 %v2437
    %2464 = vmatprep.subr.mxu0 0.0
    %2465 = vmatpush1.msra.mxu0 %v2438
    %2466 = vmatprep.subr.mxu0 0.0
    %2467 = vmatpush1.msra.mxu0 %v2439
    %2468 = vmatprep.subr.mxu0 0.0
    %2469 = vmatpush1.msra.mxu0 %v2440
    %2470 = vmatprep.subr.mxu0 0.0
    %2471 = vmatpush1.msra.mxu0 %v2441
    %2472 = vmatprep.subr.mxu0 0.0
    %2473 = vmatpush1.msra.mxu0 %v2442
    %2474 = vmatprep.subr.mxu0 0.0
    %2475 = vmatpush1.msra.mxu0 %v2443
    %2476 = vmatprep.subr.mxu0 0.0
    %2477 = vmatpush1.msra.mxu0 0.0
    %2478 = vmatprep.subr.mxu0 0.0
    %2479 = vmatpush1.msra.mxu0 0.0
    %2480 = vmatprep.subr.mxu0 0.0
    %2481 = vmatpush1.msra.mxu0 0.0
    %2482 = vmatprep.subr.mxu0 0.0
    %2483 = vmatpush1.msra.mxu0 0.0
    %2484 = vmatprep.subr.mxu0 0.0
    %2485 = vmatpush1.msra.mxu0 0.0
    %2486 = vmatprep.subr.mxu0 0.0
    %2487 = vmatpush1.msra.mxu0 0.0
    %2488 = vmatprep.subr.mxu0 0.0
    %2489 = vmatpush1.msra.mxu0 0.0
    %2490 = vmatprep.subr.mxu0 0.0
    %2491 = vmatpush1.msra.mxu0 0.0
    %2492 = vmatprep.subr.mxu0 0.0
    %2493 = vmatpush1.msra.mxu0 0.0
    %2494 = vmatprep.subr.mxu0 0.0
    %2495 = vmatpush1.msra.mxu0 0.0
    %2496 = vmatprep.subr.mxu0 0.0
    %2497 = vmatpush1.msra.mxu0 0.0
    %2498 = vmatprep.subr.mxu0 0.0
    %2499 = vmatpush1.msra.mxu0 0.0
    %2500 = vmatprep.subr.mxu0 0.0
    %2501 = vmatpush1.msra.mxu0 0.0
    %2502 = vmatprep.subr.mxu0 0.0
    %2503 = vmatpush1.msra.mxu0 0.0
    %2504 = vmatprep.subr.mxu0 0.0
    %2505 = vmatpush1.msra.mxu0 0.0
    %2506 = vmatprep.subr.mxu0 0.0
    %2507 = vmatpush1.msra.mxu0 0.0
    %2508 = vmatprep.mubr.f32.mxu0 0.0
    %2509 = vmatmul.mubr.f32.gmra.mrb[0].mxu0 %v2426
    %v2510 = vpop.f32.mrb[0].mxu0
    %v2511 = vadd.f32 0.0, %v2510
    %v2512 = vpop.f32.mrb[0].mxu0
    %2513 = vdwg.mxu0
    %v2514 = vadd.f32 %v2425, %v2511
    %v2515 = vld [vmem:[%s1796] sm:$0xff]
    %s2516 = scalar_lea.vmem %s7, 1024
    %v2517 = vld [vmem:[%s2516] sm:$0xff]
    %v2518 = vld [vmem:[%s2516 + $0x8] sm:$0xff]
    %v2519 = vld [vmem:[%s2516 + $0x10] sm:$0xff]
    %v2520 = vld [vmem:[%s2516 + $0x18] sm:$0xff]
    %v2521 = vld [vmem:[%s2516 + $0x20] sm:$0xff]
    %v2522 = vld [vmem:[%s2516 + $0x28] sm:$0xff]
    %v2523 = vld [vmem:[%s2516 + $0x30] sm:$0xff]
    %v2524 = vld [vmem:[%s2516 + $0x38] sm:$0xff]
    %v2525 = vld [vmem:[%s2516 + $0x40] sm:$0xff]
    %v2526 = vld [vmem:[%s2516 + $0x48] sm:$0xff]
    %v2527 = vld [vmem:[%s2516 + $0x50] sm:$0xff]
    %v2528 = vld [vmem:[%s2516 + $0x58] sm:$0xff]
    %v2529 = vld [vmem:[%s2516 + $0x60] sm:$0xff]
    %v2530 = vld [vmem:[%s2516 + $0x68] sm:$0xff]
    %v2531 = vld [vmem:[%s2516 + $0x70] sm:$0xff]
    %v2532 = vld [vmem:[%s2516 + $0x78] sm:$0xff]
    %2533 = vmatprep.subr.mxu0 0.0
    %2534 = vmatpush1.msra.mxu0 %v2517
    %2535 = vmatprep.subr.mxu0 0.0
    %2536 = vmatpush1.msra.mxu0 %v2518
    %2537 = vmatprep.subr.mxu0 0.0
    %2538 = vmatpush1.msra.mxu0 %v2519
    %2539 = vmatprep.subr.mxu0 0.0
    %2540 = vmatpush1.msra.mxu0 %v2520
    %2541 = vmatprep.subr.mxu0 0.0
    %2542 = vmatpush1.msra.mxu0 %v2521
    %2543 = vmatprep.subr.mxu0 0.0
    %2544 = vmatpush1.msra.mxu0 %v2522
    %2545 = vmatprep.subr.mxu0 0.0
    %2546 = vmatpush1.msra.mxu0 %v2523
    %2547 = vmatprep.subr.mxu0 0.0
    %2548 = vmatpush1.msra.mxu0 %v2524
    %2549 = vmatprep.subr.mxu0 0.0
    %2550 = vmatpush1.msra.mxu0 %v2525
    %2551 = vmatprep.subr.mxu0 0.0
    %2552 = vmatpush1.msra.mxu0 %v2526
    %2553 = vmatprep.subr.mxu0 0.0
    %2554 = vmatpush1.msra.mxu0 %v2527
    %2555 = vmatprep.subr.mxu0 0.0
    %2556 = vmatpush1.msra.mxu0 %v2528
    %2557 = vmatprep.subr.mxu0 0.0
    %2558 = vmatpush1.msra.mxu0 %v2529
    %2559 = vmatprep.subr.mxu0 0.0
    %2560 = vmatpush1.msra.mxu0 %v2530
    %2561 = vmatprep.subr.mxu0 0.0
    %2562 = vmatpush1.msra.mxu0 %v2531
    %2563 = vmatprep.subr.mxu0 0.0
    %2564 = vmatpush1.msra.mxu0 %v2532
    %2565 = vmatprep.subr.mxu0 0.0
    %2566 = vmatpush1.msra.mxu0 0.0
    %2567 = vmatprep.subr.mxu0 0.0
    %2568 = vmatpush1.msra.mxu0 0.0
    %2569 = vmatprep.subr.mxu0 0.0
    %2570 = vmatpush1.msra.mxu0 0.0
    %2571 = vmatprep.subr.mxu0 0.0
    %2572 = vmatpush1.msra.mxu0 0.0
    %2573 = vmatprep.subr.mxu0 0.0
    %2574 = vmatpush1.msra.mxu0 0.0
    %2575 = vmatprep.subr.mxu0 0.0
    %2576 = vmatpush1.msra.mxu0 0.0
    %2577 = vmatprep.subr.mxu0 0.0
    %2578 = vmatpush1.msra.mxu0 0.0
    %2579 = vmatprep.subr.mxu0 0.0
    %2580 = vmatpush1.msra.mxu0 0.0
    %2581 = vmatprep.subr.mxu0 0.0
    %2582 = vmatpush1.msra.mxu0 0.0
    %2583 = vmatprep.subr.mxu0 0.0
    %2584 = vmatpush1.msra.mxu0 0.0
    %2585 = vmatprep.subr.mxu0 0.0
    %2586 = vmatpush1.msra.mxu0 0.0
    %2587 = vmatprep.subr.mxu0 0.0
    %2588 = vmatpush1.msra.mxu0 0.0
    %2589 = vmatprep.subr.mxu0 0.0
    %2590 = vmatpush1.msra.mxu0 0.0
    %2591 = vmatprep.subr.mxu0 0.0
    %2592 = vmatpush1.msra.mxu0 0.0
    %2593 = vmatprep.subr.mxu0 0.0
    %2594 = vmatpush1.msra.mxu0 0.0
    %2595 = vmatprep.subr.mxu0 0.0
    %2596 = vmatpush1.msra.mxu0 0.0
    %2597 = vmatprep.mubr.f32.mxu0 0.0
    %2598 = vmatmul.mubr.f32.gmra.mrb[0].mxu0 %v2515
    %v2599 = vpop.f32.mrb[0].mxu0
    %v2600 = vadd.f32 0.0, %v2599
    %v2601 = vpop.f32.mrb[0].mxu0
    %2602 = vdwg.mxu0
    %v2603 = vadd.f32 %v2514, %v2600
    %v2604 = vrot.slane %v2603, 4
    %v2605 = vadd.f32 %v2603, %v2604
    %v2606 = vrot.slane %v2605, 2
    %v2607 = vadd.f32 %v2605, %v2606
    %v2608 = vrot.slane %v2607, 1
    %v2609 = vadd.f32 %v2607, %v2608
    %v2610 = vmul.f32 %v2603, %v2603
    %v2611 = vrot.slane %v2610, 4
    %v2612 = vadd.f32 %v2610, %v2611
    %v2613 = vrot.slane %v2612, 2
    %v2614 = vadd.f32 %v2612, %v2613
    %v2615 = vrot.slane %v2614, 1
    %v2616 = vadd.f32 %v2614, %v2615
    %v2617 = vmul.f32 %v2609, 0.125
    %v2618 = vmul.f32 %v2616, 0.125
    %v2619 = vmul.f32 %v2617, %v2617
    %v2620 = vsub.f32 %v2618, %v2619
    %v2621 = vmax.f32 %v2620, 0.0
    %v2622 = vadd.f32 %v2621, 1e-05
    %v2623 = vrsqrt.pop %v2622
    %v2624 = vld [vmem:[%s8] sm:$0x1]
    %v2625 = vmul.f32 %v2623, %v2624
    %v2626 = vsub.f32 %v2603, %v2617
    %v2627 = vlaneseq
    %v2628 = vshrl.u32 %v2627, 7
    %v2629 = vsub.s32 0, %v2628
    %v2630 = vrot.slane %v2625, %v2629
    %v2631 = vmul.f32 %v2626, %v2630
    %v2632 = vld [vmem:[%s9] sm:$0x1]
    %v2634 = vlaneseq
    %v2635 = vshrl.u32 %v2634, 7
    %v2636 = vsub.s32 0, %v2635
    %v2637 = vrot.slane %v2632, %v2636
    %v2639 = vadd.f32 %v2631, %v2637
    %v2640 = vmax.f32 %v2639, 0.0
    %2641 = vst [vmem:[#allocation6] sm:$0xff] %v2640
    // Predicated region
    $region42: #{forward.1} parent=1 // pred_check
      _
    $region43: #{forward.1} parent=1 // pred_check_branch
      %2643 = sbr.rel (0) target = $region45
    $region44: #{forward.1} parent=1 // pred_region
      %s2645 = ssub.s32 128, 128
      %2646 = vsyncadd [#allocation7], %s2645
      %s2648 = sshll.u32 [#allocation6], 4
      %s2649 = int_to_ptr.vmem [resolvable:$true] %s2648
      %2651 = dma.vmem_to_hbm [thread:$0]  %s2649, 128, %s10, [#allocation7]
    $region45: #{forward.1} parent=1 // pred_fallthru
      _
    // Predicated region
    $region46: #{forward.1} parent=1 // pred_check
      _
    $region47: #{forward.1} parent=1 // pred_check_branch
      %2653 = sbr.rel (0) target = $region49
    $region48: #{forward.1} parent=1 // pred_region
      %2654 = dma.done [#allocation7], 128
    $region49: #{forward.1} parent=1 // pred_fallthru
      _
    %2655 = vsyncpa [#allocation7], 1

</llo_original>
